<compile_context>
chip_gen: v7x
topology: tpu7x:2x2x1
jax: 0.10.0
libtpu: 0.0.40
codegen_flags: <defaults>
</compile_context>

<pallas_src>
import functools

import jax
import jax.numpy as jnp
from jax.experimental import pallas as pl
from jax.experimental.pallas import tpu as pltpu


# -----------------------------------------------------------------------------
# Static enumeration of the conv1 zero-padding ring in packed coordinates
# -----------------------------------------------------------------------------
def _halo_strips(H, W, S):
    """Packed-space strips covering the 1-px zero pad ring of the conv1 input.

    Packed row r = (sh*S + sw)*Hq + i, col j  <->  padded pixel (S*i + sh, S*j + sw).
    Returns (full_rows, (row_start, row_stop, col) column strips)."""
    Hq, Wq = (H + 2) // S, (W + 2) // S
    rows, cols = [], []
    for sh in range(S):
        for sw in range(S):
            p = sh * S + sw
            for i in range(Hq):
                ph = S * i + sh
                if ph < 1 or ph > H:
                    rows.append(p * Hq + i)
            for j in range(Wq):
                pw = S * j + sw
                if pw < 1 or pw > W:
                    cols.append((p * Hq, (p + 1) * Hq, j))
    return rows, cols


# -----------------------------------------------------------------------------
# Fused per-batch kernel factory
# -----------------------------------------------------------------------------
def _make_fused_kernel(H, W, Cin, Cout, stride, equal_in_out):
    S = stride
    Ho, Wo = H // S, W // S               # block output spatial size
    Hq, Wq = (H + 2) // S, (W + 2) // S   # per-phase padded spatial extents
    halo_rows, halo_cols = _halo_strips(H, W, S)

    def kernel(xq_ref, s1_ref, b1_ref, w1_ref, s2_ref, b2_ref, w2_ref, *rest):
        if equal_in_out:
            o_ref, q_ref, pad2_ref = rest
        else:
            wsc_ref, o_ref, q_ref, pad2_ref = rest

        # ---- bn1 + relu on the packed, zero-padded input (bf16 -> f32). ---------
        x = xq_ref[0].astype(jnp.float32)                       # (R, Wq, Cin)
        q_ref[...] = jnp.maximum(x * s1_ref[...] + b1_ref[...], 0.0)

        # Force the conv padding ring back to exactly zero (relu(bn1(0-pad)) is
        # relu(bias), not 0).  Only the statically-known halo strips are touched.
        zrow = jnp.zeros((1, Wq, Cin), jnp.float32)
        zcol = jnp.zeros((Hq, 1, Cin), jnp.float32)
        for r in halo_rows:
            q_ref[r:r + 1, :, :] = zrow
        for (ra, rb, jc) in halo_cols:
            q_ref[ra:rb, jc:jc + 1, :] = zcol

        # ---- conv1: 3x3 / stride S as 9 accumulating MXU dots. ------------------
        # Strided taps come straight from the phase-packed scratch as unit-stride
        # slices: row (sh*S+sw)*Hq + I, col J  <->  padded activation (S*I+sh, S*J+sw).
        centre_tap = None
        acc1 = None
        for k in range(9):
            kh, kw = k // 3, k % 3
            sh, sw = kh % S, kw % S
            i0, j0 = kh // S, kw // S
            r0 = (sh * S + sw) * Hq + i0
            tap = q_ref[r0:r0 + Ho, j0:j0 + Wo, :].reshape(Ho * Wo, Cin)
            tap = tap.astype(jnp.bfloat16)
            if k == 4:                       # centre tap feeds the 1x1 projection
                centre_tap = tap
            d = jnp.dot(tap, w1_ref[k * Cin:(k + 1) * Cin, :],
                        preferred_element_type=jnp.float32)
            acc1 = d if acc1 is None else acc1 + d              # (Ho*Wo, Cout) f32

        # ---- bn2 + relu (dropout_rate == 0.0 -> identity). ----------------------
        # TODO(synk): nonzero dropout_rate would need pltpu.prng_* masking here.
        b = jnp.maximum(acc1 * s2_ref[...] + b2_ref[...], 0.0)

        # ---- conv2: 3x3 / stride 1, again 9 accumulating dots. ------------------
        # Re-zero only the 1-pixel halo each step (interior fully overwritten;
        # halo-only stays correct under a "parallel" megacore grid split).
        zr = jnp.zeros((1, Wo + 2, Cout), jnp.float32)
        zc = jnp.zeros((Ho + 2, 1, Cout), jnp.float32)
        pad2_ref[0:1, :, :] = zr
        pad2_ref[Ho + 1:Ho + 2, :, :] = zr
        pad2_ref[:, 0:1, :] = zc
        pad2_ref[:, Wo + 1:Wo + 2, :] = zc
        pad2_ref[1:Ho + 1, 1:Wo + 1, :] = b.reshape(Ho, Wo, Cout)

        acc2 = None
        for k in range(9):
            kh, kw = k // 3, k % 3
            tap2 = pad2_ref[kh:kh + Ho, kw:kw + Wo, :].reshape(Ho * Wo, Cout)
            tap2 = tap2.astype(jnp.bfloat16)
            d = jnp.dot(tap2, w2_ref[k * Cout:(k + 1) * Cout, :],
                        preferred_element_type=jnp.float32)
            acc2 = d if acc2 is None else acc2 + d

        # ---- shortcut add + single store ----------------------------------------
        if equal_in_out:
            # identity shortcut: the raw x is the interior of the padded input
            # (value-slice of the already-loaded block; no extra ref read).
            sc = x[1:H + 1, 1:W + 1, :].reshape(H * W, Cin)
        else:
            # 1x1 / stride-S projection applied to relu(bn1(x)); its input is
            # exactly the centre conv1 tap (kh == kw == 1), already in registers.
            sc = jnp.dot(centre_tap, wsc_ref[...],
                         preferred_element_type=jnp.float32)
        o_ref[0] = acc2 + sc

    return kernel


# -----------------------------------------------------------------------------
# Wrapper
# -----------------------------------------------------------------------------
@functools.partial(jax.jit, static_argnames=("stride", "equal_in_out"))
def basic_block_forward(x_nchw, params, stride, equal_in_out):
    """Fused WideResNet BasicBlock forward (eval-mode BN, dropout_rate = 0.0)."""
    if equal_in_out and stride != 1:
        raise ValueError("identity shortcut requires stride == 1")
    S = int(stride)

    x = jnp.transpose(x_nchw, (0, 2, 3, 1))                      # NCHW -> NHWC
    N, H, W, Cin = x.shape
    Cout = params["w1"].shape[3]
    assert H % S == 0 and W % S == 0 and (H + 2) % S == 0 and (W + 2) % S == 0
    Ho, Wo = H // S, W // S
    Hq, Wq = (H + 2) // S, (W + 2) // S
    R = S * S * Hq

    # Zero-padded input, space-to-depth packed by the conv1 stride so every strided
    # 3x3 tap is a plain unit-stride VMEM slice; shipped as bf16 (halves HBM read).
    xp = jnp.pad(x.astype(jnp.float32), ((0, 0), (1, 1), (1, 1), (0, 0)))
    if S > 1:
        xp = xp.reshape(N, Hq, S, Wq, S, Cin).transpose(0, 2, 4, 1, 3, 5)
        xp = xp.reshape(N, R, Wq, Cin)
    xp = xp.astype(jnp.bfloat16)

    # Weights as im2col matrices, bf16 for the MXU (f32 accumulation in-kernel).
    w1r = params["w1"].reshape(9 * Cin, Cout).astype(jnp.bfloat16)
    w2r = params["w2"].reshape(9 * Cout, Cout).astype(jnp.bfloat16)

    in_specs = [
        pl.BlockSpec((1, R, Wq, Cin), lambda n: (n, 0, 0, 0)),   # packed padded x
        pl.BlockSpec((1, Cin), lambda n: (0, 0)),                # bn1 scale
        pl.BlockSpec((1, Cin), lambda n: (0, 0)),                # bn1 bias
        pl.BlockSpec((9 * Cin, Cout), lambda n: (0, 0)),         # w1 (bf16)
        pl.BlockSpec((1, Cout), lambda n: (0, 0)),               # bn2 scale
        pl.BlockSpec((1, Cout), lambda n: (0, 0)),               # bn2 bias
        pl.BlockSpec((9 * Cout, Cout), lambda n: (0, 0)),        # w2 (bf16)
    ]
    args = [xp, params["bn1_scale"], params["bn1_bias"], w1r,
            params["bn2_scale"], params["bn2_bias"], w2r]
    if not equal_in_out:
        in_specs.append(pl.BlockSpec((Cin, Cout), lambda n: (0, 0)))  # wsc (bf16)
        args.append(params["wsc"].astype(jnp.bfloat16))

    kernel = _make_fused_kernel(H, W, Cin, Cout, S, equal_in_out)

    # Explicit VMEM budget (inputs/outputs double-buffered by the pipeliner);
    # clamped to [32 MiB, 64 MiB] so it is valid on v5e/v6e (128 MiB) and v7x (64 MiB).
    vmem_bytes = (
        2 * R * Wq * Cin * 2                                  # xq blocks (bf16) x2
        + 2 * R * Wq * Cin * 4                                # q scratch + live f32
        + 2 * (Ho + 2) * (Wo + 2) * Cout * 4                  # pad2 scratch + act
        + 2 * ((9 * Cin + 9 * Cout + Cin) * Cout * 2
               + 2 * (Cin + Cout) * 4)                        # weights + bn x2
        + 2 * Ho * Wo * Cout * 4                              # output blocks x2
        + 6 * Ho * Wo * Cout * 4)                             # accumulators/headroom
    vmem_limit = int(min(max(2 * vmem_bytes, 32 * 1024 * 1024), 64 * 1024 * 1024))

    flops_per_img = 2 * Ho * Wo * Cout * (9 * Cin + 9 * Cout)
    if not equal_in_out:
        flops_per_img += 2 * Ho * Wo * Cout * Cin
    bytes_accessed = (N * R * Wq * Cin * 2 + N * Ho * Wo * Cout * 4
                      + (9 * Cin + 9 * Cout
                         + (0 if equal_in_out else Cin)) * Cout * 2
                      + 2 * (Cin + Cout) * 4)

    out = pl.pallas_call(
        kernel,
        out_shape=jax.ShapeDtypeStruct((N, Ho * Wo, Cout), jnp.float32),
        grid_spec=pltpu.PrefetchScalarGridSpec(
            num_scalar_prefetch=0,
            grid=(N,),
            in_specs=in_specs,
            out_specs=pl.BlockSpec((1, Ho * Wo, Cout), lambda n: (n, 0, 0)),
            scratch_shapes=[
                pltpu.VMEM((R, Wq, Cin), jnp.float32),            # padded bn1+relu
                pltpu.VMEM((Ho + 2, Wo + 2, Cout), jnp.float32),  # padded bn2+relu
            ],
        ),
        compiler_params=pltpu.CompilerParams(
            dimension_semantics=("parallel",),
            vmem_limit_bytes=vmem_limit),
        cost_estimate=pl.CostEstimate(
            flops=int(N * flops_per_img),
            transcendentals=0,
            bytes_accessed=int(bytes_accessed)),
    )(*args)

    out = out.reshape(N, Ho, Wo, Cout)
    return jnp.transpose(out, (0, 3, 1, 2))                       # NHWC -> NCHW


# -----------------------------------------------------------------------------
# Deterministic parameter init (eval-mode BN folded into scale / bias)
# -----------------------------------------------------------------------------
def make_params(key, cin, cout, eps=1e-5):
    ks = jax.random.split(key, 11)

    def bn(kg, kb, km, kv, c):
        gamma = 1.0 + 0.1 * jax.random.normal(kg, (c,), jnp.float32)
        beta = 0.1 * jax.random.normal(kb, (c,), jnp.float32)
        mean = 0.1 * jax.random.normal(km, (c,), jnp.float32)
        var = jax.random.uniform(kv, (c,), jnp.float32, 0.5, 1.5)
        scale = gamma / jnp.sqrt(var + eps)
        bias = beta - mean * scale
        return scale.reshape(1, c), bias.reshape(1, c)

    s1, b1 = bn(ks[0], ks[1], ks[2], ks[3], cin)
    s2, b2 = bn(ks[4], ks[5], ks[6], ks[7], cout)
    w1 = jax.random.normal(ks[8], (3, 3, cin, cout), jnp.float32) / jnp.sqrt(9.0 * cin)
    w2 = jax.random.normal(ks[9], (3, 3, cout, cout), jnp.float32) / jnp.sqrt(9.0 * cout)
    p = {"bn1_scale": s1, "bn1_bias": b1, "w1": w1,
         "bn2_scale": s2, "bn2_bias": b2, "w2": w2}
    if cin != cout:
        p["wsc"] = jax.random.normal(ks[10], (cin, cout), jnp.float32) / jnp.sqrt(1.0 * cin)
    return p


# -----------------------------------------------------------------------------
# Pure-JAX reference (verification only)
# -----------------------------------------------------------------------------
def ref_forward(x_nchw, p, stride, equal_in_out):
    x = x_nchw.astype(jnp.float32)

    def bn_relu(v, scale, bias):
        return jnp.maximum(v * scale[0][None, :, None, None]
                           + bias[0][None, :, None, None], 0.0)

    def conv(v, w, s, pad):
        return jax.lax.conv_general_dilated(
            v, w, (s, s), [(pad, pad), (pad, pad)],
            dimension_numbers=("NCHW", "HWIO", "NCHW"))

    if equal_in_out:
        out = bn_relu(x, p["bn1_scale"], p["bn1_bias"])
        sc = x
    else:
        xp = bn_relu(x, p["bn1_scale"], p["bn1_bias"])
        out = xp
        sc = conv(xp, p["wsc"].reshape(1, 1, *p["wsc"].shape), stride, 0)
    out = conv(out, p["w1"], stride, 1)
    out = bn_relu(out, p["bn2_scale"], p["bn2_bias"])
    out = conv(out, p["w2"], 1, 1)
    return sc + out


if __name__ == "__main__":
    key = jax.random.PRNGKey(0)
    kx1, kp1, kx2, kp2 = jax.random.split(key, 4)

    # Case 1: in_planes != out_planes, stride=2 -> 1x1 projection shortcut.
    x1 = jax.random.normal(kx1, (2, 4, 16, 16), jnp.float32)
    p1 = make_params(kp1, 4, 8)
    y1 = jax.block_until_ready(basic_block_forward(x1, p1, stride=2,
                                                   equal_in_out=False))
    r1 = ref_forward(x1, p1, 2, False)
    assert y1.shape == (2, 8, 8, 8)
    assert jnp.allclose(y1, r1, atol=5e-2, rtol=5e-2)

    # Case 2: in_planes == out_planes, stride=1 -> identity shortcut.
    x2 = jax.random.normal(kx2, (2, 8, 16, 16), jnp.float32)
    p2 = make_params(kp2, 8, 8)
    y2 = jax.block_until_ready(basic_block_forward(x2, p2, stride=1,
                                                   equal_in_out=True))
    r2 = ref_forward(x2, p2, 1, True)
    assert y2.shape == (2, 8, 16, 16)
    assert jnp.allclose(y2, r2, atol=5e-2, rtol=5e-2)

    print("KERNEL_OK")
</pallas_src>

<mosaic_0001>
module attributes {stable_mosaic.version = 11 : i64} {
  func.func @kernel(%arg0: i32, %arg1: memref<1x36x9x4xbf16, #tpu.memory_space<vmem>>, %arg2: memref<1x4xf32, #tpu.memory_space<vmem>>, %arg3: memref<1x4xf32, #tpu.memory_space<vmem>>, %arg4: memref<36x8xbf16, #tpu.memory_space<vmem>>, %arg5: memref<1x8xf32, #tpu.memory_space<vmem>>, %arg6: memref<1x8xf32, #tpu.memory_space<vmem>>, %arg7: memref<72x8xbf16, #tpu.memory_space<vmem>>, %arg8: memref<4x8xbf16, #tpu.memory_space<vmem>>, %arg9: memref<1x64x8xf32, #tpu.memory_space<vmem>>, %arg10: memref<36x9x4xf32, #tpu.memory_space<vmem>>, %arg11: memref<10x10x8xf32, #tpu.memory_space<vmem>>) attributes {dimension_semantics = [#tpu.dimension_semantics<parallel>], iteration_bounds = array<i64: 2>, scalar_prefetch = 0 : i64, scratch_operands = 2 : i64, tpu.core_type = #tpu.core_type<tc>, window_params = [{transform_indices = @transform_0, window_bounds = array<i64: 1, 36, 9, 4>}, {pipeline_mode = #tpu.pipeline_mode<synchronous>, transform_indices = @transform_1, window_bounds = array<i64: 1, 4>}, {pipeline_mode = #tpu.pipeline_mode<synchronous>, transform_indices = @transform_2, window_bounds = array<i64: 1, 4>}, {pipeline_mode = #tpu.pipeline_mode<synchronous>, transform_indices = @transform_3, window_bounds = array<i64: 36, 8>}, {pipeline_mode = #tpu.pipeline_mode<synchronous>, transform_indices = @transform_4, window_bounds = array<i64: 1, 8>}, {pipeline_mode = #tpu.pipeline_mode<synchronous>, transform_indices = @transform_5, window_bounds = array<i64: 1, 8>}, {pipeline_mode = #tpu.pipeline_mode<synchronous>, transform_indices = @transform_6, window_bounds = array<i64: 72, 8>}, {pipeline_mode = #tpu.pipeline_mode<synchronous>, transform_indices = @transform_7, window_bounds = array<i64: 4, 8>}, {transform_indices = @transform_8, window_bounds = array<i64: 1, 64, 8>}]} {
    %c0 = arith.constant 0 : index
    %c0_0 = arith.constant 0 : index
    %c0_1 = arith.constant 0 : index
    %c0_2 = arith.constant 0 : index
    %0 = vector.load %arg1[%c0, %c0_0, %c0_1, %c0_2] : memref<1x36x9x4xbf16, #tpu.memory_space<vmem>>, vector<1x36x9x4xbf16>
    %1 = vector.shape_cast %0 : vector<1x36x9x4xbf16> to vector<36x9x4xbf16>
    %2 = arith.extf %1 : vector<36x9x4xbf16> to vector<36x9x4xf32>
    %c0_3 = arith.constant 0 : index
    %c0_4 = arith.constant 0 : index
    %3 = vector.load %arg2[%c0_3, %c0_4] : memref<1x4xf32, #tpu.memory_space<vmem>>, vector<1x4xf32>
    %4 = vector.shape_cast %3 : vector<1x4xf32> to vector<1x1x4xf32>
    %5 = vector.broadcast %4 : vector<1x1x4xf32> to vector<36x9x4xf32>
    %6 = arith.mulf %2, %5 : vector<36x9x4xf32>
    %c0_5 = arith.constant 0 : index
    %c0_6 = arith.constant 0 : index
    %7 = vector.load %arg3[%c0_5, %c0_6] : memref<1x4xf32, #tpu.memory_space<vmem>>, vector<1x4xf32>
    %8 = vector.shape_cast %7 : vector<1x4xf32> to vector<1x1x4xf32>
    %9 = vector.broadcast %8 : vector<1x1x4xf32> to vector<36x9x4xf32>
    %10 = arith.addf %6, %9 : vector<36x9x4xf32>
    %cst = arith.constant 0.000000e+00 : f32
    %11 = vector.broadcast %cst : f32 to vector<36x9x4xf32>
    %12 = arith.maximumf %10, %11 : vector<36x9x4xf32>
    %c0_7 = arith.constant 0 : index
    %c0_8 = arith.constant 0 : index
    %c0_9 = arith.constant 0 : index
    %13 = vector.load %arg10[%c0_7, %c0_8, %c0_9] : memref<36x9x4xf32, #tpu.memory_space<vmem>>, vector<36x9x4xf32>
    tpu.vector_store %arg10[%c0_7, %c0_8, %c0_9], %12 {strides = array<i32>} : memref<36x9x4xf32, #tpu.memory_space<vmem>>, vector<36x9x4xf32>,
    %cst_10 = arith.constant 0.000000e+00 : f32
    %14 = vector.broadcast %cst_10 : f32 to vector<1x9x4xf32>
    %cst_11 = arith.constant 0.000000e+00 : f32
    %15 = vector.broadcast %cst_11 : f32 to vector<9x1x4xf32>
    %c0_12 = arith.constant 0 : index
    %c0_13 = arith.constant 0 : index
    %c0_14 = arith.constant 0 : index
    %16 = vector.load %arg10[%c0_12, %c0_13, %c0_14] : memref<36x9x4xf32, #tpu.memory_space<vmem>>, vector<1x9x4xf32>
    tpu.vector_store %arg10[%c0_12, %c0_13, %c0_14], %14 {strides = array<i32>} : memref<36x9x4xf32, #tpu.memory_space<vmem>>, vector<1x9x4xf32>,
    %c9 = arith.constant 9 : index
    %c0_15 = arith.constant 0 : index
    %c0_16 = arith.constant 0 : index
    %17 = vector.load %arg10[%c9, %c0_15, %c0_16] : memref<36x9x4xf32, #tpu.memory_space<vmem>>, vector<1x9x4xf32>
    tpu.vector_store %arg10[%c9, %c0_15, %c0_16], %14 {strides = array<i32>} : memref<36x9x4xf32, #tpu.memory_space<vmem>>, vector<1x9x4xf32>,
    %c26 = arith.constant 26 : index
    %c0_17 = arith.constant 0 : index
    %c0_18 = arith.constant 0 : index
    %18 = vector.load %arg10[%c26, %c0_17, %c0_18] : memref<36x9x4xf32, #tpu.memory_space<vmem>>, vector<1x9x4xf32>
    tpu.vector_store %arg10[%c26, %c0_17, %c0_18], %14 {strides = array<i32>} : memref<36x9x4xf32, #tpu.memory_space<vmem>>, vector<1x9x4xf32>,
    %c35 = arith.constant 35 : index
    %c0_19 = arith.constant 0 : index
    %c0_20 = arith.constant 0 : index
    %19 = vector.load %arg10[%c35, %c0_19, %c0_20] : memref<36x9x4xf32, #tpu.memory_space<vmem>>, vector<1x9x4xf32>
    tpu.vector_store %arg10[%c35, %c0_19, %c0_20], %14 {strides = array<i32>} : memref<36x9x4xf32, #tpu.memory_space<vmem>>, vector<1x9x4xf32>,
    %c0_21 = arith.constant 0 : index
    %c0_22 = arith.constant 0 : index
    %c0_23 = arith.constant 0 : index
    %20 = vector.load %arg10[%c0_21, %c0_22, %c0_23] : memref<36x9x4xf32, #tpu.memory_space<vmem>>, vector<9x1x4xf32>
    tpu.vector_store %arg10[%c0_21, %c0_22, %c0_23], %15 {strides = array<i32>} : memref<36x9x4xf32, #tpu.memory_space<vmem>>, vector<9x1x4xf32>,
    %c9_24 = arith.constant 9 : index
    %c8 = arith.constant 8 : index
    %c0_25 = arith.constant 0 : index
    %21 = vector.load %arg10[%c9_24, %c8, %c0_25] : memref<36x9x4xf32, #tpu.memory_space<vmem>>, vector<9x1x4xf32>
    tpu.vector_store %arg10[%c9_24, %c8, %c0_25], %15 {strides = array<i32>} : memref<36x9x4xf32, #tpu.memory_space<vmem>>, vector<9x1x4xf32>,
    %c18 = arith.constant 18 : index
    %c0_26 = arith.constant 0 : index
    %c0_27 = arith.constant 0 : index
    %22 = vector.load %arg10[%c18, %c0_26, %c0_27] : memref<36x9x4xf32, #tpu.memory_space<vmem>>, vector<9x1x4xf32>
    tpu.vector_store %arg10[%c18, %c0_26, %c0_27], %15 {strides = array<i32>} : memref<36x9x4xf32, #tpu.memory_space<vmem>>, vector<9x1x4xf32>,
    %c27 = arith.constant 27 : index
    %c8_28 = arith.constant 8 : index
    %c0_29 = arith.constant 0 : index
    %23 = vector.load %arg10[%c27, %c8_28, %c0_29] : memref<36x9x4xf32, #tpu.memory_space<vmem>>, vector<9x1x4xf32>
    tpu.vector_store %arg10[%c27, %c8_28, %c0_29], %15 {strides = array<i32>} : memref<36x9x4xf32, #tpu.memory_space<vmem>>, vector<9x1x4xf32>,
    %c0_30 = arith.constant 0 : index
    %c0_31 = arith.constant 0 : index
    %c0_32 = arith.constant 0 : index
    %24 = vector.load %arg10[%c0_30, %c0_31, %c0_32] : memref<36x9x4xf32, #tpu.memory_space<vmem>>, vector<8x8x4xf32>
    %25 = vector.shape_cast %24 : vector<8x8x4xf32> to vector<64x4xf32>
    %26 = arith.truncf %25 : vector<64x4xf32> to vector<64x4xbf16>
    %c0_33 = arith.constant 0 : index
    %c0_34 = arith.constant 0 : index
    %27 = vector.load %arg4[%c0_33, %c0_34] : memref<36x8xbf16, #tpu.memory_space<vmem>>, vector<4x8xbf16>
    %cst_35 = arith.constant dense<0.000000e+00> : vector<64x8xf32>
    %28 = tpu.matmul %26, %27, %cst_35 {dimension_numbers = #tpu.dot_dimension_numbers<[1], [0], [0], [1], [0, 0, 1, 1], [], []>} : vector<64x4xbf16>, vector<4x8xbf16>, vector<64x8xf32> -> vector<64x8xf32>
    %c9_36 = arith.constant 9 : index
    %c0_37 = arith.constant 0 : index
    %c0_38 = arith.constant 0 : index
    %29 = vector.load %arg10[%c9_36, %c0_37, %c0_38] : memref<36x9x4xf32, #tpu.memory_space<vmem>>, vector<8x8x4xf32>
    %30 = vector.shape_cast %29 : vector<8x8x4xf32> to vector<64x4xf32>
    %31 = arith.truncf %30 : vector<64x4xf32> to vector<64x4xbf16>
    %c4 = arith.constant 4 : index
    %c0_39 = arith.constant 0 : index
    %32 = vector.load %arg4[%c4, %c0_39] : memref<36x8xbf16, #tpu.memory_space<vmem>>, vector<4x8xbf16>
    %cst_40 = arith.constant dense<0.000000e+00> : vector<64x8xf32>
    %33 = tpu.matmul %31, %32, %cst_40 {dimension_numbers = #tpu.dot_dimension_numbers<[1], [0], [0], [1], [0, 0, 1, 1], [], []>} : vector<64x4xbf16>, vector<4x8xbf16>, vector<64x8xf32> -> vector<64x8xf32>
    %34 = arith.addf %28, %33 : vector<64x8xf32>
    %c0_41 = arith.constant 0 : index
    %c1 = arith.constant 1 : index
    %c0_42 = arith.constant 0 : index
    %35 = vector.load %arg10[%c0_41, %c1, %c0_42] : memref<36x9x4xf32, #tpu.memory_space<vmem>>, vector<8x8x4xf32>
    %36 = vector.shape_cast %35 : vector<8x8x4xf32> to vector<64x4xf32>
    %37 = arith.truncf %36 : vector<64x4xf32> to vector<64x4xbf16>
    %c8_43 = arith.constant 8 : index
    %c0_44 = arith.constant 0 : index
    %38 = vector.load %arg4[%c8_43, %c0_44] : memref<36x8xbf16, #tpu.memory_space<vmem>>, vector<4x8xbf16>
    %cst_45 = arith.constant dense<0.000000e+00> : vector<64x8xf32>
    %39 = tpu.matmul %37, %38, %cst_45 {dimension_numbers = #tpu.dot_dimension_numbers<[1], [0], [0], [1], [0, 0, 1, 1], [], []>} : vector<64x4xbf16>, vector<4x8xbf16>, vector<64x8xf32> -> vector<64x8xf32>
    %40 = arith.addf %34, %39 : vector<64x8xf32>
    %c18_46 = arith.constant 18 : index
    %c0_47 = arith.constant 0 : index
    %c0_48 = arith.constant 0 : index
    %41 = vector.load %arg10[%c18_46, %c0_47, %c0_48] : memref<36x9x4xf32, #tpu.memory_space<vmem>>, vector<8x8x4xf32>
    %42 = vector.shape_cast %41 : vector<8x8x4xf32> to vector<64x4xf32>
    %43 = arith.truncf %42 : vector<64x4xf32> to vector<64x4xbf16>
    %c12 = arith.constant 12 : index
    %c0_49 = arith.constant 0 : index
    %44 = vector.load %arg4[%c12, %c0_49] : memref<36x8xbf16, #tpu.memory_space<vmem>>, vector<4x8xbf16>
    %cst_50 = arith.constant dense<0.000000e+00> : vector<64x8xf32>
    %45 = tpu.matmul %43, %44, %cst_50 {dimension_numbers = #tpu.dot_dimension_numbers<[1], [0], [0], [1], [0, 0, 1, 1], [], []>} : vector<64x4xbf16>, vector<4x8xbf16>, vector<64x8xf32> -> vector<64x8xf32>
    %46 = arith.addf %40, %45 : vector<64x8xf32>
    %c27_51 = arith.constant 27 : index
    %c0_52 = arith.constant 0 : index
    %c0_53 = arith.constant 0 : index
    %47 = vector.load %arg10[%c27_51, %c0_52, %c0_53] : memref<36x9x4xf32, #tpu.memory_space<vmem>>, vector<8x8x4xf32>
    %48 = vector.shape_cast %47 : vector<8x8x4xf32> to vector<64x4xf32>
    %49 = arith.truncf %48 : vector<64x4xf32> to vector<64x4xbf16>
    %c16 = arith.constant 16 : index
    %c0_54 = arith.constant 0 : index
    %50 = vector.load %arg4[%c16, %c0_54] : memref<36x8xbf16, #tpu.memory_space<vmem>>, vector<4x8xbf16>
    %cst_55 = arith.constant dense<0.000000e+00> : vector<64x8xf32>
    %51 = tpu.matmul %49, %50, %cst_55 {dimension_numbers = #tpu.dot_dimension_numbers<[1], [0], [0], [1], [0, 0, 1, 1], [], []>} : vector<64x4xbf16>, vector<4x8xbf16>, vector<64x8xf32> -> vector<64x8xf32>
    %52 = arith.addf %46, %51 : vector<64x8xf32>
    %c18_56 = arith.constant 18 : index
    %c1_57 = arith.constant 1 : index
    %c0_58 = arith.constant 0 : index
    %53 = vector.load %arg10[%c18_56, %c1_57, %c0_58] : memref<36x9x4xf32, #tpu.memory_space<vmem>>, vector<8x8x4xf32>
    %54 = vector.shape_cast %53 : vector<8x8x4xf32> to vector<64x4xf32>
    %55 = arith.truncf %54 : vector<64x4xf32> to vector<64x4xbf16>
    %c20 = arith.constant 20 : index
    %c0_59 = arith.constant 0 : index
    %56 = vector.load %arg4[%c20, %c0_59] : memref<36x8xbf16, #tpu.memory_space<vmem>>, vector<4x8xbf16>
    %cst_60 = arith.constant dense<0.000000e+00> : vector<64x8xf32>
    %57 = tpu.matmul %55, %56, %cst_60 {dimension_numbers = #tpu.dot_dimension_numbers<[1], [0], [0], [1], [0, 0, 1, 1], [], []>} : vector<64x4xbf16>, vector<4x8xbf16>, vector<64x8xf32> -> vector<64x8xf32>
    %58 = arith.addf %52, %57 : vector<64x8xf32>
    %c1_61 = arith.constant 1 : index
    %c0_62 = arith.constant 0 : index
    %c0_63 = arith.constant 0 : index
    %59 = vector.load %arg10[%c1_61, %c0_62, %c0_63] : memref<36x9x4xf32, #tpu.memory_space<vmem>>, vector<8x8x4xf32>
    %60 = vector.shape_cast %59 : vector<8x8x4xf32> to vector<64x4xf32>
    %61 = arith.truncf %60 : vector<64x4xf32> to vector<64x4xbf16>
    %c24 = arith.constant 24 : index
    %c0_64 = arith.constant 0 : index
    %62 = vector.load %arg4[%c24, %c0_64] : memref<36x8xbf16, #tpu.memory_space<vmem>>, vector<4x8xbf16>
    %cst_65 = arith.constant dense<0.000000e+00> : vector<64x8xf32>
    %63 = tpu.matmul %61, %62, %cst_65 {dimension_numbers = #tpu.dot_dimension_numbers<[1], [0], [0], [1], [0, 0, 1, 1], [], []>} : vector<64x4xbf16>, vector<4x8xbf16>, vector<64x8xf32> -> vector<64x8xf32>
    %64 = arith.addf %58, %63 : vector<64x8xf32>
    %c10 = arith.constant 10 : index
    %c0_66 = arith.constant 0 : index
    %c0_67 = arith.constant 0 : index
    %65 = vector.load %arg10[%c10, %c0_66, %c0_67] : memref<36x9x4xf32, #tpu.memory_space<vmem>>, vector<8x8x4xf32>
    %66 = vector.shape_cast %65 : vector<8x8x4xf32> to vector<64x4xf32>
    %67 = arith.truncf %66 : vector<64x4xf32> to vector<64x4xbf16>
    %c28 = arith.constant 28 : index
    %c0_68 = arith.constant 0 : index
    %68 = vector.load %arg4[%c28, %c0_68] : memref<36x8xbf16, #tpu.memory_space<vmem>>, vector<4x8xbf16>
    %cst_69 = arith.constant dense<0.000000e+00> : vector<64x8xf32>
    %69 = tpu.matmul %67, %68, %cst_69 {dimension_numbers = #tpu.dot_dimension_numbers<[1], [0], [0], [1], [0, 0, 1, 1], [], []>} : vector<64x4xbf16>, vector<4x8xbf16>, vector<64x8xf32> -> vector<64x8xf32>
    %70 = arith.addf %64, %69 : vector<64x8xf32>
    %c1_70 = arith.constant 1 : index
    %c1_71 = arith.constant 1 : index
    %c0_72 = arith.constant 0 : index
    %71 = vector.load %arg10[%c1_70, %c1_71, %c0_72] : memref<36x9x4xf32, #tpu.memory_space<vmem>>, vector<8x8x4xf32>
    %72 = vector.shape_cast %71 : vector<8x8x4xf32> to vector<64x4xf32>
    %73 = arith.truncf %72 : vector<64x4xf32> to vector<64x4xbf16>
    %c32 = arith.constant 32 : index
    %c0_73 = arith.constant 0 : index
    %74 = vector.load %arg4[%c32, %c0_73] : memref<36x8xbf16, #tpu.memory_space<vmem>>, vector<4x8xbf16>
    %cst_74 = arith.constant dense<0.000000e+00> : vector<64x8xf32>
    %75 = tpu.matmul %73, %74, %cst_74 {dimension_numbers = #tpu.dot_dimension_numbers<[1], [0], [0], [1], [0, 0, 1, 1], [], []>} : vector<64x4xbf16>, vector<4x8xbf16>, vector<64x8xf32> -> vector<64x8xf32>
    %76 = arith.addf %70, %75 : vector<64x8xf32>
    %c0_75 = arith.constant 0 : index
    %c0_76 = arith.constant 0 : index
    %77 = vector.load %arg5[%c0_75, %c0_76] : memref<1x8xf32, #tpu.memory_space<vmem>>, vector<1x8xf32>
    %78 = vector.broadcast %77 : vector<1x8xf32> to vector<64x8xf32>
    %79 = arith.mulf %76, %78 : vector<64x8xf32>
    %c0_77 = arith.constant 0 : index
    %c0_78 = arith.constant 0 : index
    %80 = vector.load %arg6[%c0_77, %c0_78] : memref<1x8xf32, #tpu.memory_space<vmem>>, vector<1x8xf32>
    %81 = vector.broadcast %80 : vector<1x8xf32> to vector<64x8xf32>
    %82 = arith.addf %79, %81 : vector<64x8xf32>
    %cst_79 = arith.constant 0.000000e+00 : f32
    %83 = vector.broadcast %cst_79 : f32 to vector<64x8xf32>
    %84 = arith.maximumf %82, %83 : vector<64x8xf32>
    %cst_80 = arith.constant 0.000000e+00 : f32
    %85 = vector.broadcast %cst_80 : f32 to vector<1x10x8xf32>
    %cst_81 = arith.constant 0.000000e+00 : f32
    %86 = vector.broadcast %cst_81 : f32 to vector<10x1x8xf32>
    %c0_82 = arith.constant 0 : index
    %c0_83 = arith.constant 0 : index
    %c0_84 = arith.constant 0 : index
    %87 = vector.load %arg11[%c0_82, %c0_83, %c0_84] : memref<10x10x8xf32, #tpu.memory_space<vmem>>, vector<1x10x8xf32>
    tpu.vector_store %arg11[%c0_82, %c0_83, %c0_84], %85 {strides = array<i32>} : memref<10x10x8xf32, #tpu.memory_space<vmem>>, vector<1x10x8xf32>,
    %c9_85 = arith.constant 9 : index
    %c0_86 = arith.constant 0 : index
    %c0_87 = arith.constant 0 : index
    %88 = vector.load %arg11[%c9_85, %c0_86, %c0_87] : memref<10x10x8xf32, #tpu.memory_space<vmem>>, vector<1x10x8xf32>
    tpu.vector_store %arg11[%c9_85, %c0_86, %c0_87], %85 {strides = array<i32>} : memref<10x10x8xf32, #tpu.memory_space<vmem>>, vector<1x10x8xf32>,
    %c0_88 = arith.constant 0 : index
    %c0_89 = arith.constant 0 : index
    %c0_90 = arith.constant 0 : index
    %89 = vector.load %arg11[%c0_88, %c0_89, %c0_90] : memref<10x10x8xf32, #tpu.memory_space<vmem>>, vector<10x1x8xf32>
    tpu.vector_store %arg11[%c0_88, %c0_89, %c0_90], %86 {strides = array<i32>} : memref<10x10x8xf32, #tpu.memory_space<vmem>>, vector<10x1x8xf32>,
    %c0_91 = arith.constant 0 : index
    %c9_92 = arith.constant 9 : index
    %c0_93 = arith.constant 0 : index
    %90 = vector.load %arg11[%c0_91, %c9_92, %c0_93] : memref<10x10x8xf32, #tpu.memory_space<vmem>>, vector<10x1x8xf32>
    tpu.vector_store %arg11[%c0_91, %c9_92, %c0_93], %86 {strides = array<i32>} : memref<10x10x8xf32, #tpu.memory_space<vmem>>, vector<10x1x8xf32>,
    %91 = vector.shape_cast %84 : vector<64x8xf32> to vector<8x8x8xf32>
    %c1_94 = arith.constant 1 : index
    %c1_95 = arith.constant 1 : index
    %c0_96 = arith.constant 0 : index
    %92 = vector.load %arg11[%c1_94, %c1_95, %c0_96] : memref<10x10x8xf32, #tpu.memory_space<vmem>>, vector<8x8x8xf32>
    tpu.vector_store %arg11[%c1_94, %c1_95, %c0_96], %91 {strides = array<i32>} : memref<10x10x8xf32, #tpu.memory_space<vmem>>, vector<8x8x8xf32>,
    %c0_97 = arith.constant 0 : index
    %c0_98 = arith.constant 0 : index
    %c0_99 = arith.constant 0 : index
    %93 = vector.load %arg11[%c0_97, %c0_98, %c0_99] : memref<10x10x8xf32, #tpu.memory_space<vmem>>, vector<8x8x8xf32>
    %94 = vector.shape_cast %93 : vector<8x8x8xf32> to vector<64x8xf32>
    %95 = arith.truncf %94 : vector<64x8xf32> to vector<64x8xbf16>
    %c0_100 = arith.constant 0 : index
    %c0_101 = arith.constant 0 : index
    %96 = vector.load %arg7[%c0_100, %c0_101] : memref<72x8xbf16, #tpu.memory_space<vmem>>, vector<8x8xbf16>
    %cst_102 = arith.constant dense<0.000000e+00> : vector<64x8xf32>
    %97 = tpu.matmul %95, %96, %cst_102 {dimension_numbers = #tpu.dot_dimension_numbers<[1], [0], [0], [1], [0, 0, 1, 1], [], []>} : vector<64x8xbf16>, vector<8x8xbf16>, vector<64x8xf32> -> vector<64x8xf32>
    %c0_103 = arith.constant 0 : index
    %c1_104 = arith.constant 1 : index
    %c0_105 = arith.constant 0 : index
    %98 = vector.load %arg11[%c0_103, %c1_104, %c0_105] : memref<10x10x8xf32, #tpu.memory_space<vmem>>, vector<8x8x8xf32>
    %99 = vector.shape_cast %98 : vector<8x8x8xf32> to vector<64x8xf32>
    %100 = arith.truncf %99 : vector<64x8xf32> to vector<64x8xbf16>
    %c8_106 = arith.constant 8 : index
    %c0_107 = arith.constant 0 : index
    %101 = vector.load %arg7[%c8_106, %c0_107] : memref<72x8xbf16, #tpu.memory_space<vmem>>, vector<8x8xbf16>
    %cst_108 = arith.constant dense<0.000000e+00> : vector<64x8xf32>
    %102 = tpu.matmul %100, %101, %cst_108 {dimension_numbers = #tpu.dot_dimension_numbers<[1], [0], [0], [1], [0, 0, 1, 1], [], []>} : vector<64x8xbf16>, vector<8x8xbf16>, vector<64x8xf32> -> vector<64x8xf32>
    %103 = arith.addf %97, %102 : vector<64x8xf32>
    %c0_109 = arith.constant 0 : index
    %c2 = arith.constant 2 : index
    %c0_110 = arith.constant 0 : index
    %104 = vector.load %arg11[%c0_109, %c2, %c0_110] : memref<10x10x8xf32, #tpu.memory_space<vmem>>, vector<8x8x8xf32>
    %105 = vector.shape_cast %104 : vector<8x8x8xf32> to vector<64x8xf32>
    %106 = arith.truncf %105 : vector<64x8xf32> to vector<64x8xbf16>
    %c16_111 = arith.constant 16 : index
    %c0_112 = arith.constant 0 : index
    %107 = vector.load %arg7[%c16_111, %c0_112] : memref<72x8xbf16, #tpu.memory_space<vmem>>, vector<8x8xbf16>
    %cst_113 = arith.constant dense<0.000000e+00> : vector<64x8xf32>
    %108 = tpu.matmul %106, %107, %cst_113 {dimension_numbers = #tpu.dot_dimension_numbers<[1], [0], [0], [1], [0, 0, 1, 1], [], []>} : vector<64x8xbf16>, vector<8x8xbf16>, vector<64x8xf32> -> vector<64x8xf32>
    %109 = arith.addf %103, %108 : vector<64x8xf32>
    %c1_114 = arith.constant 1 : index
    %c0_115 = arith.constant 0 : index
    %c0_116 = arith.constant 0 : index
    %110 = vector.load %arg11[%c1_114, %c0_115, %c0_116] : memref<10x10x8xf32, #tpu.memory_space<vmem>>, vector<8x8x8xf32>
    %111 = vector.shape_cast %110 : vector<8x8x8xf32> to vector<64x8xf32>
    %112 = arith.truncf %111 : vector<64x8xf32> to vector<64x8xbf16>
    %c24_117 = arith.constant 24 : index
    %c0_118 = arith.constant 0 : index
    %113 = vector.load %arg7[%c24_117, %c0_118] : memref<72x8xbf16, #tpu.memory_space<vmem>>, vector<8x8xbf16>
    %cst_119 = arith.constant dense<0.000000e+00> : vector<64x8xf32>
    %114 = tpu.matmul %112, %113, %cst_119 {dimension_numbers = #tpu.dot_dimension_numbers<[1], [0], [0], [1], [0, 0, 1, 1], [], []>} : vector<64x8xbf16>, vector<8x8xbf16>, vector<64x8xf32> -> vector<64x8xf32>
    %115 = arith.addf %109, %114 : vector<64x8xf32>
    %c1_120 = arith.constant 1 : index
    %c1_121 = arith.constant 1 : index
    %c0_122 = arith.constant 0 : index
    %116 = vector.load %arg11[%c1_120, %c1_121, %c0_122] : memref<10x10x8xf32, #tpu.memory_space<vmem>>, vector<8x8x8xf32>
    %117 = vector.shape_cast %116 : vector<8x8x8xf32> to vector<64x8xf32>
    %118 = arith.truncf %117 : vector<64x8xf32> to vector<64x8xbf16>
    %c32_123 = arith.constant 32 : index
    %c0_124 = arith.constant 0 : index
    %119 = vector.load %arg7[%c32_123, %c0_124] : memref<72x8xbf16, #tpu.memory_space<vmem>>, vector<8x8xbf16>
    %cst_125 = arith.constant dense<0.000000e+00> : vector<64x8xf32>
    %120 = tpu.matmul %118, %119, %cst_125 {dimension_numbers = #tpu.dot_dimension_numbers<[1], [0], [0], [1], [0, 0, 1, 1], [], []>} : vector<64x8xbf16>, vector<8x8xbf16>, vector<64x8xf32> -> vector<64x8xf32>
    %121 = arith.addf %115, %120 : vector<64x8xf32>
    %c1_126 = arith.constant 1 : index
    %c2_127 = arith.constant 2 : index
    %c0_128 = arith.constant 0 : index
    %122 = vector.load %arg11[%c1_126, %c2_127, %c0_128] : memref<10x10x8xf32, #tpu.memory_space<vmem>>, vector<8x8x8xf32>
    %123 = vector.shape_cast %122 : vector<8x8x8xf32> to vector<64x8xf32>
    %124 = arith.truncf %123 : vector<64x8xf32> to vector<64x8xbf16>
    %c40 = arith.constant 40 : index
    %c0_129 = arith.constant 0 : index
    %125 = vector.load %arg7[%c40, %c0_129] : memref<72x8xbf16, #tpu.memory_space<vmem>>, vector<8x8xbf16>
    %cst_130 = arith.constant dense<0.000000e+00> : vector<64x8xf32>
    %126 = tpu.matmul %124, %125, %cst_130 {dimension_numbers = #tpu.dot_dimension_numbers<[1], [0], [0], [1], [0, 0, 1, 1], [], []>} : vector<64x8xbf16>, vector<8x8xbf16>, vector<64x8xf32> -> vector<64x8xf32>
    %127 = arith.addf %121, %126 : vector<64x8xf32>
    %c2_131 = arith.constant 2 : index
    %c0_132 = arith.constant 0 : index
    %c0_133 = arith.constant 0 : index
    %128 = vector.load %arg11[%c2_131, %c0_132, %c0_133] : memref<10x10x8xf32, #tpu.memory_space<vmem>>, vector<8x8x8xf32>
    %129 = vector.shape_cast %128 : vector<8x8x8xf32> to vector<64x8xf32>
    %130 = arith.truncf %129 : vector<64x8xf32> to vector<64x8xbf16>
    %c48 = arith.constant 48 : index
    %c0_134 = arith.constant 0 : index
    %131 = vector.load %arg7[%c48, %c0_134] : memref<72x8xbf16, #tpu.memory_space<vmem>>, vector<8x8xbf16>
    %cst_135 = arith.constant dense<0.000000e+00> : vector<64x8xf32>
    %132 = tpu.matmul %130, %131, %cst_135 {dimension_numbers = #tpu.dot_dimension_numbers<[1], [0], [0], [1], [0, 0, 1, 1], [], []>} : vector<64x8xbf16>, vector<8x8xbf16>, vector<64x8xf32> -> vector<64x8xf32>
    %133 = arith.addf %127, %132 : vector<64x8xf32>
    %c2_136 = arith.constant 2 : index
    %c1_137 = arith.constant 1 : index
    %c0_138 = arith.constant 0 : index
    %134 = vector.load %arg11[%c2_136, %c1_137, %c0_138] : memref<10x10x8xf32, #tpu.memory_space<vmem>>, vector<8x8x8xf32>
    %135 = vector.shape_cast %134 : vector<8x8x8xf32> to vector<64x8xf32>
    %136 = arith.truncf %135 : vector<64x8xf32> to vector<64x8xbf16>
    %c56 = arith.constant 56 : index
    %c0_139 = arith.constant 0 : index
    %137 = vector.load %arg7[%c56, %c0_139] : memref<72x8xbf16, #tpu.memory_space<vmem>>, vector<8x8xbf16>
    %cst_140 = arith.constant dense<0.000000e+00> : vector<64x8xf32>
    %138 = tpu.matmul %136, %137, %cst_140 {dimension_numbers = #tpu.dot_dimension_numbers<[1], [0], [0], [1], [0, 0, 1, 1], [], []>} : vector<64x8xbf16>, vector<8x8xbf16>, vector<64x8xf32> -> vector<64x8xf32>
    %139 = arith.addf %133, %138 : vector<64x8xf32>
    %c2_141 = arith.constant 2 : index
    %c2_142 = arith.constant 2 : index
    %c0_143 = arith.constant 0 : index
    %140 = vector.load %arg11[%c2_141, %c2_142, %c0_143] : memref<10x10x8xf32, #tpu.memory_space<vmem>>, vector<8x8x8xf32>
    %141 = vector.shape_cast %140 : vector<8x8x8xf32> to vector<64x8xf32>
    %142 = arith.truncf %141 : vector<64x8xf32> to vector<64x8xbf16>
    %c64 = arith.constant 64 : index
    %c0_144 = arith.constant 0 : index
    %143 = vector.load %arg7[%c64, %c0_144] : memref<72x8xbf16, #tpu.memory_space<vmem>>, vector<8x8xbf16>
    %cst_145 = arith.constant dense<0.000000e+00> : vector<64x8xf32>
    %144 = tpu.matmul %142, %143, %cst_145 {dimension_numbers = #tpu.dot_dimension_numbers<[1], [0], [0], [1], [0, 0, 1, 1], [], []>} : vector<64x8xbf16>, vector<8x8xbf16>, vector<64x8xf32> -> vector<64x8xf32>
    %145 = arith.addf %139, %144 : vector<64x8xf32>
    %c0_146 = arith.constant 0 : index
    %c0_147 = arith.constant 0 : index
    %146 = vector.load %arg8[%c0_146, %c0_147] : memref<4x8xbf16, #tpu.memory_space<vmem>>, vector<4x8xbf16>
    %cst_148 = arith.constant dense<0.000000e+00> : vector<64x8xf32>
    %147 = tpu.matmul %49, %146, %cst_148 {dimension_numbers = #tpu.dot_dimension_numbers<[1], [0], [0], [1], [0, 0, 1, 1], [], []>} : vector<64x4xbf16>, vector<4x8xbf16>, vector<64x8xf32> -> vector<64x8xf32>
    %148 = arith.addf %145, %147 : vector<64x8xf32>
    %c0_149 = arith.constant 0 : index
    %c0_150 = arith.constant 0 : index
    %c0_151 = arith.constant 0 : index
    %149 = vector.load %arg9[%c0_149, %c0_150, %c0_151] : memref<1x64x8xf32, #tpu.memory_space<vmem>>, vector<1x64x8xf32>
    %150 = vector.shape_cast %149 : vector<1x64x8xf32> to vector<64x8xf32>
    %151 = vector.shape_cast %148 : vector<64x8xf32> to vector<1x64x8xf32>
    tpu.vector_store %arg9[%c0_149, %c0_150, %c0_151], %151 {strides = array<i32>} : memref<1x64x8xf32, #tpu.memory_space<vmem>>, vector<1x64x8xf32>,
    return
  }
  func.func @transform_0(%arg0: i32) -> (i32, i32, i32, i32) {
    %c0_i32 = arith.constant 0 : i32
    %c0_i32_0 = arith.constant 0 : i32
    %c0_i32_1 = arith.constant 0 : i32
    %c0_i32_2 = arith.constant 0 : i32
    return %arg0, %c0_i32, %c0_i32_0, %c0_i32_1 : i32, i32, i32, i32
  }
  func.func @transform_1(%arg0: i32) -> (i32, i32) {
    %c0_i32 = arith.constant 0 : i32
    %c0_i32_0 = arith.constant 0 : i32
    %c0_i32_1 = arith.constant 0 : i32
    return %c0_i32, %c0_i32_0 : i32, i32
  }
  func.func @transform_2(%arg0: i32) -> (i32, i32) {
    %c0_i32 = arith.constant 0 : i32
    %c0_i32_0 = arith.constant 0 : i32
    %c0_i32_1 = arith.constant 0 : i32
    return %c0_i32, %c0_i32_0 : i32, i32
  }
  func.func @transform_3(%arg0: i32) -> (i32, i32) {
    %c0_i32 = arith.constant 0 : i32
    %c0_i32_0 = arith.constant 0 : i32
    %c0_i32_1 = arith.constant 0 : i32
    return %c0_i32, %c0_i32_0 : i32, i32
  }
  func.func @transform_4(%arg0: i32) -> (i32, i32) {
    %c0_i32 = arith.constant 0 : i32
    %c0_i32_0 = arith.constant 0 : i32
    %c0_i32_1 = arith.constant 0 : i32
    return %c0_i32, %c0_i32_0 : i32, i32
  }
  func.func @transform_5(%arg0: i32) -> (i32, i32) {
    %c0_i32 = arith.constant 0 : i32
    %c0_i32_0 = arith.constant 0 : i32
    %c0_i32_1 = arith.constant 0 : i32
    return %c0_i32, %c0_i32_0 : i32, i32
  }
  func.func @transform_6(%arg0: i32) -> (i32, i32) {
    %c0_i32 = arith.constant 0 : i32
    %c0_i32_0 = arith.constant 0 : i32
    %c0_i32_1 = arith.constant 0 : i32
    return %c0_i32, %c0_i32_0 : i32, i32
  }
  func.func @transform_7(%arg0: i32) -> (i32, i32) {
    %c0_i32 = arith.constant 0 : i32
    %c0_i32_0 = arith.constant 0 : i32
    %c0_i32_1 = arith.constant 0 : i32
    return %c0_i32, %c0_i32_0 : i32, i32
  }
  func.func @transform_8(%arg0: i32) -> (i32, i32, i32) {
    %c0_i32 = arith.constant 0 : i32
    %c0_i32_0 = arith.constant 0 : i32
    %c0_i32_1 = arith.constant 0 : i32
    return %arg0, %c0_i32, %c0_i32_0 : i32, i32, i32
  }
}

</mosaic_0001>

<llo_original>
// kernel: basic_block_forward.1
$region0: #{basic_block_forward.1}
  #allocation0 [shape = 'u32[]', space=smem, size = 0x4, offset = 0x4, fixed_abs, tag = 'smem constant byte address 0x4 - core index']
  #allocation1 [shape = 'u32[144,128]{1,0:T(1,128)}', space=vmem, size = 0x12000, scoped, tag = 'internal scratch']
  #allocation2 [shape = 'f32[36,9,4]{2,1,0:T(8,128)}', space=vmem, size = 0x48000, scoped, tag = 'scratch operand']
  #allocation3 [shape = 'f32[10,10,8]{2,1,0:T(8,128)}', space=vmem, size = 0x14000, scoped, tag = 'scratch operand']
  %s0 = inlined_call_operand.vmem [shape: bf16[2,36,9,4], index: 0, kind: input, shape index: {}]
  %s1 = inlined_call_operand.vmem [shape: f32[1,4], index: 1, kind: input, shape index: {}]
  %s2 = inlined_call_operand.vmem [shape: f32[1,4], index: 2, kind: input, shape index: {}]
  %s3 = inlined_call_operand.vmem [shape: bf16[36,8], index: 3, kind: input, shape index: {}]
  %s4 = inlined_call_operand.vmem [shape: f32[1,8], index: 4, kind: input, shape index: {}]
  %s5 = inlined_call_operand.vmem [shape: f32[1,8], index: 5, kind: input, shape index: {}]
  %s6 = inlined_call_operand.vmem [shape: bf16[72,8], index: 6, kind: input, shape index: {}]
  %s7 = inlined_call_operand.vmem [shape: bf16[4,8], index: 7, kind: input, shape index: {}]
  %s8 = inlined_call_operand.vmem [shape: f32[2,64,8], index: 8, kind: output, shape index: {}]
  %s9 = sld [smem:[#allocation0]]
  $region65: #{basic_block_forward.1} parent=0
    _
  %s11 = ssub.s32 1, %s9
  %s12 = scalar_select 0, %s11, %s9
  loop: start=0, step=1, limit=4
  $region2: #{basic_block_forward.1} parent=0 // loop_pre_header
    _
  $region3: #{basic_block_forward.1} parent=0 // loop_header
    %s14 = sphi 0, %s18
    %p15 = scmp.ge.s32.totalorder %s14, 4
    %s24 = sphi 0, %s26
    %s27 = sphi 0, %s24
    %s28 = sphi 0, %s27
    %s44 = sphi 0, %s28
    %s48 = sphi 0, %s48
    %s50 = sphi 0, %s48
    %s51 = sphi 0, %s50
    %s65 = sphi 0, %s51
    %s69 = sphi 0, %s69
    %s71 = sphi 0, %s69
    %s72 = sphi 0, %s71
    %s86 = sphi 0, %s72
    %s90 = sphi 0, %s90
    %s92 = sphi 0, %s90
    %s93 = sphi 0, %s92
    %s107 = sphi 0, %s93
    %s111 = sphi 0, %s111
    %s113 = sphi 0, %s111
    %s114 = sphi 0, %s113
    %s128 = sphi 0, %s114
    %s132 = sphi 0, %s132
    %s134 = sphi 0, %s132
    %s135 = sphi 0, %s134
    %s149 = sphi 0, %s135
    %s153 = sphi 0, %s153
    %s155 = sphi 0, %s153
    %s156 = sphi 0, %s155
    %s170 = sphi 0, %s156
    %s174 = sphi 0, %s174
    %s176 = sphi 0, %s174
    %s177 = sphi 0, %s176
    %s191 = sphi 0, %s177
    %s197 = sphi 0, %s199
    %s200 = sphi 0, %s197
    %s201 = sphi 0, %s200
    %s217 = sphi 0, %s201
  $region4: #{basic_block_forward.1} parent=0 // loop_header_branch
    %17 = sbr.rel (%p15) target = $region8
  $region5: #{basic_block_forward.1} parent=0 // loop_body
    %s19 = ssub.s32 %s14, 1
    %s20 = ssub.s32 %s14, 2
    %s21 = sadd.s32 %s14, 1
    %s22 = ssub.s32 %s14, %s21
    %p23 = scmp.eq.s32.totalorder %s22, 0
    %s25 = sadd.s32 %s24, 1
    %s26 = scalar_select %p23, %s24, %s25
    %p29 = pneg %p23
    %p30 = scmp.eq.s32.totalorder %s14, 1
    %p31 = por %p29, %p30
    %p32 = scmp.ne.s32.totalorder %s24, %s27
    %p33 = scmp.eq.s32.totalorder %s14, 0
    %p34 = por %p32, %p33
    %p35 = scmp.ne.s32.totalorder %s24, %s27
    %p36 = scmp.eq.s32.totalorder %s19, 1
    %p37 = por %p35, %p36
    %p38 = scmp.ne.s32.totalorder %s27, %s28
    %p39 = scmp.eq.s32.totalorder %s19, 0
    %p40 = por %p38, %p39
    %p41 = scmp.ne.s32.totalorder %s27, %s28
    %p42 = scmp.eq.s32.totalorder %s20, 1
    %p43 = por %p41, %p42
    %p45 = scmp.ne.s32.totalorder %s28, %s44
    %p46 = scmp.eq.s32.totalorder %s20, 0
    %p47 = por %p45, %p46
    %s49 = sadd.s32 %s48, 1
    %p52 = scmp.eq.s32.totalorder %s14, 1
    %p53 = scmp.ne.s32.totalorder %s48, %s50
    %p54 = scmp.eq.s32.totalorder %s14, 0
    %p55 = por %p53, %p54
    %p56 = scmp.ne.s32.totalorder %s48, %s50
    %p57 = scmp.eq.s32.totalorder %s19, 1
    %p58 = por %p56, %p57
    %p59 = scmp.ne.s32.totalorder %s50, %s51
    %p60 = scmp.eq.s32.totalorder %s19, 0
    %p61 = por %p59, %p60
    %p62 = scmp.ne.s32.totalorder %s50, %s51
    %p63 = scmp.eq.s32.totalorder %s20, 1
    %p64 = por %p62, %p63
    %p66 = scmp.ne.s32.totalorder %s51, %s65
    %p67 = scmp.eq.s32.totalorder %s20, 0
    %p68 = por %p66, %p67
    %s70 = sadd.s32 %s69, 1
    %p73 = scmp.eq.s32.totalorder %s14, 1
    %p74 = scmp.ne.s32.totalorder %s69, %s71
    %p75 = scmp.eq.s32.totalorder %s14, 0
    %p76 = por %p74, %p75
    %p77 = scmp.ne.s32.totalorder %s69, %s71
    %p78 = scmp.eq.s32.totalorder %s19, 1
    %p79 = por %p77, %p78
    %p80 = scmp.ne.s32.totalorder %s71, %s72
    %p81 = scmp.eq.s32.totalorder %s19, 0
    %p82 = por %p80, %p81
    %p83 = scmp.ne.s32.totalorder %s71, %s72
    %p84 = scmp.eq.s32.totalorder %s20, 1
    %p85 = por %p83, %p84
    %p87 = scmp.ne.s32.totalorder %s72, %s86
    %p88 = scmp.eq.s32.totalorder %s20, 0
    %p89 = por %p87, %p88
    %s91 = sadd.s32 %s90, 1
    %p94 = scmp.eq.s32.totalorder %s14, 1
    %p95 = scmp.ne.s32.totalorder %s90, %s92
    %p96 = scmp.eq.s32.totalorder %s14, 0
    %p97 = por %p95, %p96
    %p98 = scmp.ne.s32.totalorder %s90, %s92
    %p99 = scmp.eq.s32.totalorder %s19, 1
    %p100 = por %p98, %p99
    %p101 = scmp.ne.s32.totalorder %s92, %s93
    %p102 = scmp.eq.s32.totalorder %s19, 0
    %p103 = por %p101, %p102
    %p104 = scmp.ne.s32.totalorder %s92, %s93
    %p105 = scmp.eq.s32.totalorder %s20, 1
    %p106 = por %p104, %p105
    %p108 = scmp.ne.s32.totalorder %s93, %s107
    %p109 = scmp.eq.s32.totalorder %s20, 0
    %p110 = por %p108, %p109
    %s112 = sadd.s32 %s111, 1
    %p115 = scmp.eq.s32.totalorder %s14, 1
    %p116 = scmp.ne.s32.totalorder %s111, %s113
    %p117 = scmp.eq.s32.totalorder %s14, 0
    %p118 = por %p116, %p117
    %p119 = scmp.ne.s32.totalorder %s111, %s113
    %p120 = scmp.eq.s32.totalorder %s19, 1
    %p121 = por %p119, %p120
    %p122 = scmp.ne.s32.totalorder %s113, %s114
    %p123 = scmp.eq.s32.totalorder %s19, 0
    %p124 = por %p122, %p123
    %p125 = scmp.ne.s32.totalorder %s113, %s114
    %p126 = scmp.eq.s32.totalorder %s20, 1
    %p127 = por %p125, %p126
    %p129 = scmp.ne.s32.totalorder %s114, %s128
    %p130 = scmp.eq.s32.totalorder %s20, 0
    %p131 = por %p129, %p130
    %s133 = sadd.s32 %s132, 1
    %p136 = scmp.eq.s32.totalorder %s14, 1
    %p137 = scmp.ne.s32.totalorder %s132, %s134
    %p138 = scmp.eq.s32.totalorder %s14, 0
    %p139 = por %p137, %p138
    %p140 = scmp.ne.s32.totalorder %s132, %s134
    %p141 = scmp.eq.s32.totalorder %s19, 1
    %p142 = por %p140, %p141
    %p143 = scmp.ne.s32.totalorder %s134, %s135
    %p144 = scmp.eq.s32.totalorder %s19, 0
    %p145 = por %p143, %p144
    %p146 = scmp.ne.s32.totalorder %s134, %s135
    %p147 = scmp.eq.s32.totalorder %s20, 1
    %p148 = por %p146, %p147
    %p150 = scmp.ne.s32.totalorder %s135, %s149
    %p151 = scmp.eq.s32.totalorder %s20, 0
    %p152 = por %p150, %p151
    %s154 = sadd.s32 %s153, 1
    %p157 = scmp.eq.s32.totalorder %s14, 1
    %p158 = scmp.ne.s32.totalorder %s153, %s155
    %p159 = scmp.eq.s32.totalorder %s14, 0
    %p160 = por %p158, %p159
    %p161 = scmp.ne.s32.totalorder %s153, %s155
    %p162 = scmp.eq.s32.totalorder %s19, 1
    %p163 = por %p161, %p162
    %p164 = scmp.ne.s32.totalorder %s155, %s156
    %p165 = scmp.eq.s32.totalorder %s19, 0
    %p166 = por %p164, %p165
    %p167 = scmp.ne.s32.totalorder %s155, %s156
    %p168 = scmp.eq.s32.totalorder %s20, 1
    %p169 = por %p167, %p168
    %p171 = scmp.ne.s32.totalorder %s156, %s170
    %p172 = scmp.eq.s32.totalorder %s20, 0
    %p173 = por %p171, %p172
    %s175 = sadd.s32 %s174, 1
    %p178 = scmp.eq.s32.totalorder %s14, 1
    %p179 = scmp.ne.s32.totalorder %s174, %s176
    %p180 = scmp.eq.s32.totalorder %s14, 0
    %p181 = por %p179, %p180
    %p182 = scmp.ne.s32.totalorder %s174, %s176
    %p183 = scmp.eq.s32.totalorder %s19, 1
    %p184 = por %p182, %p183
    %p185 = scmp.ne.s32.totalorder %s176, %s177
    %p186 = scmp.eq.s32.totalorder %s19, 0
    %p187 = por %p185, %p186
    %p188 = scmp.ne.s32.totalorder %s176, %s177
    %p189 = scmp.eq.s32.totalorder %s20, 1
    %p190 = por %p188, %p189
    %p192 = scmp.ne.s32.totalorder %s177, %s191
    %p193 = scmp.eq.s32.totalorder %s20, 0
    %p194 = por %p192, %p193
    %s195 = ssub.s32 %s14, %s21
    %p196 = scmp.eq.s32.totalorder %s195, 0
    %s198 = sadd.s32 %s197, 1
    %s199 = scalar_select %p196, %s197, %s198
    %p202 = pneg %p196
    %p203 = scmp.eq.s32.totalorder %s14, 1
    %p204 = por %p202, %p203
    %p205 = scmp.ne.s32.totalorder %s197, %s200
    %p206 = scmp.eq.s32.totalorder %s14, 0
    %p207 = por %p205, %p206
    %p208 = scmp.ne.s32.totalorder %s197, %s200
    %p209 = scmp.eq.s32.totalorder %s19, 1
    %p210 = por %p208, %p209
    %p211 = scmp.ne.s32.totalorder %s200, %s201
    %p212 = scmp.eq.s32.totalorder %s19, 0
    %p213 = por %p211, %p212
    %p214 = scmp.ne.s32.totalorder %s200, %s201
    %p215 = scmp.eq.s32.totalorder %s20, 1
    %p216 = por %p214, %p215
    %p218 = scmp.ne.s32.totalorder %s201, %s217
    %p219 = scmp.eq.s32.totalorder %s20, 0
    %p220 = por %p218, %p219
    %p221 = scmp.le.s32.totalorder 1, %s14
    %p222 = scmp.lt.s32.totalorder %s14, 3
    %p223 = pnand %p221, %p222
    %p224 = pneg %p223
    // Predicated region
    $region9: #{basic_block_forward.1} parent=5 // pred_check
      _
    $region10: #{basic_block_forward.1} parent=5 // pred_check_branch
      %226 = sbr.rel (%p223) target = $region12
    $region11: #{basic_block_forward.1} parent=5 // pred_region
      %s227 = ssub.s32 %s14, 1
      // Predicated region
      $region13: #{basic_block_forward.1} parent=11 // pred_check
        %p228 = pneg %p61
      $region14: #{basic_block_forward.1} parent=11 // pred_check_branch
        %230 = sbr.rel (%p228) target = $region16
      $region15: #{basic_block_forward.1} parent=11 // pred_region
        _
      $region16: #{basic_block_forward.1} parent=11 // pred_fallthru
        _
      // Predicated region
      $region17: #{basic_block_forward.1} parent=11 // pred_check
        %p231 = pneg %p82
      $region18: #{basic_block_forward.1} parent=11 // pred_check_branch
        %233 = sbr.rel (%p231) target = $region20
      $region19: #{basic_block_forward.1} parent=11 // pred_region
        _
      $region20: #{basic_block_forward.1} parent=11 // pred_fallthru
        _
      // Predicated region
      $region21: #{basic_block_forward.1} parent=11 // pred_check
        %p234 = pneg %p103
      $region22: #{basic_block_forward.1} parent=11 // pred_check_branch
        %236 = sbr.rel (%p234) target = $region24
      $region23: #{basic_block_forward.1} parent=11 // pred_region
        _
      $region24: #{basic_block_forward.1} parent=11 // pred_fallthru
        _
      // Predicated region
      $region25: #{basic_block_forward.1} parent=11 // pred_check
        %p237 = pneg %p124
      $region26: #{basic_block_forward.1} parent=11 // pred_check_branch
        %239 = sbr.rel (%p237) target = $region28
      $region27: #{basic_block_forward.1} parent=11 // pred_region
        _
      $region28: #{basic_block_forward.1} parent=11 // pred_fallthru
        _
      // Predicated region
      $region29: #{basic_block_forward.1} parent=11 // pred_check
        %p240 = pneg %p145
      $region30: #{basic_block_forward.1} parent=11 // pred_check_branch
        %242 = sbr.rel (%p240) target = $region32
      $region31: #{basic_block_forward.1} parent=11 // pred_region
        _
      $region32: #{basic_block_forward.1} parent=11 // pred_fallthru
        _
      // Predicated region
      $region33: #{basic_block_forward.1} parent=11 // pred_check
        %p243 = pneg %p166
      $region34: #{basic_block_forward.1} parent=11 // pred_check_branch
        %245 = sbr.rel (%p243) target = $region36
      $region35: #{basic_block_forward.1} parent=11 // pred_region
        _
      $region36: #{basic_block_forward.1} parent=11 // pred_fallthru
        _
      // Predicated region
      $region37: #{basic_block_forward.1} parent=11 // pred_check
        %p246 = pneg %p187
      $region38: #{basic_block_forward.1} parent=11 // pred_check_branch
        %248 = sbr.rel (%p246) target = $region40
      $region39: #{basic_block_forward.1} parent=11 // pred_region
        _
      $region40: #{basic_block_forward.1} parent=11 // pred_fallthru
        _
    $region12: #{basic_block_forward.1} parent=5 // pred_fallthru
      _
    %p249 = scmp.lt.s32.totalorder %s14, 2
    // Predicated region
    $region41: #{basic_block_forward.1} parent=5 // pred_check
      %p250 = pneg %p249
    $region42: #{basic_block_forward.1} parent=5 // pred_check_branch
      %252 = sbr.rel (%p250) target = $region44
    $region43: #{basic_block_forward.1} parent=5 // pred_region
      // Predicated region
      $region45: #{basic_block_forward.1} parent=43 // pred_check
        %p253 = pneg %p34
      $region46: #{basic_block_forward.1} parent=43 // pred_check_branch
        %255 = sbr.rel (%p253) target = $region48
      $region47: #{basic_block_forward.1} parent=43 // pred_region
        %p256 = scmp.lt.s32.totalorder %s14, 1
        %s257 = scalar_select %p256, %s14, 1
        %s258 = smul.addr %s257, 72
        %s259 = smul.addr %s258, 4
        %s260 = scalar_lea.vmem %s0, %s259
      $region48: #{basic_block_forward.1} parent=43 // pred_fallthru
        _
    $region44: #{basic_block_forward.1} parent=5 // pred_fallthru
      _
    %p261 = scmp.le.s32.totalorder 1, %s14
    %p262 = scmp.lt.s32.totalorder %s14, 3
    %p263 = pnand %p261, %p262
    %p264 = pneg %p263
    // Predicated region
    $region49: #{basic_block_forward.1} parent=5 // pred_check
      _
    $region50: #{basic_block_forward.1} parent=5 // pred_check_branch
      %266 = sbr.rel (%p263) target = $region52
    $region51: #{basic_block_forward.1} parent=5 // pred_region
      %s267 = ssub.s32 %s14, 1
      %p268 = scmp.lt.s32.totalorder %s19, 1
      %s269 = scalar_select %p268, %s19, 1
      %s270 = smul.addr %s269, 72
      %s271 = smul.addr %s270, 4
      %s272 = scalar_lea.vmem %s0, %s271
      %p273 = pneg %p40
      %p274 = pneg %p37
      %p275 = pneg %p61
      %p276 = pneg %p58
      %p277 = pneg %p82
      %p278 = pneg %p79
      %p279 = pneg %p103
      %p280 = pneg %p100
      %p281 = pneg %p124
      %p282 = pneg %p121
      %p283 = pneg %p145
      %p284 = pneg %p142
      %p285 = pneg %p166
      %p286 = pneg %p163
      %p287 = pneg %p187
      %p288 = pneg %p184
      %p289 = pneg %p213
      %p290 = pneg %p210
      %p291 = scmp.lt.s32.totalorder %s19, 1
      %s292 = scalar_select %p291, %s19, 1
      %s293 = smul.addr %s292, 8
      %s294 = smul.addr %s293, 8
      %s295 = scalar_lea.vmem %s8, %s294
      %p296 = scmp.lt.s32.totalorder %s19, 1
      %s297 = scalar_select %p296, %s19, 1
      %s298 = smul.addr %s297, 72
      %s299 = smul.addr %s298, 4
      %s300 = scalar_lea.vmem %s0, %s299
      %p301 = scmp.lt.s32.totalorder %s19, 1
      %s302 = scalar_select %p301, %s19, 1
      %s303 = smul.addr %s302, 8
      %s304 = smul.addr %s303, 8
      %s305 = scalar_lea.vmem %s8, %s304
      %v307 = vld [vmem:[%s300] sm:$0xf]
      %v308 = vld [vmem:[%s300 + $0x4] sm:$0x1]
      %v309 = vld [vmem:[%s300 + $0x8] sm:$0xf]
      %v310 = vld [vmem:[%s300 + $0xc] sm:$0x1]
      %v311 = vld [vmem:[%s300 + $0x10] sm:$0xf]
      %v312 = vld [vmem:[%s300 + $0x14] sm:$0x1]
      %v313 = vld [vmem:[%s300 + $0x18] sm:$0xf]
      %v314 = vld [vmem:[%s300 + $0x1c] sm:$0x1]
      %v315 = vld [vmem:[%s300 + $0x20] sm:$0xf]
      %v316 = vld [vmem:[%s300 + $0x24] sm:$0x1]
      %v317 = vld [vmem:[%s300 + $0x28] sm:$0xf]
      %v318 = vld [vmem:[%s300 + $0x2c] sm:$0x1]
      %v319 = vld [vmem:[%s300 + $0x30] sm:$0xf]
      %v320 = vld [vmem:[%s300 + $0x34] sm:$0x1]
      %v321 = vld [vmem:[%s300 + $0x38] sm:$0xf]
      %v322 = vld [vmem:[%s300 + $0x3c] sm:$0x1]
      %v323 = vld [vmem:[%s300 + $0x40] sm:$0xf]
      %v324 = vld [vmem:[%s300 + $0x44] sm:$0x1]
      %v325 = vld [vmem:[%s300 + $0x48] sm:$0xf]
      %v326 = vld [vmem:[%s300 + $0x4c] sm:$0x1]
      %v327 = vld [vmem:[%s300 + $0x50] sm:$0xf]
      %v328 = vld [vmem:[%s300 + $0x54] sm:$0x1]
      %v329 = vld [vmem:[%s300 + $0x58] sm:$0xf]
      %v330 = vld [vmem:[%s300 + $0x5c] sm:$0x1]
      %v331 = vld [vmem:[%s300 + $0x60] sm:$0xf]
      %v332 = vld [vmem:[%s300 + $0x64] sm:$0x1]
      %v333 = vld [vmem:[%s300 + $0x68] sm:$0xf]
      %v334 = vld [vmem:[%s300 + $0x6c] sm:$0x1]
      %v335 = vld [vmem:[%s300 + $0x70] sm:$0xf]
      %v336 = vld [vmem:[%s300 + $0x74] sm:$0x1]
      %v337 = vld [vmem:[%s300 + $0x78] sm:$0xf]
      %v338 = vld [vmem:[%s300 + $0x7c] sm:$0x1]
      %v339 = vld [vmem:[%s300 + $0x80] sm:$0xf]
      %v340 = vld [vmem:[%s300 + $0x84] sm:$0x1]
      %v341 = vld [vmem:[%s300 + $0x88] sm:$0xf]
      %v342 = vld [vmem:[%s300 + $0x8c] sm:$0x1]
      %v343 = vld [vmem:[%s300 + $0x90] sm:$0xf]
      %v344 = vld [vmem:[%s300 + $0x94] sm:$0x1]
      %v345 = vld [vmem:[%s300 + $0x98] sm:$0xf]
      %v346 = vld [vmem:[%s300 + $0x9c] sm:$0x1]
      %v347 = vld [vmem:[%s300 + $0xa0] sm:$0xf]
      %v348 = vld [vmem:[%s300 + $0xa4] sm:$0x1]
      %v349 = vld [vmem:[%s300 + $0xa8] sm:$0xf]
      %v350 = vld [vmem:[%s300 + $0xac] sm:$0x1]
      %v351 = vld [vmem:[%s300 + $0xb0] sm:$0xf]
      %v352 = vld [vmem:[%s300 + $0xb4] sm:$0x1]
      %v353 = vld [vmem:[%s300 + $0xb8] sm:$0xf]
      %v354 = vld [vmem:[%s300 + $0xbc] sm:$0x1]
      %v355 = vld [vmem:[%s300 + $0xc0] sm:$0xf]
      %v356 = vld [vmem:[%s300 + $0xc4] sm:$0x1]
      %v357 = vld [vmem:[%s300 + $0xc8] sm:$0xf]
      %v358 = vld [vmem:[%s300 + $0xcc] sm:$0x1]
      %v359 = vld [vmem:[%s300 + $0xd0] sm:$0xf]
      %v360 = vld [vmem:[%s300 + $0xd4] sm:$0x1]
      %v361 = vld [vmem:[%s300 + $0xd8] sm:$0xf]
      %v362 = vld [vmem:[%s300 + $0xdc] sm:$0x1]
      %v363 = vld [vmem:[%s300 + $0xe0] sm:$0xf]
      %v364 = vld [vmem:[%s300 + $0xe4] sm:$0x1]
      %v365 = vld [vmem:[%s300 + $0xe8] sm:$0xf]
      %v366 = vld [vmem:[%s300 + $0xec] sm:$0x1]
      %v367 = vld [vmem:[%s300 + $0xf0] sm:$0xf]
      %v368 = vld [vmem:[%s300 + $0xf4] sm:$0x1]
      %v369 = vld [vmem:[%s300 + $0xf8] sm:$0xf]
      %v370 = vld [vmem:[%s300 + $0xfc] sm:$0x1]
      %v371 = vld [vmem:[%s300 + $0x100] sm:$0xf]
      %v372 = vld [vmem:[%s300 + $0x104] sm:$0x1]
      %v373 = vld [vmem:[%s300 + $0x108] sm:$0xf]
      %v374 = vld [vmem:[%s300 + $0x10c] sm:$0x1]
      %v375 = vld [vmem:[%s300 + $0x110] sm:$0xf]
      %v376 = vld [vmem:[%s300 + $0x114] sm:$0x1]
      %v377 = vld [vmem:[%s300 + $0x118] sm:$0xf]
      %v378 = vld [vmem:[%s300 + $0x11c] sm:$0x1]
      %v379 = vunpack.c.l.bf16 %v307
      %v380 = vunpack.c.l.bf16 %v308
      %v381 = vunpack.c.l.bf16 %v309
      %v382 = vunpack.c.l.bf16 %v310
      %v383 = vunpack.c.l.bf16 %v311
      %v384 = vunpack.c.l.bf16 %v312
      %v385 = vunpack.c.l.bf16 %v313
      %v386 = vunpack.c.l.bf16 %v314
      %v387 = vunpack.c.l.bf16 %v315
      %v388 = vunpack.c.l.bf16 %v316
      %v389 = vunpack.c.l.bf16 %v317
      %v390 = vunpack.c.l.bf16 %v318
      %v391 = vunpack.c.l.bf16 %v319
      %v392 = vunpack.c.l.bf16 %v320
      %v393 = vunpack.c.l.bf16 %v321
      %v394 = vunpack.c.l.bf16 %v322
      %v395 = vunpack.c.l.bf16 %v323
      %v396 = vunpack.c.l.bf16 %v324
      %v397 = vunpack.c.l.bf16 %v325
      %v398 = vunpack.c.l.bf16 %v326
      %v399 = vunpack.c.l.bf16 %v327
      %v400 = vunpack.c.l.bf16 %v328
      %v401 = vunpack.c.l.bf16 %v329
      %v402 = vunpack.c.l.bf16 %v330
      %v403 = vunpack.c.l.bf16 %v331
      %v404 = vunpack.c.l.bf16 %v332
      %v405 = vunpack.c.l.bf16 %v333
      %v406 = vunpack.c.l.bf16 %v334
      %v407 = vunpack.c.l.bf16 %v335
      %v408 = vunpack.c.l.bf16 %v336
      %v409 = vunpack.c.l.bf16 %v337
      %v410 = vunpack.c.l.bf16 %v338
      %v411 = vunpack.c.l.bf16 %v339
      %v412 = vunpack.c.l.bf16 %v340
      %v413 = vunpack.c.l.bf16 %v341
      %v414 = vunpack.c.l.bf16 %v342
      %v415 = vunpack.c.l.bf16 %v343
      %v416 = vunpack.c.l.bf16 %v344
      %v417 = vunpack.c.l.bf16 %v345
      %v418 = vunpack.c.l.bf16 %v346
      %v419 = vunpack.c.l.bf16 %v347
      %v420 = vunpack.c.l.bf16 %v348
      %v421 = vunpack.c.l.bf16 %v349
      %v422 = vunpack.c.l.bf16 %v350
      %v423 = vunpack.c.l.bf16 %v351
      %v424 = vunpack.c.l.bf16 %v352
      %v425 = vunpack.c.l.bf16 %v353
      %v426 = vunpack.c.l.bf16 %v354
      %v427 = vunpack.c.l.bf16 %v355
      %v428 = vunpack.c.l.bf16 %v356
      %v429 = vunpack.c.l.bf16 %v357
      %v430 = vunpack.c.l.bf16 %v358
      %v431 = vunpack.c.l.bf16 %v359
      %v432 = vunpack.c.l.bf16 %v360
      %v433 = vunpack.c.l.bf16 %v361
      %v434 = vunpack.c.l.bf16 %v362
      %v435 = vunpack.c.l.bf16 %v363
      %v436 = vunpack.c.l.bf16 %v364
      %v437 = vunpack.c.l.bf16 %v365
      %v438 = vunpack.c.l.bf16 %v366
      %v439 = vunpack.c.l.bf16 %v367
      %v440 = vunpack.c.l.bf16 %v368
      %v441 = vunpack.c.l.bf16 %v369
      %v442 = vunpack.c.l.bf16 %v370
      %v443 = vunpack.c.l.bf16 %v371
      %v444 = vunpack.c.l.bf16 %v372
      %v445 = vunpack.c.l.bf16 %v373
      %v446 = vunpack.c.l.bf16 %v374
      %v447 = vunpack.c.l.bf16 %v375
      %v448 = vunpack.c.l.bf16 %v376
      %v449 = vunpack.c.l.bf16 %v377
      %v450 = vunpack.c.l.bf16 %v378
      %v451 = vld [vmem:[%s1] sm:$0x1]
      %v453 = vlaneseq
      %v454 = vshrl.u32 %v453, 7
      %v455 = vsub.s32 0, %v454
      %v456 = vrot.slane %v451, %v455
      %v458 = vmul.f32 %v379, %v456
      %v459 = vmul.f32 %v380, %v456
      %v460 = vmul.f32 %v381, %v456
      %v461 = vmul.f32 %v382, %v456
      %v462 = vmul.f32 %v383, %v456
      %v463 = vmul.f32 %v384, %v456
      %v464 = vmul.f32 %v385, %v456
      %v465 = vmul.f32 %v386, %v456
      %v466 = vmul.f32 %v387, %v456
      %v467 = vmul.f32 %v388, %v456
      %v468 = vmul.f32 %v389, %v456
      %v469 = vmul.f32 %v390, %v456
      %v470 = vmul.f32 %v391, %v456
      %v471 = vmul.f32 %v392, %v456
      %v472 = vmul.f32 %v393, %v456
      %v473 = vmul.f32 %v394, %v456
      %v474 = vmul.f32 %v395, %v456
      %v475 = vmul.f32 %v396, %v456
      %v476 = vmul.f32 %v397, %v456
      %v477 = vmul.f32 %v398, %v456
      %v478 = vmul.f32 %v399, %v456
      %v479 = vmul.f32 %v400, %v456
      %v480 = vmul.f32 %v401, %v456
      %v481 = vmul.f32 %v402, %v456
      %v482 = vmul.f32 %v403, %v456
      %v483 = vmul.f32 %v404, %v456
      %v484 = vmul.f32 %v405, %v456
      %v485 = vmul.f32 %v406, %v456
      %v486 = vmul.f32 %v407, %v456
      %v487 = vmul.f32 %v408, %v456
      %v488 = vmul.f32 %v409, %v456
      %v489 = vmul.f32 %v410, %v456
      %v490 = vmul.f32 %v411, %v456
      %v491 = vmul.f32 %v412, %v456
      %v492 = vmul.f32 %v413, %v456
      %v493 = vmul.f32 %v414, %v456
      %v494 = vmul.f32 %v415, %v456
      %v495 = vmul.f32 %v416, %v456
      %v496 = vmul.f32 %v417, %v456
      %v497 = vmul.f32 %v418, %v456
      %v498 = vmul.f32 %v419, %v456
      %v499 = vmul.f32 %v420, %v456
      %v500 = vmul.f32 %v421, %v456
      %v501 = vmul.f32 %v422, %v456
      %v502 = vmul.f32 %v423, %v456
      %v503 = vmul.f32 %v424, %v456
      %v504 = vmul.f32 %v425, %v456
      %v505 = vmul.f32 %v426, %v456
      %v506 = vmul.f32 %v427, %v456
      %v507 = vmul.f32 %v428, %v456
      %v508 = vmul.f32 %v429, %v456
      %v509 = vmul.f32 %v430, %v456
      %v510 = vmul.f32 %v431, %v456
      %v511 = vmul.f32 %v432, %v456
      %v512 = vmul.f32 %v433, %v456
      %v513 = vmul.f32 %v434, %v456
      %v514 = vmul.f32 %v435, %v456
      %v515 = vmul.f32 %v436, %v456
      %v516 = vmul.f32 %v437, %v456
      %v517 = vmul.f32 %v438, %v456
      %v518 = vmul.f32 %v439, %v456
      %v519 = vmul.f32 %v440, %v456
      %v520 = vmul.f32 %v441, %v456
      %v521 = vmul.f32 %v442, %v456
      %v522 = vmul.f32 %v443, %v456
      %v523 = vmul.f32 %v444, %v456
      %v524 = vmul.f32 %v445, %v456
      %v525 = vmul.f32 %v446, %v456
      %v526 = vmul.f32 %v447, %v456
      %v527 = vmul.f32 %v448, %v456
      %v528 = vmul.f32 %v449, %v456
      %v529 = vmul.f32 %v450, %v456
      %v530 = vld [vmem:[%s2] sm:$0x1]
      %v532 = vlaneseq
      %v533 = vshrl.u32 %v532, 7
      %v534 = vsub.s32 0, %v533
      %v535 = vrot.slane %v530, %v534
      %v537 = vadd.f32 %v458, %v535
      %v538 = vadd.f32 %v459, %v535
      %v539 = vadd.f32 %v460, %v535
      %v540 = vadd.f32 %v461, %v535
      %v541 = vadd.f32 %v462, %v535
      %v542 = vadd.f32 %v463, %v535
      %v543 = vadd.f32 %v464, %v535
      %v544 = vadd.f32 %v465, %v535
      %v545 = vadd.f32 %v466, %v535
      %v546 = vadd.f32 %v467, %v535
      %v547 = vadd.f32 %v468, %v535
      %v548 = vadd.f32 %v469, %v535
      %v549 = vadd.f32 %v470, %v535
      %v550 = vadd.f32 %v471, %v535
      %v551 = vadd.f32 %v472, %v535
      %v552 = vadd.f32 %v473, %v535
      %v553 = vadd.f32 %v474, %v535
      %v554 = vadd.f32 %v475, %v535
      %v555 = vadd.f32 %v476, %v535
      %v556 = vadd.f32 %v477, %v535
      %v557 = vadd.f32 %v478, %v535
      %v558 = vadd.f32 %v479, %v535
      %v559 = vadd.f32 %v480, %v535
      %v560 = vadd.f32 %v481, %v535
      %v561 = vadd.f32 %v482, %v535
      %v562 = vadd.f32 %v483, %v535
      %v563 = vadd.f32 %v484, %v535
      %v564 = vadd.f32 %v485, %v535
      %v565 = vadd.f32 %v486, %v535
      %v566 = vadd.f32 %v487, %v535
      %v567 = vadd.f32 %v488, %v535
      %v568 = vadd.f32 %v489, %v535
      %v569 = vadd.f32 %v490, %v535
      %v570 = vadd.f32 %v491, %v535
      %v571 = vadd.f32 %v492, %v535
      %v572 = vadd.f32 %v493, %v535
      %v573 = vadd.f32 %v494, %v535
      %v574 = vadd.f32 %v495, %v535
      %v575 = vadd.f32 %v496, %v535
      %v576 = vadd.f32 %v497, %v535
      %v577 = vadd.f32 %v498, %v535
      %v578 = vadd.f32 %v499, %v535
      %v579 = vadd.f32 %v500, %v535
      %v580 = vadd.f32 %v501, %v535
      %v581 = vadd.f32 %v502, %v535
      %v582 = vadd.f32 %v503, %v535
      %v583 = vadd.f32 %v504, %v535
      %v584 = vadd.f32 %v505, %v535
      %v585 = vadd.f32 %v506, %v535
      %v586 = vadd.f32 %v507, %v535
      %v587 = vadd.f32 %v508, %v535
      %v588 = vadd.f32 %v509, %v535
      %v589 = vadd.f32 %v510, %v535
      %v590 = vadd.f32 %v511, %v535
      %v591 = vadd.f32 %v512, %v535
      %v592 = vadd.f32 %v513, %v535
      %v593 = vadd.f32 %v514, %v535
      %v594 = vadd.f32 %v515, %v535
      %v595 = vadd.f32 %v516, %v535
      %v596 = vadd.f32 %v517, %v535
      %v597 = vadd.f32 %v518, %v535
      %v598 = vadd.f32 %v519, %v535
      %v599 = vadd.f32 %v520, %v535
      %v600 = vadd.f32 %v521, %v535
      %v601 = vadd.f32 %v522, %v535
      %v602 = vadd.f32 %v523, %v535
      %v603 = vadd.f32 %v524, %v535
      %v604 = vadd.f32 %v525, %v535
      %v605 = vadd.f32 %v526, %v535
      %v606 = vadd.f32 %v527, %v535
      %v607 = vadd.f32 %v528, %v535
      %v608 = vadd.f32 %v529, %v535
      %v609 = vmax.f32 %v537, 0.0
      %v610 = vmax.f32 %v538, 0.0
      %v611 = vmax.f32 %v539, 0.0
      %v612 = vmax.f32 %v540, 0.0
      %v613 = vmax.f32 %v541, 0.0
      %v614 = vmax.f32 %v542, 0.0
      %v615 = vmax.f32 %v543, 0.0
      %v616 = vmax.f32 %v544, 0.0
      %v617 = vmax.f32 %v545, 0.0
      %v618 = vmax.f32 %v546, 0.0
      %v619 = vmax.f32 %v547, 0.0
      %v620 = vmax.f32 %v548, 0.0
      %v621 = vmax.f32 %v549, 0.0
      %v622 = vmax.f32 %v550, 0.0
      %v623 = vmax.f32 %v551, 0.0
      %v624 = vmax.f32 %v552, 0.0
      %v625 = vmax.f32 %v553, 0.0
      %v626 = vmax.f32 %v554, 0.0
      %v627 = vmax.f32 %v555, 0.0
      %v628 = vmax.f32 %v556, 0.0
      %v629 = vmax.f32 %v557, 0.0
      %v630 = vmax.f32 %v558, 0.0
      %v631 = vmax.f32 %v559, 0.0
      %v632 = vmax.f32 %v560, 0.0
      %v633 = vmax.f32 %v561, 0.0
      %v634 = vmax.f32 %v562, 0.0
      %v635 = vmax.f32 %v563, 0.0
      %v636 = vmax.f32 %v564, 0.0
      %v637 = vmax.f32 %v565, 0.0
      %v638 = vmax.f32 %v566, 0.0
      %v639 = vmax.f32 %v567, 0.0
      %v640 = vmax.f32 %v568, 0.0
      %v641 = vmax.f32 %v569, 0.0
      %v642 = vmax.f32 %v570, 0.0
      %v643 = vmax.f32 %v571, 0.0
      %v644 = vmax.f32 %v572, 0.0
      %v645 = vmax.f32 %v573, 0.0
      %v646 = vmax.f32 %v574, 0.0
      %v647 = vmax.f32 %v575, 0.0
      %v648 = vmax.f32 %v576, 0.0
      %v649 = vmax.f32 %v577, 0.0
      %v650 = vmax.f32 %v578, 0.0
      %v651 = vmax.f32 %v579, 0.0
      %v652 = vmax.f32 %v580, 0.0
      %v653 = vmax.f32 %v581, 0.0
      %v654 = vmax.f32 %v582, 0.0
      %v655 = vmax.f32 %v583, 0.0
      %v656 = vmax.f32 %v584, 0.0
      %v657 = vmax.f32 %v585, 0.0
      %v658 = vmax.f32 %v586, 0.0
      %v659 = vmax.f32 %v587, 0.0
      %v660 = vmax.f32 %v588, 0.0
      %v661 = vmax.f32 %v589, 0.0
      %v662 = vmax.f32 %v590, 0.0
      %v663 = vmax.f32 %v591, 0.0
      %v664 = vmax.f32 %v592, 0.0
      %v665 = vmax.f32 %v593, 0.0
      %v666 = vmax.f32 %v594, 0.0
      %v667 = vmax.f32 %v595, 0.0
      %v668 = vmax.f32 %v596, 0.0
      %v669 = vmax.f32 %v597, 0.0
      %v670 = vmax.f32 %v598, 0.0
      %v671 = vmax.f32 %v599, 0.0
      %v672 = vmax.f32 %v600, 0.0
      %v673 = vmax.f32 %v601, 0.0
      %v674 = vmax.f32 %v602, 0.0
      %v675 = vmax.f32 %v603, 0.0
      %v676 = vmax.f32 %v604, 0.0
      %v677 = vmax.f32 %v605, 0.0
      %v678 = vmax.f32 %v606, 0.0
      %v679 = vmax.f32 %v607, 0.0
      %v680 = vmax.f32 %v608, 0.0
      %vm681 = vcmask 31744
      %682 = vst.msk [vmem:[#allocation2] sm:$0xff] %vm681, %v609
      %vm683 = vcmask 24576
      %684 = vst.msk [vmem:[#allocation2 + $0x8] sm:$0x1] %vm683, %v610
      %685 = vst.msk [vmem:[#allocation2 + $0x10] sm:$0xff] %vm681, %v611
      %686 = vst.msk [vmem:[#allocation2 + $0x18] sm:$0x1] %vm683, %v612
      %687 = vst.msk [vmem:[#allocation2 + $0x20] sm:$0xff] %vm681, %v613
      %688 = vst.msk [vmem:[#allocation2 + $0x28] sm:$0x1] %vm683, %v614
      %689 = vst.msk [vmem:[#allocation2 + $0x30] sm:$0xff] %vm681, %v615
      %690 = vst.msk [vmem:[#allocation2 + $0x38] sm:$0x1] %vm683, %v616
      %691 = vst.msk [vmem:[#allocation2 + $0x40] sm:$0xff] %vm681, %v617
      %692 = vst.msk [vmem:[#allocation2 + $0x48] sm:$0x1] %vm683, %v618
      %693 = vst.msk [vmem:[#allocation2 + $0x50] sm:$0xff] %vm681, %v619
      %694 = vst.msk [vmem:[#allocation2 + $0x58] sm:$0x1] %vm683, %v620
      %695 = vst.msk [vmem:[#allocation2 + $0x60] sm:$0xff] %vm681, %v621
      %696 = vst.msk [vmem:[#allocation2 + $0x68] sm:$0x1] %vm683, %v622
      %697 = vst.msk [vmem:[#allocation2 + $0x70] sm:$0xff] %vm681, %v623
      %698 = vst.msk [vmem:[#allocation2 + $0x78] sm:$0x1] %vm683, %v624
      %699 = vst.msk [vmem:[#allocation2 + $0x80] sm:$0xff] %vm681, %v625
      %700 = vst.msk [vmem:[#allocation2 + $0x88] sm:$0x1] %vm683, %v626
      %701 = vst.msk [vmem:[#allocation2 + $0x90] sm:$0xff] %vm681, %v627
      %702 = vst.msk [vmem:[#allocation2 + $0x98] sm:$0x1] %vm683, %v628
      %703 = vst.msk [vmem:[#allocation2 + $0xa0] sm:$0xff] %vm681, %v629
      %704 = vst.msk [vmem:[#allocation2 + $0xa8] sm:$0x1] %vm683, %v630
      %705 = vst.msk [vmem:[#allocation2 + $0xb0] sm:$0xff] %vm681, %v631
      %706 = vst.msk [vmem:[#allocation2 + $0xb8] sm:$0x1] %vm683, %v632
      %707 = vst.msk [vmem:[#allocation2 + $0xc0] sm:$0xff] %vm681, %v633
      %708 = vst.msk [vmem:[#allocation2 + $0xc8] sm:$0x1] %vm683, %v634
      %709 = vst.msk [vmem:[#allocation2 + $0xd0] sm:$0xff] %vm681, %v635
      %710 = vst.msk [vmem:[#allocation2 + $0xd8] sm:$0x1] %vm683, %v636
      %711 = vst.msk [vmem:[#allocation2 + $0xe0] sm:$0xff] %vm681, %v637
      %712 = vst.msk [vmem:[#allocation2 + $0xe8] sm:$0x1] %vm683, %v638
      %713 = vst.msk [vmem:[#allocation2 + $0xf0] sm:$0xff] %vm681, %v639
      %714 = vst.msk [vmem:[#allocation2 + $0xf8] sm:$0x1] %vm683, %v640
      %715 = vst.msk [vmem:[#allocation2 + $0x100] sm:$0xff] %vm681, %v641
      %716 = vst.msk [vmem:[#allocation2 + $0x108] sm:$0x1] %vm683, %v642
      %717 = vst.msk [vmem:[#allocation2 + $0x110] sm:$0xff] %vm681, %v643
      %718 = vst.msk [vmem:[#allocation2 + $0x118] sm:$0x1] %vm683, %v644
      %719 = vst.msk [vmem:[#allocation2 + $0x120] sm:$0xff] %vm681, %v645
      %720 = vst.msk [vmem:[#allocation2 + $0x128] sm:$0x1] %vm683, %v646
      %721 = vst.msk [vmem:[#allocation2 + $0x130] sm:$0xff] %vm681, %v647
      %722 = vst.msk [vmem:[#allocation2 + $0x138] sm:$0x1] %vm683, %v648
      %723 = vst.msk [vmem:[#allocation2 + $0x140] sm:$0xff] %vm681, %v649
      %724 = vst.msk [vmem:[#allocation2 + $0x148] sm:$0x1] %vm683, %v650
      %725 = vst.msk [vmem:[#allocation2 + $0x150] sm:$0xff] %vm681, %v651
      %726 = vst.msk [vmem:[#allocation2 + $0x158] sm:$0x1] %vm683, %v652
      %727 = vst.msk [vmem:[#allocation2 + $0x160] sm:$0xff] %vm681, %v653
      %728 = vst.msk [vmem:[#allocation2 + $0x168] sm:$0x1] %vm683, %v654
      %729 = vst.msk [vmem:[#allocation2 + $0x170] sm:$0xff] %vm681, %v655
      %730 = vst.msk [vmem:[#allocation2 + $0x178] sm:$0x1] %vm683, %v656
      %731 = vst.msk [vmem:[#allocation2 + $0x180] sm:$0xff] %vm681, %v657
      %732 = vst.msk [vmem:[#allocation2 + $0x188] sm:$0x1] %vm683, %v658
      %733 = vst.msk [vmem:[#allocation2 + $0x190] sm:$0xff] %vm681, %v659
      %734 = vst.msk [vmem:[#allocation2 + $0x198] sm:$0x1] %vm683, %v660
      %735 = vst.msk [vmem:[#allocation2 + $0x1a0] sm:$0xff] %vm681, %v661
      %736 = vst.msk [vmem:[#allocation2 + $0x1a8] sm:$0x1] %vm683, %v662
      %737 = vst.msk [vmem:[#allocation2 + $0x1b0] sm:$0xff] %vm681, %v663
      %738 = vst.msk [vmem:[#allocation2 + $0x1b8] sm:$0x1] %vm683, %v664
      %739 = vst.msk [vmem:[#allocation2 + $0x1c0] sm:$0xff] %vm681, %v665
      %740 = vst.msk [vmem:[#allocation2 + $0x1c8] sm:$0x1] %vm683, %v666
      %741 = vst.msk [vmem:[#allocation2 + $0x1d0] sm:$0xff] %vm681, %v667
      %742 = vst.msk [vmem:[#allocation2 + $0x1d8] sm:$0x1] %vm683, %v668
      %743 = vst.msk [vmem:[#allocation2 + $0x1e0] sm:$0xff] %vm681, %v669
      %744 = vst.msk [vmem:[#allocation2 + $0x1e8] sm:$0x1] %vm683, %v670
      %745 = vst.msk [vmem:[#allocation2 + $0x1f0] sm:$0xff] %vm681, %v671
      %746 = vst.msk [vmem:[#allocation2 + $0x1f8] sm:$0x1] %vm683, %v672
      %747 = vst.msk [vmem:[#allocation2 + $0x200] sm:$0xff] %vm681, %v673
      %748 = vst.msk [vmem:[#allocation2 + $0x208] sm:$0x1] %vm683, %v674
      %749 = vst.msk [vmem:[#allocation2 + $0x210] sm:$0xff] %vm681, %v675
      %750 = vst.msk [vmem:[#allocation2 + $0x218] sm:$0x1] %vm683, %v676
      %751 = vst.msk [vmem:[#allocation2 + $0x220] sm:$0xff] %vm681, %v677
      %752 = vst.msk [vmem:[#allocation2 + $0x228] sm:$0x1] %vm683, %v678
      %753 = vst.msk [vmem:[#allocation2 + $0x230] sm:$0xff] %vm681, %v679
      %754 = vst.msk [vmem:[#allocation2 + $0x238] sm:$0x1] %vm683, %v680
      %755 = vst.msk [vmem:[#allocation2] sm:$0xff] %vm681, 0.0
      %756 = vst.msk [vmem:[#allocation2 + $0x8] sm:$0x1] %vm683, 0.0
      %s757 = scalar_lea.vmem [#allocation2], 144
      %758 = vst.msk [vmem:[%s757] sm:$0xff] %vm681, 0.0
      %759 = vst.msk [vmem:[%s757 + $0x8] sm:$0x1] %vm683, 0.0
      %s760 = scalar_lea.vmem [#allocation2], 416
      %761 = vst.msk [vmem:[%s760] sm:$0xff] %vm681, 0.0
      %762 = vst.msk [vmem:[%s760 + $0x8] sm:$0x1] %vm683, 0.0
      %s763 = scalar_lea.vmem [#allocation2], 560
      %764 = vst.msk [vmem:[%s763] sm:$0xff] %vm681, 0.0
      %765 = vst.msk [vmem:[%s763 + $0x8] sm:$0x1] %vm683, 0.0
      %766 = vst.msk [vmem:[#allocation2] sm:$0x1] %vm683, 0.0
      %767 = vst.msk [vmem:[#allocation2 + $0x10] sm:$0x1] %vm683, 0.0
      %768 = vst.msk [vmem:[#allocation2 + $0x20] sm:$0x1] %vm683, 0.0
      %769 = vst.msk [vmem:[#allocation2 + $0x30] sm:$0x1] %vm683, 0.0
      %770 = vst.msk [vmem:[#allocation2 + $0x40] sm:$0x1] %vm683, 0.0
      %771 = vst.msk [vmem:[#allocation2 + $0x50] sm:$0x1] %vm683, 0.0
      %772 = vst.msk [vmem:[#allocation2 + $0x60] sm:$0x1] %vm683, 0.0
      %773 = vst.msk [vmem:[#allocation2 + $0x70] sm:$0x1] %vm683, 0.0
      %774 = vst.msk [vmem:[#allocation2 + $0x80] sm:$0x1] %vm683, 0.0
      %775 = vst.msk [vmem:[%s757 + $0x8] sm:$0x1] %vm683, 0.0
      %776 = vst.msk [vmem:[%s757 + $0x18] sm:$0x1] %vm683, 0.0
      %777 = vst.msk [vmem:[%s757 + $0x28] sm:$0x1] %vm683, 0.0
      %778 = vst.msk [vmem:[%s757 + $0x38] sm:$0x1] %vm683, 0.0
      %779 = vst.msk [vmem:[%s757 + $0x48] sm:$0x1] %vm683, 0.0
      %780 = vst.msk [vmem:[%s757 + $0x58] sm:$0x1] %vm683, 0.0
      %781 = vst.msk [vmem:[%s757 + $0x68] sm:$0x1] %vm683, 0.0
      %782 = vst.msk [vmem:[%s757 + $0x78] sm:$0x1] %vm683, 0.0
      %783 = vst.msk [vmem:[%s757 + $0x88] sm:$0x1] %vm683, 0.0
      %s784 = scalar_lea.vmem [#allocation2], 288
      %785 = vst.msk [vmem:[%s784] sm:$0x1] %vm683, 0.0
      %786 = vst.msk [vmem:[%s784 + $0x10] sm:$0x1] %vm683, 0.0
      %787 = vst.msk [vmem:[%s784 + $0x20] sm:$0x1] %vm683, 0.0
      %788 = vst.msk [vmem:[%s784 + $0x30] sm:$0x1] %vm683, 0.0
      %789 = vst.msk [vmem:[%s784 + $0x40] sm:$0x1] %vm683, 0.0
      %790 = vst.msk [vmem:[%s784 + $0x50] sm:$0x1] %vm683, 0.0
      %791 = vst.msk [vmem:[%s784 + $0x60] sm:$0x1] %vm683, 0.0
      %792 = vst.msk [vmem:[%s784 + $0x70] sm:$0x1] %vm683, 0.0
      %793 = vst.msk [vmem:[%s784 + $0x80] sm:$0x1] %vm683, 0.0
      %s794 = scalar_lea.vmem [#allocation2], 432
      %795 = vst.msk [vmem:[%s794 + $0x8] sm:$0x1] %vm683, 0.0
      %796 = vst.msk [vmem:[%s794 + $0x18] sm:$0x1] %vm683, 0.0
      %797 = vst.msk [vmem:[%s794 + $0x28] sm:$0x1] %vm683, 0.0
      %798 = vst.msk [vmem:[%s794 + $0x38] sm:$0x1] %vm683, 0.0
      %799 = vst.msk [vmem:[%s794 + $0x48] sm:$0x1] %vm683, 0.0
      %800 = vst.msk [vmem:[%s794 + $0x58] sm:$0x1] %vm683, 0.0
      %801 = vst.msk [vmem:[%s794 + $0x68] sm:$0x1] %vm683, 0.0
      %802 = vst.msk [vmem:[%s794 + $0x78] sm:$0x1] %vm683, 0.0
      %803 = vst.msk [vmem:[%s794 + $0x88] sm:$0x1] %vm683, 0.0
      %v804 = vld [vmem:[#allocation2] sm:$0xff]
      %v805 = vld [vmem:[#allocation2 + $0x10] sm:$0xff]
      %v806 = vld [vmem:[#allocation2 + $0x20] sm:$0xff]
      %v807 = vld [vmem:[#allocation2 + $0x30] sm:$0xff]
      %v808 = vld [vmem:[#allocation2 + $0x40] sm:$0xff]
      %v809 = vld [vmem:[#allocation2 + $0x50] sm:$0xff]
      %v810 = vld [vmem:[#allocation2 + $0x60] sm:$0xff]
      %v811 = vld [vmem:[#allocation2 + $0x70] sm:$0xff]
      %v812 = vpack.c.bf16 %v805, %v804
      %v813 = vpack.c.bf16 %v807, %v806
      %v814 = vpack.c.bf16 %v809, %v808
      %v815 = vpack.c.bf16 %v811, %v810
      %v816 = vld [vmem:[%s3] sm:$0x3]
      %v817 = vld [vmem:[%s757] sm:$0xff]
      %v818 = vld [vmem:[%s757 + $0x10] sm:$0xff]
      %v819 = vld [vmem:[%s757 + $0x20] sm:$0xff]
      %v820 = vld [vmem:[%s757 + $0x30] sm:$0xff]
      %v821 = vld [vmem:[%s757 + $0x40] sm:$0xff]
      %v822 = vld [vmem:[%s757 + $0x50] sm:$0xff]
      %v823 = vld [vmem:[%s757 + $0x60] sm:$0xff]
      %v824 = vld [vmem:[%s757 + $0x70] sm:$0xff]
      %v825 = vpack.c.bf16 %v818, %v817
      %v826 = vpack.c.bf16 %v820, %v819
      %v827 = vpack.c.bf16 %v822, %v821
      %v828 = vpack.c.bf16 %v824, %v823
      %v829 = vld [vmem:[%s3] sm:$0xc]
      %v831 = vunpack.c.l.b16 %v829
      %v832 = vpack.c.b16 %v831, %v831
      %v833 = vrot.slane %v832, 2
      %v835 = vsel %vm681, %v825, 0
      %v838 = vsel %vm681, %v826, 0
      %v841 = vsel %vm681, %v827, 0
      %v844 = vsel %vm681, %v828, 0
      %vm846 = vcmask 1041408
      %v848 = vsel %vm846, %v833, 0
      %850 = vmatprep.subr.bf16.mxu0 0
      %851 = vmatpush1.bf16.msra.mxu0 %v848
      %852 = vmatprep.subr.bf16.mxu0 0
      %853 = vmatpush1.bf16.msra.mxu0 0
      %854 = vmatprep.subr.bf16.mxu0 0
      %855 = vmatpush1.bf16.msra.mxu0 0
      %856 = vmatprep.subr.bf16.mxu0 0
      %857 = vmatpush1.bf16.msra.mxu0 0
      %858 = vmatprep.subr.bf16.mxu0 0
      %859 = vmatpush1.bf16.msra.mxu0 0
      %860 = vmatprep.subr.bf16.mxu0 0
      %861 = vmatpush1.bf16.msra.mxu0 0
      %862 = vmatprep.subr.bf16.mxu0 0
      %863 = vmatpush1.bf16.msra.mxu0 0
      %864 = vmatprep.subr.bf16.mxu0 0
      %865 = vmatpush1.bf16.msra.mxu0 0
      %866 = vmatprep.subr.bf16.mxu0 0
      %867 = vmatpush1.bf16.msra.mxu0 0
      %868 = vmatprep.subr.bf16.mxu0 0
      %869 = vmatpush1.bf16.msra.mxu0 0
      %870 = vmatprep.subr.bf16.mxu0 0
      %871 = vmatpush1.bf16.msra.mxu0 0
      %872 = vmatprep.subr.bf16.mxu0 0
      %873 = vmatpush1.bf16.msra.mxu0 0
      %874 = vmatprep.subr.bf16.mxu0 0
      %875 = vmatpush1.bf16.msra.mxu0 0
      %876 = vmatprep.subr.bf16.mxu0 0
      %877 = vmatpush1.bf16.msra.mxu0 0
      %878 = vmatprep.subr.bf16.mxu0 0
      %879 = vmatpush1.bf16.msra.mxu0 0
      %880 = vmatprep.subr.bf16.mxu0 0
      %881 = vmatpush1.bf16.msra.mxu0 0
      %882 = vmatprep.mubr.bf16.mxu0 0
      %883 = vmatmul.mubr.bf16.gmra.mrb[0].mxu0 %v835
      %v884 = vpop.f32.mrb[0].mxu0
      %v885 = vadd.f32 0.0, %v884
      %v886 = vpop.f32.mrb[0].mxu0
      %v887 = vpop.f32.mrb[0].mxu0
      %v888 = vadd.f32 0.0, %v887
      %v889 = vpop.f32.mrb[0].mxu0
      %890 = vmatprep.mubr.bf16.mxu0 0
      %891 = vmatmul.mubr.bf16.gmra.mrb[0].mxu0 %v838
      %v892 = vpop.f32.mrb[0].mxu0
      %v893 = vadd.f32 0.0, %v892
      %v894 = vpop.f32.mrb[0].mxu0
      %v895 = vpop.f32.mrb[0].mxu0
      %v896 = vadd.f32 0.0, %v895
      %v897 = vpop.f32.mrb[0].mxu0
      %898 = vmatprep.mubr.bf16.mxu0 0
      %899 = vmatmul.mubr.bf16.gmra.mrb[0].mxu0 %v841
      %v900 = vpop.f32.mrb[0].mxu0
      %v901 = vadd.f32 0.0, %v900
      %v902 = vpop.f32.mrb[0].mxu0
      %v903 = vpop.f32.mrb[0].mxu0
      %v904 = vadd.f32 0.0, %v903
      %v905 = vpop.f32.mrb[0].mxu0
      %906 = vmatprep.mubr.bf16.mxu0 0
      %907 = vmatmul.mubr.bf16.gmra.mrb[0].mxu0 %v844
      %v908 = vpop.f32.mrb[0].mxu0
      %v909 = vadd.f32 0.0, %v908
      %v910 = vpop.f32.mrb[0].mxu0
      %v911 = vpop.f32.mrb[0].mxu0
      %v912 = vadd.f32 0.0, %v911
      %v913 = vpop.f32.mrb[0].mxu0
      %914 = vdwg.mxu0
      %v916 = vsel %vm681, %v812, 0
      %v919 = vsel %vm681, %v813, 0
      %v922 = vsel %vm681, %v814, 0
      %v925 = vsel %vm681, %v815, 0
      %v928 = vsel %vm846, %v816, 0
      %930 = vmatprep.subr.bf16.mxu0 0
      %931 = vmatpush1.bf16.msra.mxu0 %v928
      %932 = vmatprep.subr.bf16.mxu0 0
      %933 = vmatpush1.bf16.msra.mxu0 0
      %934 = vmatprep.subr.bf16.mxu0 0
      %935 = vmatpush1.bf16.msra.mxu0 0
      %936 = vmatprep.subr.bf16.mxu0 0
      %937 = vmatpush1.bf16.msra.mxu0 0
      %938 = vmatprep.subr.bf16.mxu0 0
      %939 = vmatpush1.bf16.msra.mxu0 0
      %940 = vmatprep.subr.bf16.mxu0 0
      %941 = vmatpush1.bf16.msra.mxu0 0
      %942 = vmatprep.subr.bf16.mxu0 0
      %943 = vmatpush1.bf16.msra.mxu0 0
      %944 = vmatprep.subr.bf16.mxu0 0
      %945 = vmatpush1.bf16.msra.mxu0 0
      %946 = vmatprep.subr.bf16.mxu0 0
      %947 = vmatpush1.bf16.msra.mxu0 0
      %948 = vmatprep.subr.bf16.mxu0 0
      %949 = vmatpush1.bf16.msra.mxu0 0
      %950 = vmatprep.subr.bf16.mxu0 0
      %951 = vmatpush1.bf16.msra.mxu0 0
      %952 = vmatprep.subr.bf16.mxu0 0
      %953 = vmatpush1.bf16.msra.mxu0 0
      %954 = vmatprep.subr.bf16.mxu0 0
      %955 = vmatpush1.bf16.msra.mxu0 0
      %956 = vmatprep.subr.bf16.mxu0 0
      %957 = vmatpush1.bf16.msra.mxu0 0
      %958 = vmatprep.subr.bf16.mxu0 0
      %959 = vmatpush1.bf16.msra.mxu0 0
      %960 = vmatprep.subr.bf16.mxu0 0
      %961 = vmatpush1.bf16.msra.mxu0 0
      %962 = vmatprep.mubr.bf16.mxu0 0
      %963 = vmatmul.mubr.bf16.gmra.mrb[0].mxu0 %v916
      %v964 = vpop.f32.mrb[0].mxu0
      %v965 = vadd.f32 %v885, %v964
      %v966 = vpop.f32.mrb[0].mxu0
      %v967 = vpop.f32.mrb[0].mxu0
      %v968 = vadd.f32 %v888, %v967
      %v969 = vpop.f32.mrb[0].mxu0
      %970 = vmatprep.mubr.bf16.mxu0 0
      %971 = vmatmul.mubr.bf16.gmra.mrb[0].mxu0 %v919
      %v972 = vpop.f32.mrb[0].mxu0
      %v973 = vadd.f32 %v893, %v972
      %v974 = vpop.f32.mrb[0].mxu0
      %v975 = vpop.f32.mrb[0].mxu0
      %v976 = vadd.f32 %v896, %v975
      %v977 = vpop.f32.mrb[0].mxu0
      %978 = vmatprep.mubr.bf16.mxu0 0
      %979 = vmatmul.mubr.bf16.gmra.mrb[0].mxu0 %v922
      %v980 = vpop.f32.mrb[0].mxu0
      %v981 = vadd.f32 %v901, %v980
      %v982 = vpop.f32.mrb[0].mxu0
      %v983 = vpop.f32.mrb[0].mxu0
      %v984 = vadd.f32 %v904, %v983
      %v985 = vpop.f32.mrb[0].mxu0
      %986 = vmatprep.mubr.bf16.mxu0 0
      %987 = vmatmul.mubr.bf16.gmra.mrb[0].mxu0 %v925
      %v988 = vpop.f32.mrb[0].mxu0
      %v989 = vadd.f32 %v909, %v988
      %v990 = vpop.f32.mrb[0].mxu0
      %v991 = vpop.f32.mrb[0].mxu0
      %v992 = vadd.f32 %v912, %v991
      %v993 = vpop.f32.mrb[0].mxu0
      %994 = vdwg.mxu0
      %v995 = vld [vmem:[#allocation2 + $0x1] sm:$0xff]
      %v996 = vld [vmem:[#allocation2 + $0x11] sm:$0xff]
      %v997 = vld [vmem:[#allocation2 + $0x21] sm:$0xff]
      %v998 = vld [vmem:[#allocation2 + $0x31] sm:$0xff]
      %v999 = vld [vmem:[#allocation2 + $0x41] sm:$0xff]
      %v1000 = vld [vmem:[#allocation2 + $0x51] sm:$0xff]
      %v1001 = vld [vmem:[#allocation2 + $0x61] sm:$0xff]
      %v1002 = vld [vmem:[#allocation2 + $0x71] sm:$0xff]
      %v1003 = vpack.c.bf16 %v996, %v995
      %v1004 = vpack.c.bf16 %v998, %v997
      %v1005 = vpack.c.bf16 %v1000, %v999
      %v1006 = vpack.c.bf16 %v1002, %v1001
      %v1007 = vld [vmem:[%s3 + $0x4] sm:$0x3]
      %v1009 = vsel %vm681, %v1003, 0
      %v1012 = vsel %vm681, %v1004, 0
      %v1015 = vsel %vm681, %v1005, 0
      %v1018 = vsel %vm681, %v1006, 0
      %v1021 = vsel %vm846, %v1007, 0
      %1023 = vmatprep.subr.bf16.mxu0 0
      %1024 = vmatpush1.bf16.msra.mxu0 %v1021
      %1025 = vmatprep.subr.bf16.mxu0 0
      %1026 = vmatpush1.bf16.msra.mxu0 0
      %1027 = vmatprep.subr.bf16.mxu0 0
      %1028 = vmatpush1.bf16.msra.mxu0 0
      %1029 = vmatprep.subr.bf16.mxu0 0
      %1030 = vmatpush1.bf16.msra.mxu0 0
      %1031 = vmatprep.subr.bf16.mxu0 0
      %1032 = vmatpush1.bf16.msra.mxu0 0
      %1033 = vmatprep.subr.bf16.mxu0 0
      %1034 = vmatpush1.bf16.msra.mxu0 0
      %1035 = vmatprep.subr.bf16.mxu0 0
      %1036 = vmatpush1.bf16.msra.mxu0 0
      %1037 = vmatprep.subr.bf16.mxu0 0
      %1038 = vmatpush1.bf16.msra.mxu0 0
      %1039 = vmatprep.subr.bf16.mxu0 0
      %1040 = vmatpush1.bf16.msra.mxu0 0
      %1041 = vmatprep.subr.bf16.mxu0 0
      %1042 = vmatpush1.bf16.msra.mxu0 0
      %1043 = vmatprep.subr.bf16.mxu0 0
      %1044 = vmatpush1.bf16.msra.mxu0 0
      %1045 = vmatprep.subr.bf16.mxu0 0
      %1046 = vmatpush1.bf16.msra.mxu0 0
      %1047 = vmatprep.subr.bf16.mxu0 0
      %1048 = vmatpush1.bf16.msra.mxu0 0
      %1049 = vmatprep.subr.bf16.mxu0 0
      %1050 = vmatpush1.bf16.msra.mxu0 0
      %1051 = vmatprep.subr.bf16.mxu0 0
      %1052 = vmatpush1.bf16.msra.mxu0 0
      %1053 = vmatprep.subr.bf16.mxu0 0
      %1054 = vmatpush1.bf16.msra.mxu0 0
      %1055 = vmatprep.mubr.bf16.mxu0 0
      %1056 = vmatmul.mubr.bf16.gmra.mrb[0].mxu0 %v1009
      %v1057 = vpop.f32.mrb[0].mxu0
      %v1058 = vadd.f32 0.0, %v1057
      %v1059 = vpop.f32.mrb[0].mxu0
      %v1060 = vpop.f32.mrb[0].mxu0
      %v1061 = vadd.f32 0.0, %v1060
      %v1062 = vpop.f32.mrb[0].mxu0
      %1063 = vmatprep.mubr.bf16.mxu0 0
      %1064 = vmatmul.mubr.bf16.gmra.mrb[0].mxu0 %v1012
      %v1065 = vpop.f32.mrb[0].mxu0
      %v1066 = vadd.f32 0.0, %v1065
      %v1067 = vpop.f32.mrb[0].mxu0
      %v1068 = vpop.f32.mrb[0].mxu0
      %v1069 = vadd.f32 0.0, %v1068
      %v1070 = vpop.f32.mrb[0].mxu0
      %1071 = vmatprep.mubr.bf16.mxu0 0
      %1072 = vmatmul.mubr.bf16.gmra.mrb[0].mxu0 %v1015
      %v1073 = vpop.f32.mrb[0].mxu0
      %v1074 = vadd.f32 0.0, %v1073
      %v1075 = vpop.f32.mrb[0].mxu0
      %v1076 = vpop.f32.mrb[0].mxu0
      %v1077 = vadd.f32 0.0, %v1076
      %v1078 = vpop.f32.mrb[0].mxu0
      %1079 = vmatprep.mubr.bf16.mxu0 0
      %1080 = vmatmul.mubr.bf16.gmra.mrb[0].mxu0 %v1018
      %v1081 = vpop.f32.mrb[0].mxu0
      %v1082 = vadd.f32 0.0, %v1081
      %v1083 = vpop.f32.mrb[0].mxu0
      %v1084 = vpop.f32.mrb[0].mxu0
      %v1085 = vadd.f32 0.0, %v1084
      %v1086 = vpop.f32.mrb[0].mxu0
      %1087 = vdwg.mxu0
      %v1088 = vadd.f32 %v965, %v1058
      %v1089 = vadd.f32 %v968, %v1061
      %v1090 = vadd.f32 %v973, %v1066
      %v1091 = vadd.f32 %v976, %v1069
      %v1092 = vadd.f32 %v981, %v1074
      %v1093 = vadd.f32 %v984, %v1077
      %v1094 = vadd.f32 %v989, %v1082
      %v1095 = vadd.f32 %v992, %v1085
      %v1096 = vld [vmem:[%s784] sm:$0xff]
      %v1097 = vld [vmem:[%s784 + $0x10] sm:$0xff]
      %v1098 = vld [vmem:[%s784 + $0x20] sm:$0xff]
      %v1099 = vld [vmem:[%s784 + $0x30] sm:$0xff]
      %v1100 = vld [vmem:[%s784 + $0x40] sm:$0xff]
      %v1101 = vld [vmem:[%s784 + $0x50] sm:$0xff]
      %v1102 = vld [vmem:[%s784 + $0x60] sm:$0xff]
      %v1103 = vld [vmem:[%s784 + $0x70] sm:$0xff]
      %v1104 = vpack.c.bf16 %v1097, %v1096
      %v1105 = vpack.c.bf16 %v1099, %v1098
      %v1106 = vpack.c.bf16 %v1101, %v1100
      %v1107 = vpack.c.bf16 %v1103, %v1102
      %v1108 = vld [vmem:[%s3 + $0x4] sm:$0xc]
      %v1110 = vunpack.c.l.b16 %v1108
      %v1111 = vpack.c.b16 %v1110, %v1110
      %v1112 = vrot.slane %v1111, 2
      %v1114 = vsel %vm681, %v1104, 0
      %v1117 = vsel %vm681, %v1105, 0
      %v1120 = vsel %vm681, %v1106, 0
      %v1123 = vsel %vm681, %v1107, 0
      %v1126 = vsel %vm846, %v1112, 0
      %1128 = vmatprep.subr.bf16.mxu0 0
      %1129 = vmatpush1.bf16.msra.mxu0 %v1126
      %1130 = vmatprep.subr.bf16.mxu0 0
      %1131 = vmatpush1.bf16.msra.mxu0 0
      %1132 = vmatprep.subr.bf16.mxu0 0
      %1133 = vmatpush1.bf16.msra.mxu0 0
      %1134 = vmatprep.subr.bf16.mxu0 0
      %1135 = vmatpush1.bf16.msra.mxu0 0
      %1136 = vmatprep.subr.bf16.mxu0 0
      %1137 = vmatpush1.bf16.msra.mxu0 0
      %1138 = vmatprep.subr.bf16.mxu0 0
      %1139 = vmatpush1.bf16.msra.mxu0 0
      %1140 = vmatprep.subr.bf16.mxu0 0
      %1141 = vmatpush1.bf16.msra.mxu0 0
      %1142 = vmatprep.subr.bf16.mxu0 0
      %1143 = vmatpush1.bf16.msra.mxu0 0
      %1144 = vmatprep.subr.bf16.mxu0 0
      %1145 = vmatpush1.bf16.msra.mxu0 0
      %1146 = vmatprep.subr.bf16.mxu0 0
      %1147 = vmatpush1.bf16.msra.mxu0 0
      %1148 = vmatprep.subr.bf16.mxu0 0
      %1149 = vmatpush1.bf16.msra.mxu0 0
      %1150 = vmatprep.subr.bf16.mxu0 0
      %1151 = vmatpush1.bf16.msra.mxu0 0
      %1152 = vmatprep.subr.bf16.mxu0 0
      %1153 = vmatpush1.bf16.msra.mxu0 0
      %1154 = vmatprep.subr.bf16.mxu0 0
      %1155 = vmatpush1.bf16.msra.mxu0 0
      %1156 = vmatprep.subr.bf16.mxu0 0
      %1157 = vmatpush1.bf16.msra.mxu0 0
      %1158 = vmatprep.subr.bf16.mxu0 0
      %1159 = vmatpush1.bf16.msra.mxu0 0
      %1160 = vmatprep.mubr.bf16.mxu0 0
      %1161 = vmatmul.mubr.bf16.gmra.mrb[0].mxu0 %v1114
      %v1162 = vpop.f32.mrb[0].mxu0
      %v1163 = vadd.f32 0.0, %v1162
      %v1164 = vpop.f32.mrb[0].mxu0
      %v1165 = vpop.f32.mrb[0].mxu0
      %v1166 = vadd.f32 0.0, %v1165
      %v1167 = vpop.f32.mrb[0].mxu0
      %1168 = vmatprep.mubr.bf16.mxu0 0
      %1169 = vmatmul.mubr.bf16.gmra.mrb[0].mxu0 %v1117
      %v1170 = vpop.f32.mrb[0].mxu0
      %v1171 = vadd.f32 0.0, %v1170
      %v1172 = vpop.f32.mrb[0].mxu0
      %v1173 = vpop.f32.mrb[0].mxu0
      %v1174 = vadd.f32 0.0, %v1173
      %v1175 = vpop.f32.mrb[0].mxu0
      %1176 = vmatprep.mubr.bf16.mxu0 0
      %1177 = vmatmul.mubr.bf16.gmra.mrb[0].mxu0 %v1120
      %v1178 = vpop.f32.mrb[0].mxu0
      %v1179 = vadd.f32 0.0, %v1178
      %v1180 = vpop.f32.mrb[0].mxu0
      %v1181 = vpop.f32.mrb[0].mxu0
      %v1182 = vadd.f32 0.0, %v1181
      %v1183 = vpop.f32.mrb[0].mxu0
      %1184 = vmatprep.mubr.bf16.mxu0 0
      %1185 = vmatmul.mubr.bf16.gmra.mrb[0].mxu0 %v1123
      %v1186 = vpop.f32.mrb[0].mxu0
      %v1187 = vadd.f32 0.0, %v1186
      %v1188 = vpop.f32.mrb[0].mxu0
      %v1189 = vpop.f32.mrb[0].mxu0
      %v1190 = vadd.f32 0.0, %v1189
      %v1191 = vpop.f32.mrb[0].mxu0
      %1192 = vdwg.mxu0
      %v1193 = vadd.f32 %v1088, %v1163
      %v1194 = vadd.f32 %v1089, %v1166
      %v1195 = vadd.f32 %v1090, %v1171
      %v1196 = vadd.f32 %v1091, %v1174
      %v1197 = vadd.f32 %v1092, %v1179
      %v1198 = vadd.f32 %v1093, %v1182
      %v1199 = vadd.f32 %v1094, %v1187
      %v1200 = vadd.f32 %v1095, %v1190
      %v1201 = vld [vmem:[%s794] sm:$0xff]
      %v1202 = vld [vmem:[%s794 + $0x10] sm:$0xff]
      %v1203 = vld [vmem:[%s794 + $0x20] sm:$0xff]
      %v1204 = vld [vmem:[%s794 + $0x30] sm:$0xff]
      %v1205 = vld [vmem:[%s794 + $0x40] sm:$0xff]
      %v1206 = vld [vmem:[%s794 + $0x50] sm:$0xff]
      %v1207 = vld [vmem:[%s794 + $0x60] sm:$0xff]
      %v1208 = vld [vmem:[%s794 + $0x70] sm:$0xff]
      %v1209 = vpack.c.bf16 %v1202, %v1201
      %v1210 = vpack.c.bf16 %v1204, %v1203
      %v1211 = vpack.c.bf16 %v1206, %v1205
      %v1212 = vpack.c.bf16 %v1208, %v1207
      %v1213 = vld [vmem:[%s3 + $0x8] sm:$0x3]
      %v1215 = vsel %vm681, %v1209, 0
      %v1218 = vsel %vm681, %v1210, 0
      %v1221 = vsel %vm681, %v1211, 0
      %v1224 = vsel %vm681, %v1212, 0
      %v1227 = vsel %vm846, %v1213, 0
      %1229 = vmatprep.subr.bf16.mxu0 0
      %1230 = vmatpush1.bf16.msra.mxu0 %v1227
      %1231 = vmatprep.subr.bf16.mxu0 0
      %1232 = vmatpush1.bf16.msra.mxu0 0
      %1233 = vmatprep.subr.bf16.mxu0 0
      %1234 = vmatpush1.bf16.msra.mxu0 0
      %1235 = vmatprep.subr.bf16.mxu0 0
      %1236 = vmatpush1.bf16.msra.mxu0 0
      %1237 = vmatprep.subr.bf16.mxu0 0
      %1238 = vmatpush1.bf16.msra.mxu0 0
      %1239 = vmatprep.subr.bf16.mxu0 0
      %1240 = vmatpush1.bf16.msra.mxu0 0
      %1241 = vmatprep.subr.bf16.mxu0 0
      %1242 = vmatpush1.bf16.msra.mxu0 0
      %1243 = vmatprep.subr.bf16.mxu0 0
      %1244 = vmatpush1.bf16.msra.mxu0 0
      %1245 = vmatprep.subr.bf16.mxu0 0
      %1246 = vmatpush1.bf16.msra.mxu0 0
      %1247 = vmatprep.subr.bf16.mxu0 0
      %1248 = vmatpush1.bf16.msra.mxu0 0
      %1249 = vmatprep.subr.bf16.mxu0 0
      %1250 = vmatpush1.bf16.msra.mxu0 0
      %1251 = vmatprep.subr.bf16.mxu0 0
      %1252 = vmatpush1.bf16.msra.mxu0 0
      %1253 = vmatprep.subr.bf16.mxu0 0
      %1254 = vmatpush1.bf16.msra.mxu0 0
      %1255 = vmatprep.subr.bf16.mxu0 0
      %1256 = vmatpush1.bf16.msra.mxu0 0
      %1257 = vmatprep.subr.bf16.mxu0 0
      %1258 = vmatpush1.bf16.msra.mxu0 0
      %1259 = vmatprep.subr.bf16.mxu0 0
      %1260 = vmatpush1.bf16.msra.mxu0 0
      %1261 = vmatprep.mubr.bf16.mxu0 0
      %1262 = vmatmul.mubr.bf16.gmra.mrb[0].mxu0 %v1215
      %v1263 = vpop.f32.mrb[0].mxu0
      %v1264 = vadd.f32 0.0, %v1263
      %v1265 = vpop.f32.mrb[0].mxu0
      %v1266 = vpop.f32.mrb[0].mxu0
      %v1267 = vadd.f32 0.0, %v1266
      %v1268 = vpop.f32.mrb[0].mxu0
      %1269 = vmatprep.mubr.bf16.mxu0 0
      %1270 = vmatmul.mubr.bf16.gmra.mrb[0].mxu0 %v1218
      %v1271 = vpop.f32.mrb[0].mxu0
      %v1272 = vadd.f32 0.0, %v1271
      %v1273 = vpop.f32.mrb[0].mxu0
      %v1274 = vpop.f32.mrb[0].mxu0
      %v1275 = vadd.f32 0.0, %v1274
      %v1276 = vpop.f32.mrb[0].mxu0
      %1277 = vmatprep.mubr.bf16.mxu0 0
      %1278 = vmatmul.mubr.bf16.gmra.mrb[0].mxu0 %v1221
      %v1279 = vpop.f32.mrb[0].mxu0
      %v1280 = vadd.f32 0.0, %v1279
      %v1281 = vpop.f32.mrb[0].mxu0
      %v1282 = vpop.f32.mrb[0].mxu0
      %v1283 = vadd.f32 0.0, %v1282
      %v1284 = vpop.f32.mrb[0].mxu0
      %1285 = vmatprep.mubr.bf16.mxu0 0
      %1286 = vmatmul.mubr.bf16.gmra.mrb[0].mxu0 %v1224
      %v1287 = vpop.f32.mrb[0].mxu0
      %v1288 = vadd.f32 0.0, %v1287
      %v1289 = vpop.f32.mrb[0].mxu0
      %v1290 = vpop.f32.mrb[0].mxu0
      %v1291 = vadd.f32 0.0, %v1290
      %v1292 = vpop.f32.mrb[0].mxu0
      %1293 = vdwg.mxu0
      %v1294 = vadd.f32 %v1193, %v1264
      %v1295 = vadd.f32 %v1194, %v1267
      %v1296 = vadd.f32 %v1195, %v1272
      %v1297 = vadd.f32 %v1196, %v1275
      %v1298 = vadd.f32 %v1197, %v1280
      %v1299 = vadd.f32 %v1198, %v1283
      %v1300 = vadd.f32 %v1199, %v1288
      %v1301 = vadd.f32 %v1200, %v1291
      %v1302 = vld [vmem:[%s784 + $0x1] sm:$0xff]
      %v1303 = vld [vmem:[%s784 + $0x11] sm:$0xff]
      %v1304 = vld [vmem:[%s784 + $0x21] sm:$0xff]
      %v1305 = vld [vmem:[%s784 + $0x31] sm:$0xff]
      %v1306 = vld [vmem:[%s784 + $0x41] sm:$0xff]
      %v1307 = vld [vmem:[%s784 + $0x51] sm:$0xff]
      %v1308 = vld [vmem:[%s784 + $0x61] sm:$0xff]
      %v1309 = vld [vmem:[%s784 + $0x71] sm:$0xff]
      %v1310 = vpack.c.bf16 %v1303, %v1302
      %v1311 = vpack.c.bf16 %v1305, %v1304
      %v1312 = vpack.c.bf16 %v1307, %v1306
      %v1313 = vpack.c.bf16 %v1309, %v1308
      %v1314 = vld [vmem:[%s3 + $0x8] sm:$0xc]
      %v1316 = vunpack.c.l.b16 %v1314
      %v1317 = vpack.c.b16 %v1316, %v1316
      %v1318 = vrot.slane %v1317, 2
      %v1320 = vsel %vm681, %v1310, 0
      %v1323 = vsel %vm681, %v1311, 0
      %v1326 = vsel %vm681, %v1312, 0
      %v1329 = vsel %vm681, %v1313, 0
      %v1332 = vsel %vm846, %v1318, 0
      %1334 = vmatprep.subr.bf16.mxu0 0
      %1335 = vmatpush1.bf16.msra.mxu0 %v1332
      %1336 = vmatprep.subr.bf16.mxu0 0
      %1337 = vmatpush1.bf16.msra.mxu0 0
      %1338 = vmatprep.subr.bf16.mxu0 0
      %1339 = vmatpush1.bf16.msra.mxu0 0
      %1340 = vmatprep.subr.bf16.mxu0 0
      %1341 = vmatpush1.bf16.msra.mxu0 0
      %1342 = vmatprep.subr.bf16.mxu0 0
      %1343 = vmatpush1.bf16.msra.mxu0 0
      %1344 = vmatprep.subr.bf16.mxu0 0
      %1345 = vmatpush1.bf16.msra.mxu0 0
      %1346 = vmatprep.subr.bf16.mxu0 0
      %1347 = vmatpush1.bf16.msra.mxu0 0
      %1348 = vmatprep.subr.bf16.mxu0 0
      %1349 = vmatpush1.bf16.msra.mxu0 0
      %1350 = vmatprep.subr.bf16.mxu0 0
      %1351 = vmatpush1.bf16.msra.mxu0 0
      %1352 = vmatprep.subr.bf16.mxu0 0
      %1353 = vmatpush1.bf16.msra.mxu0 0
      %1354 = vmatprep.subr.bf16.mxu0 0
      %1355 = vmatpush1.bf16.msra.mxu0 0
      %1356 = vmatprep.subr.bf16.mxu0 0
      %1357 = vmatpush1.bf16.msra.mxu0 0
      %1358 = vmatprep.subr.bf16.mxu0 0
      %1359 = vmatpush1.bf16.msra.mxu0 0
      %1360 = vmatprep.subr.bf16.mxu0 0
      %1361 = vmatpush1.bf16.msra.mxu0 0
      %1362 = vmatprep.subr.bf16.mxu0 0
      %1363 = vmatpush1.bf16.msra.mxu0 0
      %1364 = vmatprep.subr.bf16.mxu0 0
      %1365 = vmatpush1.bf16.msra.mxu0 0
      %1366 = vmatprep.mubr.bf16.mxu0 0
      %1367 = vmatmul.mubr.bf16.gmra.mrb[0].mxu0 %v1320
      %v1368 = vpop.f32.mrb[0].mxu0
      %v1369 = vadd.f32 0.0, %v1368
      %v1370 = vpop.f32.mrb[0].mxu0
      %v1371 = vpop.f32.mrb[0].mxu0
      %v1372 = vadd.f32 0.0, %v1371
      %v1373 = vpop.f32.mrb[0].mxu0
      %1374 = vmatprep.mubr.bf16.mxu0 0
      %1375 = vmatmul.mubr.bf16.gmra.mrb[0].mxu0 %v1323
      %v1376 = vpop.f32.mrb[0].mxu0
      %v1377 = vadd.f32 0.0, %v1376
      %v1378 = vpop.f32.mrb[0].mxu0
      %v1379 = vpop.f32.mrb[0].mxu0
      %v1380 = vadd.f32 0.0, %v1379
      %v1381 = vpop.f32.mrb[0].mxu0
      %1382 = vmatprep.mubr.bf16.mxu0 0
      %1383 = vmatmul.mubr.bf16.gmra.mrb[0].mxu0 %v1326
      %v1384 = vpop.f32.mrb[0].mxu0
      %v1385 = vadd.f32 0.0, %v1384
      %v1386 = vpop.f32.mrb[0].mxu0
      %v1387 = vpop.f32.mrb[0].mxu0
      %v1388 = vadd.f32 0.0, %v1387
      %v1389 = vpop.f32.mrb[0].mxu0
      %1390 = vmatprep.mubr.bf16.mxu0 0
      %1391 = vmatmul.mubr.bf16.gmra.mrb[0].mxu0 %v1329
      %v1392 = vpop.f32.mrb[0].mxu0
      %v1393 = vadd.f32 0.0, %v1392
      %v1394 = vpop.f32.mrb[0].mxu0
      %v1395 = vpop.f32.mrb[0].mxu0
      %v1396 = vadd.f32 0.0, %v1395
      %v1397 = vpop.f32.mrb[0].mxu0
      %1398 = vdwg.mxu0
      %v1399 = vadd.f32 %v1294, %v1369
      %v1400 = vadd.f32 %v1295, %v1372
      %v1401 = vadd.f32 %v1296, %v1377
      %v1402 = vadd.f32 %v1297, %v1380
      %v1403 = vadd.f32 %v1298, %v1385
      %v1404 = vadd.f32 %v1299, %v1388
      %v1405 = vadd.f32 %v1300, %v1393
      %v1406 = vadd.f32 %v1301, %v1396
      %s1407 = scalar_lea.vmem [#allocation2], 16
      %v1408 = vld [vmem:[%s1407] sm:$0xff]
      %v1409 = vld [vmem:[%s1407 + $0x10] sm:$0xff]
      %v1410 = vld [vmem:[%s1407 + $0x20] sm:$0xff]
      %v1411 = vld [vmem:[%s1407 + $0x30] sm:$0xff]
      %v1412 = vld [vmem:[%s1407 + $0x40] sm:$0xff]
      %v1413 = vld [vmem:[%s1407 + $0x50] sm:$0xff]
      %v1414 = vld [vmem:[%s1407 + $0x60] sm:$0xff]
      %v1415 = vld [vmem:[%s1407 + $0x70] sm:$0xff]
      %v1416 = vpack.c.bf16 %v1409, %v1408
      %v1417 = vpack.c.bf16 %v1411, %v1410
      %v1418 = vpack.c.bf16 %v1413, %v1412
      %v1419 = vpack.c.bf16 %v1415, %v1414
      %v1420 = vld [vmem:[%s3 + $0xc] sm:$0x3]
      %v1422 = vsel %vm681, %v1416, 0
      %v1425 = vsel %vm681, %v1417, 0
      %v1428 = vsel %vm681, %v1418, 0
      %v1431 = vsel %vm681, %v1419, 0
      %v1434 = vsel %vm846, %v1420, 0
      %1436 = vmatprep.subr.bf16.mxu0 0
      %1437 = vmatpush1.bf16.msra.mxu0 %v1434
      %1438 = vmatprep.subr.bf16.mxu0 0
      %1439 = vmatpush1.bf16.msra.mxu0 0
      %1440 = vmatprep.subr.bf16.mxu0 0
      %1441 = vmatpush1.bf16.msra.mxu0 0
      %1442 = vmatprep.subr.bf16.mxu0 0
      %1443 = vmatpush1.bf16.msra.mxu0 0
      %1444 = vmatprep.subr.bf16.mxu0 0
      %1445 = vmatpush1.bf16.msra.mxu0 0
      %1446 = vmatprep.subr.bf16.mxu0 0
      %1447 = vmatpush1.bf16.msra.mxu0 0
      %1448 = vmatprep.subr.bf16.mxu0 0
      %1449 = vmatpush1.bf16.msra.mxu0 0
      %1450 = vmatprep.subr.bf16.mxu0 0
      %1451 = vmatpush1.bf16.msra.mxu0 0
      %1452 = vmatprep.subr.bf16.mxu0 0
      %1453 = vmatpush1.bf16.msra.mxu0 0
      %1454 = vmatprep.subr.bf16.mxu0 0
      %1455 = vmatpush1.bf16.msra.mxu0 0
      %1456 = vmatprep.subr.bf16.mxu0 0
      %1457 = vmatpush1.bf16.msra.mxu0 0
      %1458 = vmatprep.subr.bf16.mxu0 0
      %1459 = vmatpush1.bf16.msra.mxu0 0
      %1460 = vmatprep.subr.bf16.mxu0 0
      %1461 = vmatpush1.bf16.msra.mxu0 0
      %1462 = vmatprep.subr.bf16.mxu0 0
      %1463 = vmatpush1.bf16.msra.mxu0 0
      %1464 = vmatprep.subr.bf16.mxu0 0
      %1465 = vmatpush1.bf16.msra.mxu0 0
      %1466 = vmatprep.subr.bf16.mxu0 0
      %1467 = vmatpush1.bf16.msra.mxu0 0
      %1468 = vmatprep.mubr.bf16.mxu0 0
      %1469 = vmatmul.mubr.bf16.gmra.mrb[0].mxu0 %v1422
      %v1470 = vpop.f32.mrb[0].mxu0
      %v1471 = vadd.f32 0.0, %v1470
      %v1472 = vpop.f32.mrb[0].mxu0
      %v1473 = vpop.f32.mrb[0].mxu0
      %v1474 = vadd.f32 0.0, %v1473
      %v1475 = vpop.f32.mrb[0].mxu0
      %1476 = vmatprep.mubr.bf16.mxu0 0
      %1477 = vmatmul.mubr.bf16.gmra.mrb[0].mxu0 %v1425
      %v1478 = vpop.f32.mrb[0].mxu0
      %v1479 = vadd.f32 0.0, %v1478
      %v1480 = vpop.f32.mrb[0].mxu0
      %v1481 = vpop.f32.mrb[0].mxu0
      %v1482 = vadd.f32 0.0, %v1481
      %v1483 = vpop.f32.mrb[0].mxu0
      %1484 = vmatprep.mubr.bf16.mxu0 0
      %1485 = vmatmul.mubr.bf16.gmra.mrb[0].mxu0 %v1428
      %v1486 = vpop.f32.mrb[0].mxu0
      %v1487 = vadd.f32 0.0, %v1486
      %v1488 = vpop.f32.mrb[0].mxu0
      %v1489 = vpop.f32.mrb[0].mxu0
      %v1490 = vadd.f32 0.0, %v1489
      %v1491 = vpop.f32.mrb[0].mxu0
      %1492 = vmatprep.mubr.bf16.mxu0 0
      %1493 = vmatmul.mubr.bf16.gmra.mrb[0].mxu0 %v1431
      %v1494 = vpop.f32.mrb[0].mxu0
      %v1495 = vadd.f32 0.0, %v1494
      %v1496 = vpop.f32.mrb[0].mxu0
      %v1497 = vpop.f32.mrb[0].mxu0
      %v1498 = vadd.f32 0.0, %v1497
      %v1499 = vpop.f32.mrb[0].mxu0
      %1500 = vdwg.mxu0
      %v1501 = vadd.f32 %v1399, %v1471
      %v1502 = vadd.f32 %v1400, %v1474
      %v1503 = vadd.f32 %v1401, %v1479
      %v1504 = vadd.f32 %v1402, %v1482
      %v1505 = vadd.f32 %v1403, %v1487
      %v1506 = vadd.f32 %v1404, %v1490
      %v1507 = vadd.f32 %v1405, %v1495
      %v1508 = vadd.f32 %v1406, %v1498
      %s1509 = scalar_lea.vmem [#allocation2], 160
      %v1510 = vld [vmem:[%s1509] sm:$0xff]
      %v1511 = vld [vmem:[%s1509 + $0x10] sm:$0xff]
      %v1512 = vld [vmem:[%s1509 + $0x20] sm:$0xff]
      %v1513 = vld [vmem:[%s1509 + $0x30] sm:$0xff]
      %v1514 = vld [vmem:[%s1509 + $0x40] sm:$0xff]
      %v1515 = vld [vmem:[%s1509 + $0x50] sm:$0xff]
      %v1516 = vld [vmem:[%s1509 + $0x60] sm:$0xff]
      %v1517 = vld [vmem:[%s1509 + $0x70] sm:$0xff]
      %v1518 = vpack.c.bf16 %v1511, %v1510
      %v1519 = vpack.c.bf16 %v1513, %v1512
      %v1520 = vpack.c.bf16 %v1515, %v1514
      %v1521 = vpack.c.bf16 %v1517, %v1516
      %v1522 = vld [vmem:[%s3 + $0xc] sm:$0xc]
      %v1524 = vunpack.c.l.b16 %v1522
      %v1525 = vpack.c.b16 %v1524, %v1524
      %v1526 = vrot.slane %v1525, 2
      %v1528 = vsel %vm681, %v1518, 0
      %v1531 = vsel %vm681, %v1519, 0
      %v1534 = vsel %vm681, %v1520, 0
      %v1537 = vsel %vm681, %v1521, 0
      %v1540 = vsel %vm846, %v1526, 0
      %1542 = vmatprep.subr.bf16.mxu0 0
      %1543 = vmatpush1.bf16.msra.mxu0 %v1540
      %1544 = vmatprep.subr.bf16.mxu0 0
      %1545 = vmatpush1.bf16.msra.mxu0 0
      %1546 = vmatprep.subr.bf16.mxu0 0
      %1547 = vmatpush1.bf16.msra.mxu0 0
      %1548 = vmatprep.subr.bf16.mxu0 0
      %1549 = vmatpush1.bf16.msra.mxu0 0
      %1550 = vmatprep.subr.bf16.mxu0 0
      %1551 = vmatpush1.bf16.msra.mxu0 0
      %1552 = vmatprep.subr.bf16.mxu0 0
      %1553 = vmatpush1.bf16.msra.mxu0 0
      %1554 = vmatprep.subr.bf16.mxu0 0
      %1555 = vmatpush1.bf16.msra.mxu0 0
      %1556 = vmatprep.subr.bf16.mxu0 0
      %1557 = vmatpush1.bf16.msra.mxu0 0
      %1558 = vmatprep.subr.bf16.mxu0 0
      %1559 = vmatpush1.bf16.msra.mxu0 0
      %1560 = vmatprep.subr.bf16.mxu0 0
      %1561 = vmatpush1.bf16.msra.mxu0 0
      %1562 = vmatprep.subr.bf16.mxu0 0
      %1563 = vmatpush1.bf16.msra.mxu0 0
      %1564 = vmatprep.subr.bf16.mxu0 0
      %1565 = vmatpush1.bf16.msra.mxu0 0
      %1566 = vmatprep.subr.bf16.mxu0 0
      %1567 = vmatpush1.bf16.msra.mxu0 0
      %1568 = vmatprep.subr.bf16.mxu0 0
      %1569 = vmatpush1.bf16.msra.mxu0 0
      %1570 = vmatprep.subr.bf16.mxu0 0
      %1571 = vmatpush1.bf16.msra.mxu0 0
      %1572 = vmatprep.subr.bf16.mxu0 0
      %1573 = vmatpush1.bf16.msra.mxu0 0
      %1574 = vmatprep.mubr.bf16.mxu0 0
      %1575 = vmatmul.mubr.bf16.gmra.mrb[0].mxu0 %v1528
      %v1576 = vpop.f32.mrb[0].mxu0
      %v1577 = vadd.f32 0.0, %v1576
      %v1578 = vpop.f32.mrb[0].mxu0
      %v1579 = vpop.f32.mrb[0].mxu0
      %v1580 = vadd.f32 0.0, %v1579
      %v1581 = vpop.f32.mrb[0].mxu0
      %1582 = vmatprep.mubr.bf16.mxu0 0
      %1583 = vmatmul.mubr.bf16.gmra.mrb[0].mxu0 %v1531
      %v1584 = vpop.f32.mrb[0].mxu0
      %v1585 = vadd.f32 0.0, %v1584
      %v1586 = vpop.f32.mrb[0].mxu0
      %v1587 = vpop.f32.mrb[0].mxu0
      %v1588 = vadd.f32 0.0, %v1587
      %v1589 = vpop.f32.mrb[0].mxu0
      %1590 = vmatprep.mubr.bf16.mxu0 0
      %1591 = vmatmul.mubr.bf16.gmra.mrb[0].mxu0 %v1534
      %v1592 = vpop.f32.mrb[0].mxu0
      %v1593 = vadd.f32 0.0, %v1592
      %v1594 = vpop.f32.mrb[0].mxu0
      %v1595 = vpop.f32.mrb[0].mxu0
      %v1596 = vadd.f32 0.0, %v1595
      %v1597 = vpop.f32.mrb[0].mxu0
      %1598 = vmatprep.mubr.bf16.mxu0 0
      %1599 = vmatmul.mubr.bf16.gmra.mrb[0].mxu0 %v1537
      %v1600 = vpop.f32.mrb[0].mxu0
      %v1601 = vadd.f32 0.0, %v1600
      %v1602 = vpop.f32.mrb[0].mxu0
      %v1603 = vpop.f32.mrb[0].mxu0
      %v1604 = vadd.f32 0.0, %v1603
      %v1605 = vpop.f32.mrb[0].mxu0
      %1606 = vdwg.mxu0
      %v1607 = vadd.f32 %v1501, %v1577
      %v1608 = vadd.f32 %v1502, %v1580
      %v1609 = vadd.f32 %v1503, %v1585
      %v1610 = vadd.f32 %v1504, %v1588
      %v1611 = vadd.f32 %v1505, %v1593
      %v1612 = vadd.f32 %v1506, %v1596
      %v1613 = vadd.f32 %v1507, %v1601
      %v1614 = vadd.f32 %v1508, %v1604
      %v1615 = vld [vmem:[%s1407 + $0x1] sm:$0xff]
      %v1616 = vld [vmem:[%s1407 + $0x11] sm:$0xff]
      %v1617 = vld [vmem:[%s1407 + $0x21] sm:$0xff]
      %v1618 = vld [vmem:[%s1407 + $0x31] sm:$0xff]
      %v1619 = vld [vmem:[%s1407 + $0x41] sm:$0xff]
      %v1620 = vld [vmem:[%s1407 + $0x51] sm:$0xff]
      %v1621 = vld [vmem:[%s1407 + $0x61] sm:$0xff]
      %v1622 = vld [vmem:[%s1407 + $0x71] sm:$0xff]
      %v1623 = vpack.c.bf16 %v1616, %v1615
      %v1624 = vpack.c.bf16 %v1618, %v1617
      %v1625 = vpack.c.bf16 %v1620, %v1619
      %v1626 = vpack.c.bf16 %v1622, %v1621
      %v1627 = vld [vmem:[%s3 + $0x10] sm:$0x3]
      %v1629 = vsel %vm681, %v1623, 0
      %v1632 = vsel %vm681, %v1624, 0
      %v1635 = vsel %vm681, %v1625, 0
      %v1638 = vsel %vm681, %v1626, 0
      %v1641 = vsel %vm846, %v1627, 0
      %1643 = vmatprep.subr.bf16.mxu0 0
      %1644 = vmatpush1.bf16.msra.mxu0 %v1641
      %1645 = vmatprep.subr.bf16.mxu0 0
      %1646 = vmatpush1.bf16.msra.mxu0 0
      %1647 = vmatprep.subr.bf16.mxu0 0
      %1648 = vmatpush1.bf16.msra.mxu0 0
      %1649 = vmatprep.subr.bf16.mxu0 0
      %1650 = vmatpush1.bf16.msra.mxu0 0
      %1651 = vmatprep.subr.bf16.mxu0 0
      %1652 = vmatpush1.bf16.msra.mxu0 0
      %1653 = vmatprep.subr.bf16.mxu0 0
      %1654 = vmatpush1.bf16.msra.mxu0 0
      %1655 = vmatprep.subr.bf16.mxu0 0
      %1656 = vmatpush1.bf16.msra.mxu0 0
      %1657 = vmatprep.subr.bf16.mxu0 0
      %1658 = vmatpush1.bf16.msra.mxu0 0
      %1659 = vmatprep.subr.bf16.mxu0 0
      %1660 = vmatpush1.bf16.msra.mxu0 0
      %1661 = vmatprep.subr.bf16.mxu0 0
      %1662 = vmatpush1.bf16.msra.mxu0 0
      %1663 = vmatprep.subr.bf16.mxu0 0
      %1664 = vmatpush1.bf16.msra.mxu0 0
      %1665 = vmatprep.subr.bf16.mxu0 0
      %1666 = vmatpush1.bf16.msra.mxu0 0
      %1667 = vmatprep.subr.bf16.mxu0 0
      %1668 = vmatpush1.bf16.msra.mxu0 0
      %1669 = vmatprep.subr.bf16.mxu0 0
      %1670 = vmatpush1.bf16.msra.mxu0 0
      %1671 = vmatprep.subr.bf16.mxu0 0
      %1672 = vmatpush1.bf16.msra.mxu0 0
      %1673 = vmatprep.subr.bf16.mxu0 0
      %1674 = vmatpush1.bf16.msra.mxu0 0
      %1675 = vmatprep.mubr.bf16.mxu0 0
      %1676 = vmatmul.mubr.bf16.gmra.mrb[0].mxu0 %v1629
      %v1677 = vpop.f32.mrb[0].mxu0
      %v1678 = vadd.f32 0.0, %v1677
      %v1679 = vpop.f32.mrb[0].mxu0
      %v1680 = vpop.f32.mrb[0].mxu0
      %v1681 = vadd.f32 0.0, %v1680
      %v1682 = vpop.f32.mrb[0].mxu0
      %1683 = vmatprep.mubr.bf16.mxu0 0
      %1684 = vmatmul.mubr.bf16.gmra.mrb[0].mxu0 %v1632
      %v1685 = vpop.f32.mrb[0].mxu0
      %v1686 = vadd.f32 0.0, %v1685
      %v1687 = vpop.f32.mrb[0].mxu0
      %v1688 = vpop.f32.mrb[0].mxu0
      %v1689 = vadd.f32 0.0, %v1688
      %v1690 = vpop.f32.mrb[0].mxu0
      %1691 = vmatprep.mubr.bf16.mxu0 0
      %1692 = vmatmul.mubr.bf16.gmra.mrb[0].mxu0 %v1635
      %v1693 = vpop.f32.mrb[0].mxu0
      %v1694 = vadd.f32 0.0, %v1693
      %v1695 = vpop.f32.mrb[0].mxu0
      %v1696 = vpop.f32.mrb[0].mxu0
      %v1697 = vadd.f32 0.0, %v1696
      %v1698 = vpop.f32.mrb[0].mxu0
      %1699 = vmatprep.mubr.bf16.mxu0 0
      %1700 = vmatmul.mubr.bf16.gmra.mrb[0].mxu0 %v1638
      %v1701 = vpop.f32.mrb[0].mxu0
      %v1702 = vadd.f32 0.0, %v1701
      %v1703 = vpop.f32.mrb[0].mxu0
      %v1704 = vpop.f32.mrb[0].mxu0
      %v1705 = vadd.f32 0.0, %v1704
      %v1706 = vpop.f32.mrb[0].mxu0
      %1707 = vdwg.mxu0
      %v1708 = vadd.f32 %v1607, %v1678
      %v1709 = vadd.f32 %v1608, %v1681
      %v1710 = vadd.f32 %v1609, %v1686
      %v1711 = vadd.f32 %v1610, %v1689
      %v1712 = vadd.f32 %v1611, %v1694
      %v1713 = vadd.f32 %v1612, %v1697
      %v1714 = vadd.f32 %v1613, %v1702
      %v1715 = vadd.f32 %v1614, %v1705
      %v1716 = vld [vmem:[%s4] sm:$0x1]
      %v1718 = vlaneseq
      %v1719 = vshrl.u32 %v1718, 7
      %v1720 = vsub.s32 0, %v1719
      %v1721 = vrot.slane %v1716, %v1720
      %v1723 = vmul.f32 %v1708, %v1721
      %v1724 = vmul.f32 %v1709, %v1721
      %v1725 = vmul.f32 %v1710, %v1721
      %v1726 = vmul.f32 %v1711, %v1721
      %v1727 = vmul.f32 %v1712, %v1721
      %v1728 = vmul.f32 %v1713, %v1721
      %v1729 = vmul.f32 %v1714, %v1721
      %v1730 = vmul.f32 %v1715, %v1721
      %v1731 = vld [vmem:[%s5] sm:$0x1]
      %v1733 = vlaneseq
      %v1734 = vshrl.u32 %v1733, 7
      %v1735 = vsub.s32 0, %v1734
      %v1736 = vrot.slane %v1731, %v1735
      %v1738 = vadd.f32 %v1723, %v1736
      %v1739 = vadd.f32 %v1724, %v1736
      %v1740 = vadd.f32 %v1725, %v1736
      %v1741 = vadd.f32 %v1726, %v1736
      %v1742 = vadd.f32 %v1727, %v1736
      %v1743 = vadd.f32 %v1728, %v1736
      %v1744 = vadd.f32 %v1729, %v1736
      %v1745 = vadd.f32 %v1730, %v1736
      %v1746 = vmax.f32 %v1738, 0.0
      %v1747 = vmax.f32 %v1739, 0.0
      %v1748 = vmax.f32 %v1740, 0.0
      %v1749 = vmax.f32 %v1741, 0.0
      %v1750 = vmax.f32 %v1742, 0.0
      %v1751 = vmax.f32 %v1743, 0.0
      %v1752 = vmax.f32 %v1744, 0.0
      %v1753 = vmax.f32 %v1745, 0.0
      %vm1754 = vcmask 64512
      %1755 = vst.msk [vmem:[#allocation3] sm:$0xff] %vm1754, 0.0
      %vm1756 = vcmask 58368
      %1757 = vst.msk [vmem:[#allocation3 + $0x8] sm:$0x3] %vm1756, 0.0
      %s1758 = scalar_lea.vmem [#allocation3], 144
      %1759 = vst.msk [vmem:[%s1758] sm:$0xff] %vm1754, 0.0
      %1760 = vst.msk [vmem:[%s1758 + $0x8] sm:$0x3] %vm1756, 0.0
      %vm1761 = vcmask 57344
      %1762 = vst.msk [vmem:[#allocation3] sm:$0x1] %vm1761, 0.0
      %1763 = vst.msk [vmem:[#allocation3 + $0x10] sm:$0x1] %vm1761, 0.0
      %1764 = vst.msk [vmem:[#allocation3 + $0x20] sm:$0x1] %vm1761, 0.0
      %1765 = vst.msk [vmem:[#allocation3 + $0x30] sm:$0x1] %vm1761, 0.0
      %1766 = vst.msk [vmem:[#allocation3 + $0x40] sm:$0x1] %vm1761, 0.0
      %1767 = vst.msk [vmem:[#allocation3 + $0x50] sm:$0x1] %vm1761, 0.0
      %1768 = vst.msk [vmem:[#allocation3 + $0x60] sm:$0x1] %vm1761, 0.0
      %1769 = vst.msk [vmem:[#allocation3 + $0x70] sm:$0x1] %vm1761, 0.0
      %1770 = vst.msk [vmem:[#allocation3 + $0x80] sm:$0x1] %vm1761, 0.0
      %1771 = vst.msk [vmem:[#allocation3 + $0x90] sm:$0x1] %vm1761, 0.0
      %1772 = vst.msk [vmem:[#allocation3 + $0x9] sm:$0x1] %vm1761, 0.0
      %1773 = vst.msk [vmem:[#allocation3 + $0x19] sm:$0x1] %vm1761, 0.0
      %1774 = vst.msk [vmem:[#allocation3 + $0x29] sm:$0x1] %vm1761, 0.0
      %1775 = vst.msk [vmem:[#allocation3 + $0x39] sm:$0x1] %vm1761, 0.0
      %1776 = vst.msk [vmem:[#allocation3 + $0x49] sm:$0x1] %vm1761, 0.0
      %1777 = vst.msk [vmem:[#allocation3 + $0x59] sm:$0x1] %vm1761, 0.0
      %1778 = vst.msk [vmem:[#allocation3 + $0x69] sm:$0x1] %vm1761, 0.0
      %1779 = vst.msk [vmem:[#allocation3 + $0x79] sm:$0x1] %vm1761, 0.0
      %1780 = vst.msk [vmem:[#allocation3 + $0x89] sm:$0x1] %vm1761, 0.0
      %1781 = vst.msk [vmem:[#allocation3 + $0x99] sm:$0x1] %vm1761, 0.0
      %s1782 = scalar_lea.vmem [#allocation3], 16
      %1783 = vst.msk [vmem:[%s1782 + $0x1] sm:$0xff] %vm1754, %v1746
      %1784 = vst.msk [vmem:[%s1782 + $0x11] sm:$0xff] %vm1754, %v1747
      %1785 = vst.msk [vmem:[%s1782 + $0x21] sm:$0xff] %vm1754, %v1748
      %1786 = vst.msk [vmem:[%s1782 + $0x31] sm:$0xff] %vm1754, %v1749
      %1787 = vst.msk [vmem:[%s1782 + $0x41] sm:$0xff] %vm1754, %v1750
      %1788 = vst.msk [vmem:[%s1782 + $0x51] sm:$0xff] %vm1754, %v1751
      %1789 = vst.msk [vmem:[%s1782 + $0x61] sm:$0xff] %vm1754, %v1752
      %1790 = vst.msk [vmem:[%s1782 + $0x71] sm:$0xff] %vm1754, %v1753
      %v1791 = vld [vmem:[#allocation3] sm:$0xff]
      %v1792 = vld [vmem:[#allocation3 + $0x10] sm:$0xff]
      %v1793 = vld [vmem:[#allocation3 + $0x20] sm:$0xff]
      %v1794 = vld [vmem:[#allocation3 + $0x30] sm:$0xff]
      %v1795 = vld [vmem:[#allocation3 + $0x40] sm:$0xff]
      %v1796 = vld [vmem:[#allocation3 + $0x50] sm:$0xff]
      %v1797 = vld [vmem:[#allocation3 + $0x60] sm:$0xff]
      %v1798 = vld [vmem:[#allocation3 + $0x70] sm:$0xff]
      %v1799 = vpack.c.bf16 %v1792, %v1791
      %v1800 = vpack.c.bf16 %v1794, %v1793
      %v1801 = vpack.c.bf16 %v1796, %v1795
      %v1802 = vpack.c.bf16 %v1798, %v1797
      %v1803 = vld [vmem:[%s6] sm:$0xf]
      %v1804 = vld [vmem:[#allocation3 + $0x1] sm:$0xff]
      %v1805 = vld [vmem:[#allocation3 + $0x11] sm:$0xff]
      %v1806 = vld [vmem:[#allocation3 + $0x21] sm:$0xff]
      %v1807 = vld [vmem:[#allocation3 + $0x31] sm:$0xff]
      %v1808 = vld [vmem:[#allocation3 + $0x41] sm:$0xff]
      %v1809 = vld [vmem:[#allocation3 + $0x51] sm:$0xff]
      %v1810 = vld [vmem:[#allocation3 + $0x61] sm:$0xff]
      %v1811 = vld [vmem:[#allocation3 + $0x71] sm:$0xff]
      %v1812 = vpack.c.bf16 %v1805, %v1804
      %v1813 = vpack.c.bf16 %v1807, %v1806
      %v1814 = vpack.c.bf16 %v1809, %v1808
      %v1815 = vpack.c.bf16 %v1811, %v1810
      %v1816 = vld [vmem:[%s6 + $0x4] sm:$0xf]
      %v1818 = vsel %vm1754, %v1812, 0
      %v1821 = vsel %vm1754, %v1813, 0
      %v1824 = vsel %vm1754, %v1814, 0
      %v1827 = vsel %vm1754, %v1815, 0
      %vm1829 = vcmask 1043456
      %v1831 = vsel %vm1829, %v1816, 0
      %1833 = vmatprep.subr.bf16.mxu0 0
      %1834 = vmatpush1.bf16.msra.mxu0 %v1831
      %1835 = vmatprep.subr.bf16.mxu0 0
      %1836 = vmatpush1.bf16.msra.mxu0 0
      %1837 = vmatprep.subr.bf16.mxu0 0
      %1838 = vmatpush1.bf16.msra.mxu0 0
      %1839 = vmatprep.subr.bf16.mxu0 0
      %1840 = vmatpush1.bf16.msra.mxu0 0
      %1841 = vmatprep.subr.bf16.mxu0 0
      %1842 = vmatpush1.bf16.msra.mxu0 0
      %1843 = vmatprep.subr.bf16.mxu0 0
      %1844 = vmatpush1.bf16.msra.mxu0 0
      %1845 = vmatprep.subr.bf16.mxu0 0
      %1846 = vmatpush1.bf16.msra.mxu0 0
      %1847 = vmatprep.subr.bf16.mxu0 0
      %1848 = vmatpush1.bf16.msra.mxu0 0
      %1849 = vmatprep.subr.bf16.mxu0 0
      %1850 = vmatpush1.bf16.msra.mxu0 0
      %1851 = vmatprep.subr.bf16.mxu0 0
      %1852 = vmatpush1.bf16.msra.mxu0 0
      %1853 = vmatprep.subr.bf16.mxu0 0
      %1854 = vmatpush1.bf16.msra.mxu0 0
      %1855 = vmatprep.subr.bf16.mxu0 0
      %1856 = vmatpush1.bf16.msra.mxu0 0
      %1857 = vmatprep.subr.bf16.mxu0 0
      %1858 = vmatpush1.bf16.msra.mxu0 0
      %1859 = vmatprep.subr.bf16.mxu0 0
      %1860 = vmatpush1.bf16.msra.mxu0 0
      %1861 = vmatprep.subr.bf16.mxu0 0
      %1862 = vmatpush1.bf16.msra.mxu0 0
      %1863 = vmatprep.subr.bf16.mxu0 0
      %1864 = vmatpush1.bf16.msra.mxu0 0
      %1865 = vmatprep.mubr.bf16.mxu0 0
      %1866 = vmatmul.mubr.bf16.gmra.mrb[0].mxu0 %v1818
      %v1867 = vpop.f32.mrb[0].mxu0
      %v1868 = vadd.f32 0.0, %v1867
      %v1869 = vpop.f32.mrb[0].mxu0
      %v1870 = vpop.f32.mrb[0].mxu0
      %v1871 = vadd.f32 0.0, %v1870
      %v1872 = vpop.f32.mrb[0].mxu0
      %1873 = vmatprep.mubr.bf16.mxu0 0
      %1874 = vmatmul.mubr.bf16.gmra.mrb[0].mxu0 %v1821
      %v1875 = vpop.f32.mrb[0].mxu0
      %v1876 = vadd.f32 0.0, %v1875
      %v1877 = vpop.f32.mrb[0].mxu0
      %v1878 = vpop.f32.mrb[0].mxu0
      %v1879 = vadd.f32 0.0, %v1878
      %v1880 = vpop.f32.mrb[0].mxu0
      %1881 = vmatprep.mubr.bf16.mxu0 0
      %1882 = vmatmul.mubr.bf16.gmra.mrb[0].mxu0 %v1824
      %v1883 = vpop.f32.mrb[0].mxu0
      %v1884 = vadd.f32 0.0, %v1883
      %v1885 = vpop.f32.mrb[0].mxu0
      %v1886 = vpop.f32.mrb[0].mxu0
      %v1887 = vadd.f32 0.0, %v1886
      %v1888 = vpop.f32.mrb[0].mxu0
      %1889 = vmatprep.mubr.bf16.mxu0 0
      %1890 = vmatmul.mubr.bf16.gmra.mrb[0].mxu0 %v1827
      %v1891 = vpop.f32.mrb[0].mxu0
      %v1892 = vadd.f32 0.0, %v1891
      %v1893 = vpop.f32.mrb[0].mxu0
      %v1894 = vpop.f32.mrb[0].mxu0
      %v1895 = vadd.f32 0.0, %v1894
      %v1896 = vpop.f32.mrb[0].mxu0
      %1897 = vdwg.mxu0
      %v1899 = vsel %vm1754, %v1799, 0
      %v1902 = vsel %vm1754, %v1800, 0
      %v1905 = vsel %vm1754, %v1801, 0
      %v1908 = vsel %vm1754, %v1802, 0
      %v1911 = vsel %vm1829, %v1803, 0
      %1913 = vmatprep.subr.bf16.mxu0 0
      %1914 = vmatpush1.bf16.msra.mxu0 %v1911
      %1915 = vmatprep.subr.bf16.mxu0 0
      %1916 = vmatpush1.bf16.msra.mxu0 0
      %1917 = vmatprep.subr.bf16.mxu0 0
      %1918 = vmatpush1.bf16.msra.mxu0 0
      %1919 = vmatprep.subr.bf16.mxu0 0
      %1920 = vmatpush1.bf16.msra.mxu0 0
      %1921 = vmatprep.subr.bf16.mxu0 0
      %1922 = vmatpush1.bf16.msra.mxu0 0
      %1923 = vmatprep.subr.bf16.mxu0 0
      %1924 = vmatpush1.bf16.msra.mxu0 0
      %1925 = vmatprep.subr.bf16.mxu0 0
      %1926 = vmatpush1.bf16.msra.mxu0 0
      %1927 = vmatprep.subr.bf16.mxu0 0
      %1928 = vmatpush1.bf16.msra.mxu0 0
      %1929 = vmatprep.subr.bf16.mxu0 0
      %1930 = vmatpush1.bf16.msra.mxu0 0
      %1931 = vmatprep.subr.bf16.mxu0 0
      %1932 = vmatpush1.bf16.msra.mxu0 0
      %1933 = vmatprep.subr.bf16.mxu0 0
      %1934 = vmatpush1.bf16.msra.mxu0 0
      %1935 = vmatprep.subr.bf16.mxu0 0
      %1936 = vmatpush1.bf16.msra.mxu0 0
      %1937 = vmatprep.subr.bf16.mxu0 0
      %1938 = vmatpush1.bf16.msra.mxu0 0
      %1939 = vmatprep.subr.bf16.mxu0 0
      %1940 = vmatpush1.bf16.msra.mxu0 0
      %1941 = vmatprep.subr.bf16.mxu0 0
      %1942 = vmatpush1.bf16.msra.mxu0 0
      %1943 = vmatprep.subr.bf16.mxu0 0
      %1944 = vmatpush1.bf16.msra.mxu0 0
      %1945 = vmatprep.mubr.bf16.mxu0 0
      %1946 = vmatmul.mubr.bf16.gmra.mrb[0].mxu0 %v1899
      %v1947 = vpop.f32.mrb[0].mxu0
      %v1948 = vadd.f32 %v1868, %v1947
      %v1949 = vpop.f32.mrb[0].mxu0
      %v1950 = vpop.f32.mrb[0].mxu0
      %v1951 = vadd.f32 %v1871, %v1950
      %v1952 = vpop.f32.mrb[0].mxu0
      %1953 = vmatprep.mubr.bf16.mxu0 0
      %1954 = vmatmul.mubr.bf16.gmra.mrb[0].mxu0 %v1902
      %v1955 = vpop.f32.mrb[0].mxu0
      %v1956 = vadd.f32 %v1876, %v1955
      %v1957 = vpop.f32.mrb[0].mxu0
      %v1958 = vpop.f32.mrb[0].mxu0
      %v1959 = vadd.f32 %v1879, %v1958
      %v1960 = vpop.f32.mrb[0].mxu0
      %1961 = vmatprep.mubr.bf16.mxu0 0
      %1962 = vmatmul.mubr.bf16.gmra.mrb[0].mxu0 %v1905
      %v1963 = vpop.f32.mrb[0].mxu0
      %v1964 = vadd.f32 %v1884, %v1963
      %v1965 = vpop.f32.mrb[0].mxu0
      %v1966 = vpop.f32.mrb[0].mxu0
      %v1967 = vadd.f32 %v1887, %v1966
      %v1968 = vpop.f32.mrb[0].mxu0
      %1969 = vmatprep.mubr.bf16.mxu0 0
      %1970 = vmatmul.mubr.bf16.gmra.mrb[0].mxu0 %v1908
      %v1971 = vpop.f32.mrb[0].mxu0
      %v1972 = vadd.f32 %v1892, %v1971
      %v1973 = vpop.f32.mrb[0].mxu0
      %v1974 = vpop.f32.mrb[0].mxu0
      %v1975 = vadd.f32 %v1895, %v1974
      %v1976 = vpop.f32.mrb[0].mxu0
      %1977 = vdwg.mxu0
      %v1978 = vld [vmem:[#allocation3 + $0x2] sm:$0xff]
      %v1979 = vld [vmem:[#allocation3 + $0x12] sm:$0xff]
      %v1980 = vld [vmem:[#allocation3 + $0x22] sm:$0xff]
      %v1981 = vld [vmem:[#allocation3 + $0x32] sm:$0xff]
      %v1982 = vld [vmem:[#allocation3 + $0x42] sm:$0xff]
      %v1983 = vld [vmem:[#allocation3 + $0x52] sm:$0xff]
      %v1984 = vld [vmem:[#allocation3 + $0x62] sm:$0xff]
      %v1985 = vld [vmem:[#allocation3 + $0x72] sm:$0xff]
      %v1986 = vpack.c.bf16 %v1979, %v1978
      %v1987 = vpack.c.bf16 %v1981, %v1980
      %v1988 = vpack.c.bf16 %v1983, %v1982
      %v1989 = vpack.c.bf16 %v1985, %v1984
      %v1990 = vld [vmem:[%s6 + $0x8] sm:$0xf]
      %v1992 = vsel %vm1754, %v1986, 0
      %v1995 = vsel %vm1754, %v1987, 0
      %v1998 = vsel %vm1754, %v1988, 0
      %v2001 = vsel %vm1754, %v1989, 0
      %v2004 = vsel %vm1829, %v1990, 0
      %2006 = vmatprep.subr.bf16.mxu0 0
      %2007 = vmatpush1.bf16.msra.mxu0 %v2004
      %2008 = vmatprep.subr.bf16.mxu0 0
      %2009 = vmatpush1.bf16.msra.mxu0 0
      %2010 = vmatprep.subr.bf16.mxu0 0
      %2011 = vmatpush1.bf16.msra.mxu0 0
      %2012 = vmatprep.subr.bf16.mxu0 0
      %2013 = vmatpush1.bf16.msra.mxu0 0
      %2014 = vmatprep.subr.bf16.mxu0 0
      %2015 = vmatpush1.bf16.msra.mxu0 0
      %2016 = vmatprep.subr.bf16.mxu0 0
      %2017 = vmatpush1.bf16.msra.mxu0 0
      %2018 = vmatprep.subr.bf16.mxu0 0
      %2019 = vmatpush1.bf16.msra.mxu0 0
      %2020 = vmatprep.subr.bf16.mxu0 0
      %2021 = vmatpush1.bf16.msra.mxu0 0
      %2022 = vmatprep.subr.bf16.mxu0 0
      %2023 = vmatpush1.bf16.msra.mxu0 0
      %2024 = vmatprep.subr.bf16.mxu0 0
      %2025 = vmatpush1.bf16.msra.mxu0 0
      %2026 = vmatprep.subr.bf16.mxu0 0
      %2027 = vmatpush1.bf16.msra.mxu0 0
      %2028 = vmatprep.subr.bf16.mxu0 0
      %2029 = vmatpush1.bf16.msra.mxu0 0
      %2030 = vmatprep.subr.bf16.mxu0 0
      %2031 = vmatpush1.bf16.msra.mxu0 0
      %2032 = vmatprep.subr.bf16.mxu0 0
      %2033 = vmatpush1.bf16.msra.mxu0 0
      %2034 = vmatprep.subr.bf16.mxu0 0
      %2035 = vmatpush1.bf16.msra.mxu0 0
      %2036 = vmatprep.subr.bf16.mxu0 0
      %2037 = vmatpush1.bf16.msra.mxu0 0
      %2038 = vmatprep.mubr.bf16.mxu0 0
      %2039 = vmatmul.mubr.bf16.gmra.mrb[0].mxu0 %v1992
      %v2040 = vpop.f32.mrb[0].mxu0
      %v2041 = vadd.f32 0.0, %v2040
      %v2042 = vpop.f32.mrb[0].mxu0
      %v2043 = vpop.f32.mrb[0].mxu0
      %v2044 = vadd.f32 0.0, %v2043
      %v2045 = vpop.f32.mrb[0].mxu0
      %2046 = vmatprep.mubr.bf16.mxu0 0
      %2047 = vmatmul.mubr.bf16.gmra.mrb[0].mxu0 %v1995
      %v2048 = vpop.f32.mrb[0].mxu0
      %v2049 = vadd.f32 0.0, %v2048
      %v2050 = vpop.f32.mrb[0].mxu0
      %v2051 = vpop.f32.mrb[0].mxu0
      %v2052 = vadd.f32 0.0, %v2051
      %v2053 = vpop.f32.mrb[0].mxu0
      %2054 = vmatprep.mubr.bf16.mxu0 0
      %2055 = vmatmul.mubr.bf16.gmra.mrb[0].mxu0 %v1998
      %v2056 = vpop.f32.mrb[0].mxu0
      %v2057 = vadd.f32 0.0, %v2056
      %v2058 = vpop.f32.mrb[0].mxu0
      %v2059 = vpop.f32.mrb[0].mxu0
      %v2060 = vadd.f32 0.0, %v2059
      %v2061 = vpop.f32.mrb[0].mxu0
      %2062 = vmatprep.mubr.bf16.mxu0 0
      %2063 = vmatmul.mubr.bf16.gmra.mrb[0].mxu0 %v2001
      %v2064 = vpop.f32.mrb[0].mxu0
      %v2065 = vadd.f32 0.0, %v2064
      %v2066 = vpop.f32.mrb[0].mxu0
      %v2067 = vpop.f32.mrb[0].mxu0
      %v2068 = vadd.f32 0.0, %v2067
      %v2069 = vpop.f32.mrb[0].mxu0
      %2070 = vdwg.mxu0
      %v2071 = vadd.f32 %v1948, %v2041
      %v2072 = vadd.f32 %v1951, %v2044
      %v2073 = vadd.f32 %v1956, %v2049
      %v2074 = vadd.f32 %v1959, %v2052
      %v2075 = vadd.f32 %v1964, %v2057
      %v2076 = vadd.f32 %v1967, %v2060
      %v2077 = vadd.f32 %v1972, %v2065
      %v2078 = vadd.f32 %v1975, %v2068
      %v2079 = vld [vmem:[%s1782] sm:$0xff]
      %v2080 = vld [vmem:[%s1782 + $0x10] sm:$0xff]
      %v2081 = vld [vmem:[%s1782 + $0x20] sm:$0xff]
      %v2082 = vld [vmem:[%s1782 + $0x30] sm:$0xff]
      %v2083 = vld [vmem:[%s1782 + $0x40] sm:$0xff]
      %v2084 = vld [vmem:[%s1782 + $0x50] sm:$0xff]
      %v2085 = vld [vmem:[%s1782 + $0x60] sm:$0xff]
      %v2086 = vld [vmem:[%s1782 + $0x70] sm:$0xff]
      %v2087 = vpack.c.bf16 %v2080, %v2079
      %v2088 = vpack.c.bf16 %v2082, %v2081
      %v2089 = vpack.c.bf16 %v2084, %v2083
      %v2090 = vpack.c.bf16 %v2086, %v2085
      %v2091 = vld [vmem:[%s6 + $0xc] sm:$0xf]
      %v2093 = vsel %vm1754, %v2087, 0
      %v2096 = vsel %vm1754, %v2088, 0
      %v2099 = vsel %vm1754, %v2089, 0
      %v2102 = vsel %vm1754, %v2090, 0
      %v2105 = vsel %vm1829, %v2091, 0
      %2107 = vmatprep.subr.bf16.mxu0 0
      %2108 = vmatpush1.bf16.msra.mxu0 %v2105
      %2109 = vmatprep.subr.bf16.mxu0 0
      %2110 = vmatpush1.bf16.msra.mxu0 0
      %2111 = vmatprep.subr.bf16.mxu0 0
      %2112 = vmatpush1.bf16.msra.mxu0 0
      %2113 = vmatprep.subr.bf16.mxu0 0
      %2114 = vmatpush1.bf16.msra.mxu0 0
      %2115 = vmatprep.subr.bf16.mxu0 0
      %2116 = vmatpush1.bf16.msra.mxu0 0
      %2117 = vmatprep.subr.bf16.mxu0 0
      %2118 = vmatpush1.bf16.msra.mxu0 0
      %2119 = vmatprep.subr.bf16.mxu0 0
      %2120 = vmatpush1.bf16.msra.mxu0 0
      %2121 = vmatprep.subr.bf16.mxu0 0
      %2122 = vmatpush1.bf16.msra.mxu0 0
      %2123 = vmatprep.subr.bf16.mxu0 0
      %2124 = vmatpush1.bf16.msra.mxu0 0
      %2125 = vmatprep.subr.bf16.mxu0 0
      %2126 = vmatpush1.bf16.msra.mxu0 0
      %2127 = vmatprep.subr.bf16.mxu0 0
      %2128 = vmatpush1.bf16.msra.mxu0 0
      %2129 = vmatprep.subr.bf16.mxu0 0
      %2130 = vmatpush1.bf16.msra.mxu0 0
      %2131 = vmatprep.subr.bf16.mxu0 0
      %2132 = vmatpush1.bf16.msra.mxu0 0
      %2133 = vmatprep.subr.bf16.mxu0 0
      %2134 = vmatpush1.bf16.msra.mxu0 0
      %2135 = vmatprep.subr.bf16.mxu0 0
      %2136 = vmatpush1.bf16.msra.mxu0 0
      %2137 = vmatprep.subr.bf16.mxu0 0
      %2138 = vmatpush1.bf16.msra.mxu0 0
      %2139 = vmatprep.mubr.bf16.mxu0 0
      %2140 = vmatmul.mubr.bf16.gmra.mrb[0].mxu0 %v2093
      %v2141 = vpop.f32.mrb[0].mxu0
      %v2142 = vadd.f32 0.0, %v2141
      %v2143 = vpop.f32.mrb[0].mxu0
      %v2144 = vpop.f32.mrb[0].mxu0
      %v2145 = vadd.f32 0.0, %v2144
      %v2146 = vpop.f32.mrb[0].mxu0
      %2147 = vmatprep.mubr.bf16.mxu0 0
      %2148 = vmatmul.mubr.bf16.gmra.mrb[0].mxu0 %v2096
      %v2149 = vpop.f32.mrb[0].mxu0
      %v2150 = vadd.f32 0.0, %v2149
      %v2151 = vpop.f32.mrb[0].mxu0
      %v2152 = vpop.f32.mrb[0].mxu0
      %v2153 = vadd.f32 0.0, %v2152
      %v2154 = vpop.f32.mrb[0].mxu0
      %2155 = vmatprep.mubr.bf16.mxu0 0
      %2156 = vmatmul.mubr.bf16.gmra.mrb[0].mxu0 %v2099
      %v2157 = vpop.f32.mrb[0].mxu0
      %v2158 = vadd.f32 0.0, %v2157
      %v2159 = vpop.f32.mrb[0].mxu0
      %v2160 = vpop.f32.mrb[0].mxu0
      %v2161 = vadd.f32 0.0, %v2160
      %v2162 = vpop.f32.mrb[0].mxu0
      %2163 = vmatprep.mubr.bf16.mxu0 0
      %2164 = vmatmul.mubr.bf16.gmra.mrb[0].mxu0 %v2102
      %v2165 = vpop.f32.mrb[0].mxu0
      %v2166 = vadd.f32 0.0, %v2165
      %v2167 = vpop.f32.mrb[0].mxu0
      %v2168 = vpop.f32.mrb[0].mxu0
      %v2169 = vadd.f32 0.0, %v2168
      %v2170 = vpop.f32.mrb[0].mxu0
      %2171 = vdwg.mxu0
      %v2172 = vadd.f32 %v2071, %v2142
      %v2173 = vadd.f32 %v2072, %v2145
      %v2174 = vadd.f32 %v2073, %v2150
      %v2175 = vadd.f32 %v2074, %v2153
      %v2176 = vadd.f32 %v2075, %v2158
      %v2177 = vadd.f32 %v2076, %v2161
      %v2178 = vadd.f32 %v2077, %v2166
      %v2179 = vadd.f32 %v2078, %v2169
      %v2180 = vld [vmem:[%s1782 + $0x1] sm:$0xff]
      %v2181 = vld [vmem:[%s1782 + $0x11] sm:$0xff]
      %v2182 = vld [vmem:[%s1782 + $0x21] sm:$0xff]
      %v2183 = vld [vmem:[%s1782 + $0x31] sm:$0xff]
      %v2184 = vld [vmem:[%s1782 + $0x41] sm:$0xff]
      %v2185 = vld [vmem:[%s1782 + $0x51] sm:$0xff]
      %v2186 = vld [vmem:[%s1782 + $0x61] sm:$0xff]
      %v2187 = vld [vmem:[%s1782 + $0x71] sm:$0xff]
      %v2188 = vpack.c.bf16 %v2181, %v2180
      %v2189 = vpack.c.bf16 %v2183, %v2182
      %v2190 = vpack.c.bf16 %v2185, %v2184
      %v2191 = vpack.c.bf16 %v2187, %v2186
      %v2192 = vld [vmem:[%s6 + $0x10] sm:$0xf]
      %v2194 = vsel %vm1754, %v2188, 0
      %v2197 = vsel %vm1754, %v2189, 0
      %v2200 = vsel %vm1754, %v2190, 0
      %v2203 = vsel %vm1754, %v2191, 0
      %v2206 = vsel %vm1829, %v2192, 0
      %2208 = vmatprep.subr.bf16.mxu0 0
      %2209 = vmatpush1.bf16.msra.mxu0 %v2206
      %2210 = vmatprep.subr.bf16.mxu0 0
      %2211 = vmatpush1.bf16.msra.mxu0 0
      %2212 = vmatprep.subr.bf16.mxu0 0
      %2213 = vmatpush1.bf16.msra.mxu0 0
      %2214 = vmatprep.subr.bf16.mxu0 0
      %2215 = vmatpush1.bf16.msra.mxu0 0
      %2216 = vmatprep.subr.bf16.mxu0 0
      %2217 = vmatpush1.bf16.msra.mxu0 0
      %2218 = vmatprep.subr.bf16.mxu0 0
      %2219 = vmatpush1.bf16.msra.mxu0 0
      %2220 = vmatprep.subr.bf16.mxu0 0
      %2221 = vmatpush1.bf16.msra.mxu0 0
      %2222 = vmatprep.subr.bf16.mxu0 0
      %2223 = vmatpush1.bf16.msra.mxu0 0
      %2224 = vmatprep.subr.bf16.mxu0 0
      %2225 = vmatpush1.bf16.msra.mxu0 0
      %2226 = vmatprep.subr.bf16.mxu0 0
      %2227 = vmatpush1.bf16.msra.mxu0 0
      %2228 = vmatprep.subr.bf16.mxu0 0
      %2229 = vmatpush1.bf16.msra.mxu0 0
      %2230 = vmatprep.subr.bf16.mxu0 0
      %2231 = vmatpush1.bf16.msra.mxu0 0
      %2232 = vmatprep.subr.bf16.mxu0 0
      %2233 = vmatpush1.bf16.msra.mxu0 0
      %2234 = vmatprep.subr.bf16.mxu0 0
      %2235 = vmatpush1.bf16.msra.mxu0 0
      %2236 = vmatprep.subr.bf16.mxu0 0
      %2237 = vmatpush1.bf16.msra.mxu0 0
      %2238 = vmatprep.subr.bf16.mxu0 0
      %2239 = vmatpush1.bf16.msra.mxu0 0
      %2240 = vmatprep.mubr.bf16.mxu0 0
      %2241 = vmatmul.mubr.bf16.gmra.mrb[0].mxu0 %v2194
      %v2242 = vpop.f32.mrb[0].mxu0
      %v2243 = vadd.f32 0.0, %v2242
      %v2244 = vpop.f32.mrb[0].mxu0
      %v2245 = vpop.f32.mrb[0].mxu0
      %v2246 = vadd.f32 0.0, %v2245
      %v2247 = vpop.f32.mrb[0].mxu0
      %2248 = vmatprep.mubr.bf16.mxu0 0
      %2249 = vmatmul.mubr.bf16.gmra.mrb[0].mxu0 %v2197
      %v2250 = vpop.f32.mrb[0].mxu0
      %v2251 = vadd.f32 0.0, %v2250
      %v2252 = vpop.f32.mrb[0].mxu0
      %v2253 = vpop.f32.mrb[0].mxu0
      %v2254 = vadd.f32 0.0, %v2253
      %v2255 = vpop.f32.mrb[0].mxu0
      %2256 = vmatprep.mubr.bf16.mxu0 0
      %2257 = vmatmul.mubr.bf16.gmra.mrb[0].mxu0 %v2200
      %v2258 = vpop.f32.mrb[0].mxu0
      %v2259 = vadd.f32 0.0, %v2258
      %v2260 = vpop.f32.mrb[0].mxu0
      %v2261 = vpop.f32.mrb[0].mxu0
      %v2262 = vadd.f32 0.0, %v2261
      %v2263 = vpop.f32.mrb[0].mxu0
      %2264 = vmatprep.mubr.bf16.mxu0 0
      %2265 = vmatmul.mubr.bf16.gmra.mrb[0].mxu0 %v2203
      %v2266 = vpop.f32.mrb[0].mxu0
      %v2267 = vadd.f32 0.0, %v2266
      %v2268 = vpop.f32.mrb[0].mxu0
      %v2269 = vpop.f32.mrb[0].mxu0
      %v2270 = vadd.f32 0.0, %v2269
      %v2271 = vpop.f32.mrb[0].mxu0
      %2272 = vdwg.mxu0
      %v2273 = vadd.f32 %v2172, %v2243
      %v2274 = vadd.f32 %v2173, %v2246
      %v2275 = vadd.f32 %v2174, %v2251
      %v2276 = vadd.f32 %v2175, %v2254
      %v2277 = vadd.f32 %v2176, %v2259
      %v2278 = vadd.f32 %v2177, %v2262
      %v2279 = vadd.f32 %v2178, %v2267
      %v2280 = vadd.f32 %v2179, %v2270
      %v2281 = vld [vmem:[%s1782 + $0x2] sm:$0xff]
      %v2282 = vld [vmem:[%s1782 + $0x12] sm:$0xff]
      %v2283 = vld [vmem:[%s1782 + $0x22] sm:$0xff]
      %v2284 = vld [vmem:[%s1782 + $0x32] sm:$0xff]
      %v2285 = vld [vmem:[%s1782 + $0x42] sm:$0xff]
      %v2286 = vld [vmem:[%s1782 + $0x52] sm:$0xff]
      %v2287 = vld [vmem:[%s1782 + $0x62] sm:$0xff]
      %v2288 = vld [vmem:[%s1782 + $0x72] sm:$0xff]
      %v2289 = vpack.c.bf16 %v2282, %v2281
      %v2290 = vpack.c.bf16 %v2284, %v2283
      %v2291 = vpack.c.bf16 %v2286, %v2285
      %v2292 = vpack.c.bf16 %v2288, %v2287
      %v2293 = vld [vmem:[%s6 + $0x14] sm:$0xf]
      %v2295 = vsel %vm1754, %v2289, 0
      %v2298 = vsel %vm1754, %v2290, 0
      %v2301 = vsel %vm1754, %v2291, 0
      %v2304 = vsel %vm1754, %v2292, 0
      %v2307 = vsel %vm1829, %v2293, 0
      %2309 = vmatprep.subr.bf16.mxu0 0
      %2310 = vmatpush1.bf16.msra.mxu0 %v2307
      %2311 = vmatprep.subr.bf16.mxu0 0
      %2312 = vmatpush1.bf16.msra.mxu0 0
      %2313 = vmatprep.subr.bf16.mxu0 0
      %2314 = vmatpush1.bf16.msra.mxu0 0
      %2315 = vmatprep.subr.bf16.mxu0 0
      %2316 = vmatpush1.bf16.msra.mxu0 0
      %2317 = vmatprep.subr.bf16.mxu0 0
      %2318 = vmatpush1.bf16.msra.mxu0 0
      %2319 = vmatprep.subr.bf16.mxu0 0
      %2320 = vmatpush1.bf16.msra.mxu0 0
      %2321 = vmatprep.subr.bf16.mxu0 0
      %2322 = vmatpush1.bf16.msra.mxu0 0
      %2323 = vmatprep.subr.bf16.mxu0 0
      %2324 = vmatpush1.bf16.msra.mxu0 0
      %2325 = vmatprep.subr.bf16.mxu0 0
      %2326 = vmatpush1.bf16.msra.mxu0 0
      %2327 = vmatprep.subr.bf16.mxu0 0
      %2328 = vmatpush1.bf16.msra.mxu0 0
      %2329 = vmatprep.subr.bf16.mxu0 0
      %2330 = vmatpush1.bf16.msra.mxu0 0
      %2331 = vmatprep.subr.bf16.mxu0 0
      %2332 = vmatpush1.bf16.msra.mxu0 0
      %2333 = vmatprep.subr.bf16.mxu0 0
      %2334 = vmatpush1.bf16.msra.mxu0 0
      %2335 = vmatprep.subr.bf16.mxu0 0
      %2336 = vmatpush1.bf16.msra.mxu0 0
      %2337 = vmatprep.subr.bf16.mxu0 0
      %2338 = vmatpush1.bf16.msra.mxu0 0
      %2339 = vmatprep.subr.bf16.mxu0 0
      %2340 = vmatpush1.bf16.msra.mxu0 0
      %2341 = vmatprep.mubr.bf16.mxu0 0
      %2342 = vmatmul.mubr.bf16.gmra.mrb[0].mxu0 %v2295
      %v2343 = vpop.f32.mrb[0].mxu0
      %v2344 = vadd.f32 0.0, %v2343
      %v2345 = vpop.f32.mrb[0].mxu0
      %v2346 = vpop.f32.mrb[0].mxu0
      %v2347 = vadd.f32 0.0, %v2346
      %v2348 = vpop.f32.mrb[0].mxu0
      %2349 = vmatprep.mubr.bf16.mxu0 0
      %2350 = vmatmul.mubr.bf16.gmra.mrb[0].mxu0 %v2298
      %v2351 = vpop.f32.mrb[0].mxu0
      %v2352 = vadd.f32 0.0, %v2351
      %v2353 = vpop.f32.mrb[0].mxu0
      %v2354 = vpop.f32.mrb[0].mxu0
      %v2355 = vadd.f32 0.0, %v2354
      %v2356 = vpop.f32.mrb[0].mxu0
      %2357 = vmatprep.mubr.bf16.mxu0 0
      %2358 = vmatmul.mubr.bf16.gmra.mrb[0].mxu0 %v2301
      %v2359 = vpop.f32.mrb[0].mxu0
      %v2360 = vadd.f32 0.0, %v2359
      %v2361 = vpop.f32.mrb[0].mxu0
      %v2362 = vpop.f32.mrb[0].mxu0
      %v2363 = vadd.f32 0.0, %v2362
      %v2364 = vpop.f32.mrb[0].mxu0
      %2365 = vmatprep.mubr.bf16.mxu0 0
      %2366 = vmatmul.mubr.bf16.gmra.mrb[0].mxu0 %v2304
      %v2367 = vpop.f32.mrb[0].mxu0
      %v2368 = vadd.f32 0.0, %v2367
      %v2369 = vpop.f32.mrb[0].mxu0
      %v2370 = vpop.f32.mrb[0].mxu0
      %v2371 = vadd.f32 0.0, %v2370
      %v2372 = vpop.f32.mrb[0].mxu0
      %2373 = vdwg.mxu0
      %v2374 = vadd.f32 %v2273, %v2344
      %v2375 = vadd.f32 %v2274, %v2347
      %v2376 = vadd.f32 %v2275, %v2352
      %v2377 = vadd.f32 %v2276, %v2355
      %v2378 = vadd.f32 %v2277, %v2360
      %v2379 = vadd.f32 %v2278, %v2363
      %v2380 = vadd.f32 %v2279, %v2368
      %v2381 = vadd.f32 %v2280, %v2371
      %s2382 = scalar_lea.vmem [#allocation3], 32
      %v2383 = vld [vmem:[%s2382] sm:$0xff]
      %v2384 = vld [vmem:[%s2382 + $0x10] sm:$0xff]
      %v2385 = vld [vmem:[%s2382 + $0x20] sm:$0xff]
      %v2386 = vld [vmem:[%s2382 + $0x30] sm:$0xff]
      %v2387 = vld [vmem:[%s2382 + $0x40] sm:$0xff]
      %v2388 = vld [vmem:[%s2382 + $0x50] sm:$0xff]
      %v2389 = vld [vmem:[%s2382 + $0x60] sm:$0xff]
      %v2390 = vld [vmem:[%s2382 + $0x70] sm:$0xff]
      %v2391 = vpack.c.bf16 %v2384, %v2383
      %v2392 = vpack.c.bf16 %v2386, %v2385
      %v2393 = vpack.c.bf16 %v2388, %v2387
      %v2394 = vpack.c.bf16 %v2390, %v2389
      %v2395 = vld [vmem:[%s6 + $0x18] sm:$0xf]
      %v2397 = vsel %vm1754, %v2391, 0
      %v2400 = vsel %vm1754, %v2392, 0
      %v2403 = vsel %vm1754, %v2393, 0
      %v2406 = vsel %vm1754, %v2394, 0
      %v2409 = vsel %vm1829, %v2395, 0
      %2411 = vmatprep.subr.bf16.mxu0 0
      %2412 = vmatpush1.bf16.msra.mxu0 %v2409
      %2413 = vmatprep.subr.bf16.mxu0 0
      %2414 = vmatpush1.bf16.msra.mxu0 0
      %2415 = vmatprep.subr.bf16.mxu0 0
      %2416 = vmatpush1.bf16.msra.mxu0 0
      %2417 = vmatprep.subr.bf16.mxu0 0
      %2418 = vmatpush1.bf16.msra.mxu0 0
      %2419 = vmatprep.subr.bf16.mxu0 0
      %2420 = vmatpush1.bf16.msra.mxu0 0
      %2421 = vmatprep.subr.bf16.mxu0 0
      %2422 = vmatpush1.bf16.msra.mxu0 0
      %2423 = vmatprep.subr.bf16.mxu0 0
      %2424 = vmatpush1.bf16.msra.mxu0 0
      %2425 = vmatprep.subr.bf16.mxu0 0
      %2426 = vmatpush1.bf16.msra.mxu0 0
      %2427 = vmatprep.subr.bf16.mxu0 0
      %2428 = vmatpush1.bf16.msra.mxu0 0
      %2429 = vmatprep.subr.bf16.mxu0 0
      %2430 = vmatpush1.bf16.msra.mxu0 0
      %2431 = vmatprep.subr.bf16.mxu0 0
      %2432 = vmatpush1.bf16.msra.mxu0 0
      %2433 = vmatprep.subr.bf16.mxu0 0
      %2434 = vmatpush1.bf16.msra.mxu0 0
      %2435 = vmatprep.subr.bf16.mxu0 0
      %2436 = vmatpush1.bf16.msra.mxu0 0
      %2437 = vmatprep.subr.bf16.mxu0 0
      %2438 = vmatpush1.bf16.msra.mxu0 0
      %2439 = vmatprep.subr.bf16.mxu0 0
      %2440 = vmatpush1.bf16.msra.mxu0 0
      %2441 = vmatprep.subr.bf16.mxu0 0
      %2442 = vmatpush1.bf16.msra.mxu0 0
      %2443 = vmatprep.mubr.bf16.mxu0 0
      %2444 = vmatmul.mubr.bf16.gmra.mrb[0].mxu0 %v2397
      %v2445 = vpop.f32.mrb[0].mxu0
      %v2446 = vadd.f32 0.0, %v2445
      %v2447 = vpop.f32.mrb[0].mxu0
      %v2448 = vpop.f32.mrb[0].mxu0
      %v2449 = vadd.f32 0.0, %v2448
      %v2450 = vpop.f32.mrb[0].mxu0
      %2451 = vmatprep.mubr.bf16.mxu0 0
      %2452 = vmatmul.mubr.bf16.gmra.mrb[0].mxu0 %v2400
      %v2453 = vpop.f32.mrb[0].mxu0
      %v2454 = vadd.f32 0.0, %v2453
      %v2455 = vpop.f32.mrb[0].mxu0
      %v2456 = vpop.f32.mrb[0].mxu0
      %v2457 = vadd.f32 0.0, %v2456
      %v2458 = vpop.f32.mrb[0].mxu0
      %2459 = vmatprep.mubr.bf16.mxu0 0
      %2460 = vmatmul.mubr.bf16.gmra.mrb[0].mxu0 %v2403
      %v2461 = vpop.f32.mrb[0].mxu0
      %v2462 = vadd.f32 0.0, %v2461
      %v2463 = vpop.f32.mrb[0].mxu0
      %v2464 = vpop.f32.mrb[0].mxu0
      %v2465 = vadd.f32 0.0, %v2464
      %v2466 = vpop.f32.mrb[0].mxu0
      %2467 = vmatprep.mubr.bf16.mxu0 0
      %2468 = vmatmul.mubr.bf16.gmra.mrb[0].mxu0 %v2406
      %v2469 = vpop.f32.mrb[0].mxu0
      %v2470 = vadd.f32 0.0, %v2469
      %v2471 = vpop.f32.mrb[0].mxu0
      %v2472 = vpop.f32.mrb[0].mxu0
      %v2473 = vadd.f32 0.0, %v2472
      %v2474 = vpop.f32.mrb[0].mxu0
      %2475 = vdwg.mxu0
      %v2476 = vadd.f32 %v2374, %v2446
      %v2477 = vadd.f32 %v2375, %v2449
      %v2478 = vadd.f32 %v2376, %v2454
      %v2479 = vadd.f32 %v2377, %v2457
      %v2480 = vadd.f32 %v2378, %v2462
      %v2481 = vadd.f32 %v2379, %v2465
      %v2482 = vadd.f32 %v2380, %v2470
      %v2483 = vadd.f32 %v2381, %v2473
      %v2484 = vld [vmem:[%s2382 + $0x1] sm:$0xff]
      %v2485 = vld [vmem:[%s2382 + $0x11] sm:$0xff]
      %v2486 = vld [vmem:[%s2382 + $0x21] sm:$0xff]
      %v2487 = vld [vmem:[%s2382 + $0x31] sm:$0xff]
      %v2488 = vld [vmem:[%s2382 + $0x41] sm:$0xff]
      %v2489 = vld [vmem:[%s2382 + $0x51] sm:$0xff]
      %v2490 = vld [vmem:[%s2382 + $0x61] sm:$0xff]
      %v2491 = vld [vmem:[%s2382 + $0x71] sm:$0xff]
      %v2492 = vpack.c.bf16 %v2485, %v2484
      %v2493 = vpack.c.bf16 %v2487, %v2486
      %v2494 = vpack.c.bf16 %v2489, %v2488
      %v2495 = vpack.c.bf16 %v2491, %v2490
      %v2496 = vld [vmem:[%s6 + $0x1c] sm:$0xf]
      %v2498 = vsel %vm1754, %v2492, 0
      %v2501 = vsel %vm1754, %v2493, 0
      %v2504 = vsel %vm1754, %v2494, 0
      %v2507 = vsel %vm1754, %v2495, 0
      %v2510 = vsel %vm1829, %v2496, 0
      %2512 = vmatprep.subr.bf16.mxu0 0
      %2513 = vmatpush1.bf16.msra.mxu0 %v2510
      %2514 = vmatprep.subr.bf16.mxu0 0
      %2515 = vmatpush1.bf16.msra.mxu0 0
      %2516 = vmatprep.subr.bf16.mxu0 0
      %2517 = vmatpush1.bf16.msra.mxu0 0
      %2518 = vmatprep.subr.bf16.mxu0 0
      %2519 = vmatpush1.bf16.msra.mxu0 0
      %2520 = vmatprep.subr.bf16.mxu0 0
      %2521 = vmatpush1.bf16.msra.mxu0 0
      %2522 = vmatprep.subr.bf16.mxu0 0
      %2523 = vmatpush1.bf16.msra.mxu0 0
      %2524 = vmatprep.subr.bf16.mxu0 0
      %2525 = vmatpush1.bf16.msra.mxu0 0
      %2526 = vmatprep.subr.bf16.mxu0 0
      %2527 = vmatpush1.bf16.msra.mxu0 0
      %2528 = vmatprep.subr.bf16.mxu0 0
      %2529 = vmatpush1.bf16.msra.mxu0 0
      %2530 = vmatprep.subr.bf16.mxu0 0
      %2531 = vmatpush1.bf16.msra.mxu0 0
      %2532 = vmatprep.subr.bf16.mxu0 0
      %2533 = vmatpush1.bf16.msra.mxu0 0
      %2534 = vmatprep.subr.bf16.mxu0 0
      %2535 = vmatpush1.bf16.msra.mxu0 0
      %2536 = vmatprep.subr.bf16.mxu0 0
      %2537 = vmatpush1.bf16.msra.mxu0 0
      %2538 = vmatprep.subr.bf16.mxu0 0
      %2539 = vmatpush1.bf16.msra.mxu0 0
      %2540 = vmatprep.subr.bf16.mxu0 0
      %2541 = vmatpush1.bf16.msra.mxu0 0
      %2542 = vmatprep.subr.bf16.mxu0 0
      %2543 = vmatpush1.bf16.msra.mxu0 0
      %2544 = vmatprep.mubr.bf16.mxu0 0
      %2545 = vmatmul.mubr.bf16.gmra.mrb[0].mxu0 %v2498
      %v2546 = vpop.f32.mrb[0].mxu0
      %v2547 = vadd.f32 0.0, %v2546
      %v2548 = vpop.f32.mrb[0].mxu0
      %v2549 = vpop.f32.mrb[0].mxu0
      %v2550 = vadd.f32 0.0, %v2549
      %v2551 = vpop.f32.mrb[0].mxu0
      %2552 = vmatprep.mubr.bf16.mxu0 0
      %2553 = vmatmul.mubr.bf16.gmra.mrb[0].mxu0 %v2501
      %v2554 = vpop.f32.mrb[0].mxu0
      %v2555 = vadd.f32 0.0, %v2554
      %v2556 = vpop.f32.mrb[0].mxu0
      %v2557 = vpop.f32.mrb[0].mxu0
      %v2558 = vadd.f32 0.0, %v2557
      %v2559 = vpop.f32.mrb[0].mxu0
      %2560 = vmatprep.mubr.bf16.mxu0 0
      %2561 = vmatmul.mubr.bf16.gmra.mrb[0].mxu0 %v2504
      %v2562 = vpop.f32.mrb[0].mxu0
      %v2563 = vadd.f32 0.0, %v2562
      %v2564 = vpop.f32.mrb[0].mxu0
      %v2565 = vpop.f32.mrb[0].mxu0
      %v2566 = vadd.f32 0.0, %v2565
      %v2567 = vpop.f32.mrb[0].mxu0
      %2568 = vmatprep.mubr.bf16.mxu0 0
      %2569 = vmatmul.mubr.bf16.gmra.mrb[0].mxu0 %v2507
      %v2570 = vpop.f32.mrb[0].mxu0
      %v2571 = vadd.f32 0.0, %v2570
      %v2572 = vpop.f32.mrb[0].mxu0
      %v2573 = vpop.f32.mrb[0].mxu0
      %v2574 = vadd.f32 0.0, %v2573
      %v2575 = vpop.f32.mrb[0].mxu0
      %2576 = vdwg.mxu0
      %v2577 = vadd.f32 %v2476, %v2547
      %v2578 = vadd.f32 %v2477, %v2550
      %v2579 = vadd.f32 %v2478, %v2555
      %v2580 = vadd.f32 %v2479, %v2558
      %v2581 = vadd.f32 %v2480, %v2563
      %v2582 = vadd.f32 %v2481, %v2566
      %v2583 = vadd.f32 %v2482, %v2571
      %v2584 = vadd.f32 %v2483, %v2574
      %v2585 = vld [vmem:[%s2382 + $0x2] sm:$0xff]
      %v2586 = vld [vmem:[%s2382 + $0x12] sm:$0xff]
      %v2587 = vld [vmem:[%s2382 + $0x22] sm:$0xff]
      %v2588 = vld [vmem:[%s2382 + $0x32] sm:$0xff]
      %v2589 = vld [vmem:[%s2382 + $0x42] sm:$0xff]
      %v2590 = vld [vmem:[%s2382 + $0x52] sm:$0xff]
      %v2591 = vld [vmem:[%s2382 + $0x62] sm:$0xff]
      %v2592 = vld [vmem:[%s2382 + $0x72] sm:$0xff]
      %v2593 = vpack.c.bf16 %v2586, %v2585
      %v2594 = vpack.c.bf16 %v2588, %v2587
      %v2595 = vpack.c.bf16 %v2590, %v2589
      %v2596 = vpack.c.bf16 %v2592, %v2591
      %v2597 = vld [vmem:[%s6 + $0x20] sm:$0xf]
      %v2599 = vsel %vm1754, %v2593, 0
      %v2602 = vsel %vm1754, %v2594, 0
      %v2605 = vsel %vm1754, %v2595, 0
      %v2608 = vsel %vm1754, %v2596, 0
      %v2611 = vsel %vm1829, %v2597, 0
      %2613 = vmatprep.subr.bf16.mxu0 0
      %2614 = vmatpush1.bf16.msra.mxu0 %v2611
      %2615 = vmatprep.subr.bf16.mxu0 0
      %2616 = vmatpush1.bf16.msra.mxu0 0
      %2617 = vmatprep.subr.bf16.mxu0 0
      %2618 = vmatpush1.bf16.msra.mxu0 0
      %2619 = vmatprep.subr.bf16.mxu0 0
      %2620 = vmatpush1.bf16.msra.mxu0 0
      %2621 = vmatprep.subr.bf16.mxu0 0
      %2622 = vmatpush1.bf16.msra.mxu0 0
      %2623 = vmatprep.subr.bf16.mxu0 0
      %2624 = vmatpush1.bf16.msra.mxu0 0
      %2625 = vmatprep.subr.bf16.mxu0 0
      %2626 = vmatpush1.bf16.msra.mxu0 0
      %2627 = vmatprep.subr.bf16.mxu0 0
      %2628 = vmatpush1.bf16.msra.mxu0 0
      %2629 = vmatprep.subr.bf16.mxu0 0
      %2630 = vmatpush1.bf16.msra.mxu0 0
      %2631 = vmatprep.subr.bf16.mxu0 0
      %2632 = vmatpush1.bf16.msra.mxu0 0
      %2633 = vmatprep.subr.bf16.mxu0 0
      %2634 = vmatpush1.bf16.msra.mxu0 0
      %2635 = vmatprep.subr.bf16.mxu0 0
      %2636 = vmatpush1.bf16.msra.mxu0 0
      %2637 = vmatprep.subr.bf16.mxu0 0
      %2638 = vmatpush1.bf16.msra.mxu0 0
      %2639 = vmatprep.subr.bf16.mxu0 0
      %2640 = vmatpush1.bf16.msra.mxu0 0
      %2641 = vmatprep.subr.bf16.mxu0 0
      %2642 = vmatpush1.bf16.msra.mxu0 0
      %2643 = vmatprep.subr.bf16.mxu0 0
      %2644 = vmatpush1.bf16.msra.mxu0 0
      %2645 = vmatprep.mubr.bf16.mxu0 0
      %2646 = vmatmul.mubr.bf16.gmra.mrb[0].mxu0 %v2599
      %v2647 = vpop.f32.mrb[0].mxu0
      %v2648 = vadd.f32 0.0, %v2647
      %v2649 = vpop.f32.mrb[0].mxu0
      %v2650 = vpop.f32.mrb[0].mxu0
      %v2651 = vadd.f32 0.0, %v2650
      %v2652 = vpop.f32.mrb[0].mxu0
      %2653 = vmatprep.mubr.bf16.mxu0 0
      %2654 = vmatmul.mubr.bf16.gmra.mrb[0].mxu0 %v2602
      %v2655 = vpop.f32.mrb[0].mxu0
      %v2656 = vadd.f32 0.0, %v2655
      %v2657 = vpop.f32.mrb[0].mxu0
      %v2658 = vpop.f32.mrb[0].mxu0
      %v2659 = vadd.f32 0.0, %v2658
      %v2660 = vpop.f32.mrb[0].mxu0
      %2661 = vmatprep.mubr.bf16.mxu0 0
      %2662 = vmatmul.mubr.bf16.gmra.mrb[0].mxu0 %v2605
      %v2663 = vpop.f32.mrb[0].mxu0
      %v2664 = vadd.f32 0.0, %v2663
      %v2665 = vpop.f32.mrb[0].mxu0
      %v2666 = vpop.f32.mrb[0].mxu0
      %v2667 = vadd.f32 0.0, %v2666
      %v2668 = vpop.f32.mrb[0].mxu0
      %2669 = vmatprep.mubr.bf16.mxu0 0
      %2670 = vmatmul.mubr.bf16.gmra.mrb[0].mxu0 %v2608
      %v2671 = vpop.f32.mrb[0].mxu0
      %v2672 = vadd.f32 0.0, %v2671
      %v2673 = vpop.f32.mrb[0].mxu0
      %v2674 = vpop.f32.mrb[0].mxu0
      %v2675 = vadd.f32 0.0, %v2674
      %v2676 = vpop.f32.mrb[0].mxu0
      %2677 = vdwg.mxu0
      %v2678 = vadd.f32 %v2577, %v2648
      %v2679 = vadd.f32 %v2578, %v2651
      %v2680 = vadd.f32 %v2579, %v2656
      %v2681 = vadd.f32 %v2580, %v2659
      %v2682 = vadd.f32 %v2581, %v2664
      %v2683 = vadd.f32 %v2582, %v2667
      %v2684 = vadd.f32 %v2583, %v2672
      %v2685 = vadd.f32 %v2584, %v2675
      %v2686 = vld [vmem:[%s7] sm:$0x3]
      %v2688 = vsel %vm846, %v2686, 0
      %2690 = vmatprep.subr.bf16.mxu0 0
      %2691 = vmatpush1.bf16.msra.mxu0 %v2688
      %2692 = vmatprep.subr.bf16.mxu0 0
      %2693 = vmatpush1.bf16.msra.mxu0 0
      %2694 = vmatprep.subr.bf16.mxu0 0
      %2695 = vmatpush1.bf16.msra.mxu0 0
      %2696 = vmatprep.subr.bf16.mxu0 0
      %2697 = vmatpush1.bf16.msra.mxu0 0
      %2698 = vmatprep.subr.bf16.mxu0 0
      %2699 = vmatpush1.bf16.msra.mxu0 0
      %2700 = vmatprep.subr.bf16.mxu0 0
      %2701 = vmatpush1.bf16.msra.mxu0 0
      %2702 = vmatprep.subr.bf16.mxu0 0
      %2703 = vmatpush1.bf16.msra.mxu0 0
      %2704 = vmatprep.subr.bf16.mxu0 0
      %2705 = vmatpush1.bf16.msra.mxu0 0
      %2706 = vmatprep.subr.bf16.mxu0 0
      %2707 = vmatpush1.bf16.msra.mxu0 0
      %2708 = vmatprep.subr.bf16.mxu0 0
      %2709 = vmatpush1.bf16.msra.mxu0 0
      %2710 = vmatprep.subr.bf16.mxu0 0
      %2711 = vmatpush1.bf16.msra.mxu0 0
      %2712 = vmatprep.subr.bf16.mxu0 0
      %2713 = vmatpush1.bf16.msra.mxu0 0
      %2714 = vmatprep.subr.bf16.mxu0 0
      %2715 = vmatpush1.bf16.msra.mxu0 0
      %2716 = vmatprep.subr.bf16.mxu0 0
      %2717 = vmatpush1.bf16.msra.mxu0 0
      %2718 = vmatprep.subr.bf16.mxu0 0
      %2719 = vmatpush1.bf16.msra.mxu0 0
      %2720 = vmatprep.subr.bf16.mxu0 0
      %2721 = vmatpush1.bf16.msra.mxu0 0
      %2722 = vmatprep.mubr.bf16.mxu0 0
      %2723 = vmatmul.mubr.bf16.gmra.mrb[0].mxu0 %v1215
      %v2724 = vpop.f32.mrb[0].mxu0
      %v2725 = vadd.f32 0.0, %v2724
      %v2726 = vpop.f32.mrb[0].mxu0
      %v2727 = vpop.f32.mrb[0].mxu0
      %v2728 = vadd.f32 0.0, %v2727
      %v2729 = vpop.f32.mrb[0].mxu0
      %2730 = vmatprep.mubr.bf16.mxu0 0
      %2731 = vmatmul.mubr.bf16.gmra.mrb[0].mxu0 %v1218
      %v2732 = vpop.f32.mrb[0].mxu0
      %v2733 = vadd.f32 0.0, %v2732
      %v2734 = vpop.f32.mrb[0].mxu0
      %v2735 = vpop.f32.mrb[0].mxu0
      %v2736 = vadd.f32 0.0, %v2735
      %v2737 = vpop.f32.mrb[0].mxu0
      %2738 = vmatprep.mubr.bf16.mxu0 0
      %2739 = vmatmul.mubr.bf16.gmra.mrb[0].mxu0 %v1221
      %v2740 = vpop.f32.mrb[0].mxu0
      %v2741 = vadd.f32 0.0, %v2740
      %v2742 = vpop.f32.mrb[0].mxu0
      %v2743 = vpop.f32.mrb[0].mxu0
      %v2744 = vadd.f32 0.0, %v2743
      %v2745 = vpop.f32.mrb[0].mxu0
      %2746 = vmatprep.mubr.bf16.mxu0 0
      %2747 = vmatmul.mubr.bf16.gmra.mrb[0].mxu0 %v1224
      %v2748 = vpop.f32.mrb[0].mxu0
      %v2749 = vadd.f32 0.0, %v2748
      %v2750 = vpop.f32.mrb[0].mxu0
      %v2751 = vpop.f32.mrb[0].mxu0
      %v2752 = vadd.f32 0.0, %v2751
      %v2753 = vpop.f32.mrb[0].mxu0
      %2754 = vdwg.mxu0
      %v2755 = vadd.f32 %v2678, %v2725
      %v2756 = vadd.f32 %v2679, %v2728
      %v2757 = vadd.f32 %v2680, %v2733
      %v2758 = vadd.f32 %v2681, %v2736
      %v2759 = vadd.f32 %v2682, %v2741
      %v2760 = vadd.f32 %v2683, %v2744
      %v2761 = vadd.f32 %v2684, %v2749
      %v2762 = vadd.f32 %v2685, %v2752
      %2763 = vst.msk [vmem:[%s305] sm:$0xff] %vm1754, %v2755
      %2764 = vst.msk [vmem:[%s305 + $0x8] sm:$0xff] %vm1754, %v2756
      %2765 = vst.msk [vmem:[%s305 + $0x10] sm:$0xff] %vm1754, %v2757
      %2766 = vst.msk [vmem:[%s305 + $0x18] sm:$0xff] %vm1754, %v2758
      %2767 = vst.msk [vmem:[%s305 + $0x20] sm:$0xff] %vm1754, %v2759
      %2768 = vst.msk [vmem:[%s305 + $0x28] sm:$0xff] %vm1754, %v2760
      %2769 = vst.msk [vmem:[%s305 + $0x30] sm:$0xff] %vm1754, %v2761
      %2770 = vst.msk [vmem:[%s305 + $0x38] sm:$0xff] %vm1754, %v2762
      %p2771 = scmp.lt.s32.totalorder %s19, 1
      %s2772 = scalar_select %p2771, %s19, 1
      %s2773 = smul.addr %s2772, 8
      %s2774 = smul.addr %s2773, 8
      %s2775 = scalar_lea.vmem %s8, %s2774
      // Predicated region
      $region53: #{basic_block_forward.1} parent=51 // pred_check
        %p2776 = pneg %p210
      $region54: #{basic_block_forward.1} parent=51 // pred_check_branch
        %2778 = sbr.rel (%p2776) target = $region56
      $region55: #{basic_block_forward.1} parent=51 // pred_region
        _
      $region56: #{basic_block_forward.1} parent=51 // pred_fallthru
        _
    $region52: #{basic_block_forward.1} parent=5 // pred_fallthru
      _
    %p2779 = scmp.le.s32.totalorder 2, %s14
    // Predicated region
    $region57: #{basic_block_forward.1} parent=5 // pred_check
      %p2780 = pneg %p2779
    $region58: #{basic_block_forward.1} parent=5 // pred_check_branch
      %2782 = sbr.rel (%p2780) target = $region60
    $region59: #{basic_block_forward.1} parent=5 // pred_region
      %s2783 = ssub.s32 %s14, 2
      // Predicated region
      $region61: #{basic_block_forward.1} parent=59 // pred_check
        %p2784 = pneg %p216
      $region62: #{basic_block_forward.1} parent=59 // pred_check_branch
        %2786 = sbr.rel (%p2784) target = $region64
      $region63: #{basic_block_forward.1} parent=59 // pred_region
        %p2787 = scmp.lt.s32.totalorder %s20, 1
        %s2788 = scalar_select %p2787, %s20, 1
        %s2789 = smul.addr %s2788, 8
        %s2790 = smul.addr %s2789, 8
        %s2791 = scalar_lea.vmem %s8, %s2790
      $region64: #{basic_block_forward.1} parent=59 // pred_fallthru
        _
    $region60: #{basic_block_forward.1} parent=5 // pred_fallthru
      _
  $region6: #{basic_block_forward.1} parent=0 // loop_footer
    %s18 = sadd.s32 1, %s14
  $region7: #{basic_block_forward.1} parent=0 // loop_footer_branch
    %13 = sbr.rel target = $region3
  $region8: #{basic_block_forward.1} parent=0 // loop_exit
    _

</llo_original>
